<compile_context>
chip_gen: v5e
topology: v5e:2x2
jax: 0.10.0
libtpu: 0.0.40
codegen_flags: <defaults>
</compile_context>

<pallas_src>
import functools
import math

import jax
import jax.numpy as jnp
from jax.experimental import pallas as pl
from jax.experimental.pallas import tpu as pltpu

# Lossy-but-fast mode: bf16 MXU operands, f32 accumulation.  False -> f32 matmuls.
USE_BF16_MATMUL = True
LN_EPS = 1e-5


# ----------------------------------------------------------------------------
# Kernels
# ----------------------------------------------------------------------------

def _attn_block_kernel(q_in_ref, kv_in_ref, mask_ref,
                       wq_ref, bq_ref, wk_ref, bk_ref, wv_ref, bv_ref,
                       wo_ref, bo_ref, g_ref, beta_ref, o_ref,
                       ctx_ref, *, heads, inv_scale):
    """Fused attention block for one (batch, query-tile) grid cell.

    q_in:  (1, tq, E)   kv_in: (1, Lk, E)   mask: (1, 1, Lk)  (float, 0 = masked)
    Weights are pre-transposed (Din, Dout); biases / gamma / beta are (1, E).
    ctx_ref: (tq, E) f32 VMEM scratch (per-head context written in place, no concat).
    Computes LayerNorm(q_in + OutProj(MHA(q_in, kv_in, kv_in, mask))).
    """
    xq = q_in_ref[0]                      # (tq, E) f32 -- also the residual
    xkv = kv_in_ref[0]                    # (Lk, E) f32
    m = mask_ref[0]                       # (1, Lk)

    tq, E = xq.shape
    Lk = xkv.shape[0]
    d = E // heads
    cdt = wq_ref.dtype                    # MXU operand dtype (bf16 or f32)

    xq_c = xq.astype(cdt)
    xkv_c = xkv.astype(cdt)

    # Projections (E lane-dense, f32 accumulation).  1/scale folded into Q.
    q = (jnp.dot(xq_c, wq_ref[...], preferred_element_type=jnp.float32)
         + bq_ref[...]) * inv_scale                                        # (tq, E)
    k = jnp.dot(xkv_c, wk_ref[...], preferred_element_type=jnp.float32) + bk_ref[...]
    v = jnp.dot(xkv_c, wv_ref[...], preferred_element_type=jnp.float32) + bv_ref[...]
    q = q.astype(cdt)
    k = k.astype(cdt)
    v = v.astype(cdt)

    # Key-mask predicate hoisted out of the head loop (JAX does not CSE broadcasts).
    key_masked = jnp.broadcast_to(m == 0.0, (tq, Lk))

    # Per-head attention; each head's context goes straight into its column slice of
    # the (tq, E) scratch -- no concat epilogue, no H live results.
    for h in range(heads):
        lo = h * d
        qh = q[:, lo:lo + d]                                               # (tq, d)
        kh = k[:, lo:lo + d]                                               # (Lk, d)
        vh = v[:, lo:lo + d]                                               # (Lk, d)
        e = jax.lax.dot_general(qh, kh, (((1,), (1,)), ((), ())),
                                preferred_element_type=jnp.float32)        # (tq, Lk)
        e = jnp.where(key_masked, jnp.float32(-1e10), e)
        e = e - jnp.max(e, axis=-1, keepdims=True)
        p = jnp.exp(e)
        p = p * pl.reciprocal(jnp.sum(p, axis=-1, keepdims=True), approx=True)
        ctx_ref[:, lo:lo + d] = jnp.dot(p.astype(cdt), vh,
                                        preferred_element_type=jnp.float32)
    # TODO(synk): for very long Lk, add a third "arbitrary" grid axis over key tiles with
    # online-softmax (flash) accumulators instead of a single full-Lk pass.

    # Output projection + residual + LayerNorm epilogue (no HBM round trip).
    ctx = ctx_ref[...].astype(cdt)                                         # (tq, E)
    out = jnp.dot(ctx, wo_ref[...], preferred_element_type=jnp.float32) + bo_ref[...]
    r = xq + out
    mean = jnp.mean(r, axis=-1, keepdims=True)
    var = jnp.mean((r - mean) ** 2, axis=-1, keepdims=True)
    norm = (r - mean) * jax.lax.rsqrt(var + LN_EPS)
    o_ref[0] = norm * g_ref[...] + beta_ref[...]


def _ffn_ln_kernel(x_ref, w1_ref, b1_ref, w2_ref, b2_ref, g_ref, b_ref, o_ref):
    """Fused position-wise FFN + residual + LayerNorm on a (tm, E) row tile."""
    x = x_ref[...]                                                         # (tm, E) f32
    cdt = w1_ref.dtype
    h = jnp.dot(x.astype(cdt), w1_ref[...],
                preferred_element_type=jnp.float32) + b1_ref[...]
    h = jnp.maximum(h, 0.0)
    y = jnp.dot(h.astype(cdt), w2_ref[...],
                preferred_element_type=jnp.float32) + b2_ref[...]
    r = x + y
    mean = jnp.mean(r, axis=-1, keepdims=True)
    var = jnp.mean((r - mean) ** 2, axis=-1, keepdims=True)
    norm = (r - mean) * jax.lax.rsqrt(var + LN_EPS)
    o_ref[...] = norm * g_ref[...] + b_ref[...]


# ----------------------------------------------------------------------------
# Wrappers
# ----------------------------------------------------------------------------

def _pick_row_tile(n, cap):
    """Row tile: `cap` if n >= cap, else n rounded up to a multiple of 8 (sublane)."""
    if n >= cap:
        return cap
    return max(8, ((n + 7) // 8) * 8)


def _vmem_limit(resident, streamed, working):
    """Scoped-VMEM request: resident (single-buffered) + 2x streamed (double-buffered)
    + working set, with ~30% headroom, clamped to [32 MiB, 100 MiB]."""
    est = int(1.3 * (resident + 2 * streamed + working))
    return max(32 << 20, min(est, 100 << 20))


def attention_block(query, kv, mask, p, gamma, beta, heads, *, q_tile_cap=256):
    """query: (B, Lq, E), kv: (B, Lk, E), mask: (B, Lk) -> LayerNorm(query + MHA(...))."""
    B, Lq, E = query.shape
    Lk = kv.shape[1]
    d = E // heads
    inv_scale = 1.0 / math.sqrt(d)                 # Python float -> compile-time literal
    mask3 = mask.astype(jnp.float32).reshape(B, 1, Lk)

    # Query-row tiling: K/V, mask and weights stay resident across query tiles.
    tq = _pick_row_tile(Lq, q_tile_cap)
    Lq_pad = pl.cdiv(Lq, tq) * tq
    q_in = query if Lq_pad == Lq else jnp.pad(query, ((0, 0), (0, Lq_pad - Lq), (0, 0)))
    nq = Lq_pad // tq

    kern = functools.partial(_attn_block_kernel, heads=heads, inv_scale=inv_scale)

    const = lambda b, i: (0, 0)                    # resident across the whole grid
    def wspec(shape):                              # constant blocks: single-buffered
        return pl.BlockSpec(shape, const, pipeline_mode=pl.Buffered(1))

    wb = jnp.dtype(p["wq"].dtype).itemsize
    resident = 4 * E * E * wb + 8 * E * 4                        # Wq/Wk/Wv/Wo + biases/ln
    streamed = 2 * tq * E * 4 + Lk * E * 4 + Lk * 4              # q tile in/out + kv + mask
    working = (tq + 2 * Lk) * E * (wb + 4) + tq * Lk * 4 + tq * E * 4

    flops = B * (2 * E * E * (2 * Lq_pad + 2 * Lk) + 4 * Lq_pad * Lk * E)
    bytes_accessed = int(2 * B * Lq_pad * E * 4 + B * Lk * E * 4 + B * Lk * 4
                         + 4 * E * E * wb + 8 * E * 4)

    out = pl.pallas_call(
        kern,
        out_shape=jax.ShapeDtypeStruct((B, Lq_pad, E), jnp.float32),
        grid=(B, nq),
        in_specs=[
            pl.BlockSpec((1, tq, E), lambda b, i: (b, i, 0)),    # query tile (+ residual)
            pl.BlockSpec((1, Lk, E), lambda b, i: (b, 0, 0)),    # key/value source
            pl.BlockSpec((1, 1, Lk), lambda b, i: (b, 0, 0)),    # key mask
            wspec((E, E)), wspec((1, E)),                        # Wq, bq
            wspec((E, E)), wspec((1, E)),                        # Wk, bk
            wspec((E, E)), wspec((1, E)),                        # Wv, bv
            wspec((E, E)), wspec((1, E)),                        # Wo, bo
            wspec((1, E)), wspec((1, E)),                        # gamma, beta
        ],
        out_specs=pl.BlockSpec((1, tq, E), lambda b, i: (b, i, 0)),
        scratch_shapes=[pltpu.VMEM((tq, E), jnp.float32)],       # per-head ctx scratch
        compiler_params=pltpu.CompilerParams(
            dimension_semantics=("parallel", "parallel"),
            vmem_limit_bytes=_vmem_limit(resident, streamed, working)),
        cost_estimate=pl.CostEstimate(flops=flops,
                                      transcendentals=B * heads * Lq_pad * Lk,
                                      bytes_accessed=bytes_accessed),
    )(q_in, kv, mask3,
      p["wq"], p["bq"], p["wk"], p["bk"], p["wv"], p["bv"], p["wo"], p["bo"],
      gamma, beta)
    if Lq_pad != Lq:
        out = out[:, :Lq, :]
    return out


def ffn_block(x, w1, b1, w2, b2, gamma, beta, *, row_tile_cap=512):
    """x: (B, T, E) -> LayerNorm(x + FFN(x)), row-tiled with resident weights."""
    B, T, E = x.shape
    N = B * T
    P = w1.shape[1]
    x2 = x.reshape(N, E)

    tm = _pick_row_tile(N, row_tile_cap)
    Np = pl.cdiv(N, tm) * tm
    if Np != N:
        x2 = jnp.pad(x2, ((0, Np - N), (0, 0)))

    const = lambda i: (0, 0)
    def wspec(shape):
        return pl.BlockSpec(shape, const, pipeline_mode=pl.Buffered(1))

    wb = jnp.dtype(w1.dtype).itemsize
    resident = 2 * E * P * wb + (P + 3 * E) * 4
    streamed = 2 * tm * E * 4
    working = tm * P * (wb + 4) + 2 * tm * E * 4

    flops = 4 * Np * E * P
    bytes_accessed = int(2 * Np * E * 4 + 2 * E * P * wb + (P + 3 * E) * 4)

    # TODO(synk): if f32 weights are required on v7x, stream P-slices of W1/W2 over an
    # extra "arbitrary" grid axis instead of keeping both full weights resident.
    out = pl.pallas_call(
        _ffn_ln_kernel,
        out_shape=jax.ShapeDtypeStruct((Np, E), jnp.float32),
        grid=(Np // tm,),
        in_specs=[
            pl.BlockSpec((tm, E), lambda i: (i, 0)),   # x row tile
            wspec((E, P)), wspec((1, P)),              # W1, b1 (resident)
            wspec((P, E)), wspec((1, E)),              # W2, b2 (resident)
            wspec((1, E)), wspec((1, E)),              # gamma, beta
        ],
        out_specs=pl.BlockSpec((tm, E), lambda i: (i, 0)),
        compiler_params=pltpu.CompilerParams(
            dimension_semantics=("parallel",),
            vmem_limit_bytes=_vmem_limit(resident, streamed, working)),
        cost_estimate=pl.CostEstimate(flops=flops, transcendentals=0,
                                      bytes_accessed=bytes_accessed),
    )(x2, w1, b1, w2, b2, gamma, beta)
    return out[:N].reshape(B, T, E)


def decoder_layer_forward(params, embed_trg, embed_src, trg_mask, src_mask, heads):
    g, b = params["ln_gamma"], params["ln_beta"]
    # TODO(synk): dropout layers run in eval mode (identity); no RNG dropout in-kernel.

    # 1) fused self-attention block (QKV proj + attn + out proj + residual + LN)
    x = attention_block(embed_trg, embed_trg, trg_mask, params["self_attn"], g, b, heads)
    # 2) fused cross-attention block
    x = attention_block(x, embed_src, src_mask, params["src_attn"], g, b, heads)
    # 3) fused position-wise FFN + residual + LN
    x = ffn_block(x, params["ff_w1"], params["ff_b1"], params["ff_w2"], params["ff_b2"], g, b)
    return x


# ----------------------------------------------------------------------------
# Deterministic parameter init (torch nn.Linear init; weights pre-transposed ONCE,
# stored in the matmul compute dtype so DMA bytes and resident VMEM are halved for bf16)
# ----------------------------------------------------------------------------

def init_params(key, embed_dim, heads, pf_dim, weight_dtype=None):
    if weight_dtype is None:
        weight_dtype = jnp.bfloat16 if USE_BF16_MATMUL else jnp.float32

    def lin(k, din, dout):
        k1, k2 = jax.random.split(k)
        bound = 1.0 / math.sqrt(din)
        w = jax.random.uniform(k1, (dout, din), jnp.float32, -bound, bound)  # torch layout
        b = jax.random.uniform(k2, (dout,), jnp.float32, -bound, bound)
        return jnp.asarray(w.T, dtype=weight_dtype), b.reshape(1, dout)

    keys = jax.random.split(key, 12)

    def attn_params(ks):
        wq, bq = lin(ks[0], embed_dim, embed_dim)
        wk, bk = lin(ks[1], embed_dim, embed_dim)
        wv, bv = lin(ks[2], embed_dim, embed_dim)
        wo, bo = lin(ks[3], embed_dim, embed_dim)
        return dict(wq=wq, bq=bq, wk=wk, bk=bk, wv=wv, bv=bv, wo=wo, bo=bo)

    ff_w1, ff_b1 = lin(keys[8], embed_dim, pf_dim)    # (E, P), (1, P)
    ff_w2, ff_b2 = lin(keys[9], pf_dim, embed_dim)    # (P, E), (1, E)

    return dict(
        ln_gamma=jnp.ones((1, embed_dim), jnp.float32),
        ln_beta=jnp.zeros((1, embed_dim), jnp.float32),
        self_attn=attn_params(keys[0:4]),
        src_attn=attn_params(keys[4:8]),
        ff_w1=ff_w1, ff_b1=ff_b1, ff_w2=ff_w2, ff_b2=ff_b2,
    )


# ----------------------------------------------------------------------------
# Main
# ----------------------------------------------------------------------------

if __name__ == "__main__":
    B, T, S = 2, 8, 8
    EMBED, HEADS, PF = 32, 4, 64

    key = jax.random.PRNGKey(0)
    kp, kt, ks = jax.random.split(key, 3)

    params = init_params(kp, EMBED, HEADS, PF)

    embed_trg = jax.random.normal(kt, (B, T, EMBED), jnp.float32)
    embed_src = jax.random.normal(ks, (B, S, EMBED), jnp.float32)

    # masks over key positions (1 = keep, 0 = mask); mask out the last src token of batch 1
    trg_mask = jnp.ones((B, T), jnp.int32)
    src_mask = jnp.ones((B, S), jnp.int32).at[1, -1].set(0)

    fwd = jax.jit(functools.partial(decoder_layer_forward, heads=HEADS))
    out = fwd(params, embed_trg, embed_src, trg_mask, src_mask)
    out = jax.block_until_ready(out)

    assert out.shape == (B, T, EMBED) and out.dtype == jnp.float32
    assert bool(jnp.all(jnp.isfinite(out)))
    print("KERNEL_OK")
</pallas_src>

<mosaic_0001>
module attributes {stable_mosaic.version = 11 : i64} {
  func.func @_attn_block_kernel(%arg0: i32, %arg1: i32, %arg2: memref<1x8x32xf32, #tpu.memory_space<vmem>>, %arg3: memref<1x8x32xf32, #tpu.memory_space<vmem>>, %arg4: memref<1x1x8xf32, #tpu.memory_space<vmem>>, %arg5: memref<32x32xbf16, #tpu.memory_space<vmem>>, %arg6: memref<1x32xf32, #tpu.memory_space<vmem>>, %arg7: memref<32x32xbf16, #tpu.memory_space<vmem>>, %arg8: memref<1x32xf32, #tpu.memory_space<vmem>>, %arg9: memref<32x32xbf16, #tpu.memory_space<vmem>>, %arg10: memref<1x32xf32, #tpu.memory_space<vmem>>, %arg11: memref<32x32xbf16, #tpu.memory_space<vmem>>, %arg12: memref<1x32xf32, #tpu.memory_space<vmem>>, %arg13: memref<1x32xf32, #tpu.memory_space<vmem>>, %arg14: memref<1x32xf32, #tpu.memory_space<vmem>>, %arg15: memref<1x8x32xf32, #tpu.memory_space<vmem>>, %arg16: memref<8x32xf32, #tpu.memory_space<vmem>>) attributes {dimension_semantics = [#tpu.dimension_semantics<parallel>, #tpu.dimension_semantics<parallel>], iteration_bounds = array<i64: 2, 1>, scalar_prefetch = 0 : i64, scratch_operands = 1 : i64, tpu.core_type = #tpu.core_type<tc>, window_params = [{transform_indices = @transform_0, window_bounds = array<i64: 1, 8, 32>}, {transform_indices = @transform_1, window_bounds = array<i64: 1, 8, 32>}, {transform_indices = @transform_2, window_bounds = array<i64: 1, 1, 8>}, {pipeline_mode = #tpu.pipeline_mode<synchronous>, transform_indices = @transform_3, window_bounds = array<i64: 32, 32>}, {pipeline_mode = #tpu.pipeline_mode<synchronous>, transform_indices = @transform_4, window_bounds = array<i64: 1, 32>}, {pipeline_mode = #tpu.pipeline_mode<synchronous>, transform_indices = @transform_5, window_bounds = array<i64: 32, 32>}, {pipeline_mode = #tpu.pipeline_mode<synchronous>, transform_indices = @transform_6, window_bounds = array<i64: 1, 32>}, {pipeline_mode = #tpu.pipeline_mode<synchronous>, transform_indices = @transform_7, window_bounds = array<i64: 32, 32>}, {pipeline_mode = #tpu.pipeline_mode<synchronous>, transform_indices = @transform_8, window_bounds = array<i64: 1, 32>}, {pipeline_mode = #tpu.pipeline_mode<synchronous>, transform_indices = @transform_9, window_bounds = array<i64: 32, 32>}, {pipeline_mode = #tpu.pipeline_mode<synchronous>, transform_indices = @transform_10, window_bounds = array<i64: 1, 32>}, {pipeline_mode = #tpu.pipeline_mode<synchronous>, transform_indices = @transform_11, window_bounds = array<i64: 1, 32>}, {pipeline_mode = #tpu.pipeline_mode<synchronous>, transform_indices = @transform_12, window_bounds = array<i64: 1, 32>}, {transform_indices = @transform_13, window_bounds = array<i64: 1, 8, 32>}]} {
    %c0 = arith.constant 0 : index
    %c0_0 = arith.constant 0 : index
    %c0_1 = arith.constant 0 : index
    %0 = vector.load %arg2[%c0, %c0_0, %c0_1] : memref<1x8x32xf32, #tpu.memory_space<vmem>>, vector<1x8x32xf32>
    %1 = vector.shape_cast %0 : vector<1x8x32xf32> to vector<8x32xf32>
    %c0_2 = arith.constant 0 : index
    %c0_3 = arith.constant 0 : index
    %c0_4 = arith.constant 0 : index
    %2 = vector.load %arg3[%c0_2, %c0_3, %c0_4] : memref<1x8x32xf32, #tpu.memory_space<vmem>>, vector<1x8x32xf32>
    %3 = vector.shape_cast %2 : vector<1x8x32xf32> to vector<8x32xf32>
    %c0_5 = arith.constant 0 : index
    %c0_6 = arith.constant 0 : index
    %c0_7 = arith.constant 0 : index
    %4 = vector.load %arg4[%c0_5, %c0_6, %c0_7] : memref<1x1x8xf32, #tpu.memory_space<vmem>>, vector<1x1x8xf32>
    %5 = vector.shape_cast %4 : vector<1x1x8xf32> to vector<1x8xf32>
    %6 = arith.truncf %1 : vector<8x32xf32> to vector<8x32xbf16>
    %7 = arith.truncf %3 : vector<8x32xf32> to vector<8x32xbf16>
    %c0_8 = arith.constant 0 : index
    %c0_9 = arith.constant 0 : index
    %8 = vector.load %arg5[%c0_8, %c0_9] : memref<32x32xbf16, #tpu.memory_space<vmem>>, vector<32x32xbf16>
    %cst = arith.constant dense<0.000000e+00> : vector<8x32xf32>
    %9 = tpu.matmul %6, %8, %cst {dimension_numbers = #tpu.dot_dimension_numbers<[1], [0], [0], [1], [0, 0, 1, 1], [], []>} : vector<8x32xbf16>, vector<32x32xbf16>, vector<8x32xf32> -> vector<8x32xf32>
    %c0_10 = arith.constant 0 : index
    %c0_11 = arith.constant 0 : index
    %10 = vector.load %arg6[%c0_10, %c0_11] : memref<1x32xf32, #tpu.memory_space<vmem>>, vector<1x32xf32>
    %11 = vector.broadcast %10 : vector<1x32xf32> to vector<8x32xf32>
    %12 = arith.addf %9, %11 : vector<8x32xf32>
    %cst_12 = arith.constant 0.353553385 : f32
    %13 = vector.broadcast %cst_12 : f32 to vector<8x32xf32>
    %14 = arith.mulf %12, %13 : vector<8x32xf32>
    %c0_13 = arith.constant 0 : index
    %c0_14 = arith.constant 0 : index
    %15 = vector.load %arg7[%c0_13, %c0_14] : memref<32x32xbf16, #tpu.memory_space<vmem>>, vector<32x32xbf16>
    %cst_15 = arith.constant dense<0.000000e+00> : vector<8x32xf32>
    %16 = tpu.matmul %7, %15, %cst_15 {dimension_numbers = #tpu.dot_dimension_numbers<[1], [0], [0], [1], [0, 0, 1, 1], [], []>} : vector<8x32xbf16>, vector<32x32xbf16>, vector<8x32xf32> -> vector<8x32xf32>
    %c0_16 = arith.constant 0 : index
    %c0_17 = arith.constant 0 : index
    %17 = vector.load %arg8[%c0_16, %c0_17] : memref<1x32xf32, #tpu.memory_space<vmem>>, vector<1x32xf32>
    %18 = vector.broadcast %17 : vector<1x32xf32> to vector<8x32xf32>
    %19 = arith.addf %16, %18 : vector<8x32xf32>
    %c0_18 = arith.constant 0 : index
    %c0_19 = arith.constant 0 : index
    %20 = vector.load %arg9[%c0_18, %c0_19] : memref<32x32xbf16, #tpu.memory_space<vmem>>, vector<32x32xbf16>
    %cst_20 = arith.constant dense<0.000000e+00> : vector<8x32xf32>
    %21 = tpu.matmul %7, %20, %cst_20 {dimension_numbers = #tpu.dot_dimension_numbers<[1], [0], [0], [1], [0, 0, 1, 1], [], []>} : vector<8x32xbf16>, vector<32x32xbf16>, vector<8x32xf32> -> vector<8x32xf32>
    %c0_21 = arith.constant 0 : index
    %c0_22 = arith.constant 0 : index
    %22 = vector.load %arg10[%c0_21, %c0_22] : memref<1x32xf32, #tpu.memory_space<vmem>>, vector<1x32xf32>
    %23 = vector.broadcast %22 : vector<1x32xf32> to vector<8x32xf32>
    %24 = arith.addf %21, %23 : vector<8x32xf32>
    %25 = arith.truncf %14 : vector<8x32xf32> to vector<8x32xbf16>
    %26 = arith.truncf %19 : vector<8x32xf32> to vector<8x32xbf16>
    %27 = arith.truncf %24 : vector<8x32xf32> to vector<8x32xbf16>
    %cst_23 = arith.constant 0.000000e+00 : f32
    %28 = vector.broadcast %cst_23 : f32 to vector<1x8xf32>
    %29 = arith.cmpf oeq, %5, %28 : vector<1x8xf32>
    %30 = vector.shape_cast %29 : vector<1x8xi1> to vector<1x8xi1>
    %31 = vector.broadcast %30 : vector<1x8xi1> to vector<8x8xi1>
    %32 = vector.extract_strided_slice %25 {offsets = [0, 0], sizes = [8, 8], strides = [1, 1]} : vector<8x32xbf16> to vector<8x8xbf16>
    %33 = vector.extract_strided_slice %26 {offsets = [0, 0], sizes = [8, 8], strides = [1, 1]} : vector<8x32xbf16> to vector<8x8xbf16>
    %34 = vector.extract_strided_slice %27 {offsets = [0, 0], sizes = [8, 8], strides = [1, 1]} : vector<8x32xbf16> to vector<8x8xbf16>
    %cst_24 = arith.constant dense<0.000000e+00> : vector<8x8xf32>
    %35 = tpu.matmul %32, %33, %cst_24 {dimension_numbers = #tpu.dot_dimension_numbers<[1], [1], [0], [0], [0, 0, 1, 0], [], []>} : vector<8x8xbf16>, vector<8x8xbf16>, vector<8x8xf32> -> vector<8x8xf32>
    %cst_25 = arith.constant -1.000000e+10 : f32
    %36 = vector.broadcast %cst_25 : f32 to vector<8x8xf32>
    %37 = arith.select %31, %36, %35 : vector<8x8xi1>, vector<8x8xf32>
    %cst_26 = arith.constant dense<0xFF800000> : vector<8xf32>
    %38 = vector.multi_reduction <maximumf>, %37, %cst_26 [1] : vector<8x8xf32> to vector<8xf32>
    %39 = vector.shape_cast %38 : vector<8xf32> to vector<8x1xf32>
    %40 = vector.broadcast %39 : vector<8x1xf32> to vector<8x8xf32>
    %41 = arith.subf %37, %40 : vector<8x8xf32>
    %42 = math.exp %41 : vector<8x8xf32>
    %cst_27 = arith.constant dense<0.000000e+00> : vector<8xf32>
    %43 = vector.multi_reduction <add>, %42, %cst_27 [1] : vector<8x8xf32> to vector<8xf32>
    %44 = vector.shape_cast %43 : vector<8xf32> to vector<8x1xf32>
    %45 = tpu.reciprocal %44 {approx = true} : vector<8x1xf32> -> vector<8x1xf32>
    %46 = vector.broadcast %45 : vector<8x1xf32> to vector<8x8xf32>
    %47 = arith.mulf %42, %46 : vector<8x8xf32>
    %48 = arith.truncf %47 : vector<8x8xf32> to vector<8x8xbf16>
    %cst_28 = arith.constant dense<0.000000e+00> : vector<8x8xf32>
    %49 = tpu.matmul %48, %34, %cst_28 {dimension_numbers = #tpu.dot_dimension_numbers<[1], [0], [0], [1], [0, 0, 1, 1], [], []>} : vector<8x8xbf16>, vector<8x8xbf16>, vector<8x8xf32> -> vector<8x8xf32>
    %c0_29 = arith.constant 0 : index
    %c0_30 = arith.constant 0 : index
    %50 = vector.load %arg16[%c0_29, %c0_30] : memref<8x32xf32, #tpu.memory_space<vmem>>, vector<8x8xf32>
    tpu.vector_store %arg16[%c0_29, %c0_30], %49 {strides = array<i32>} : memref<8x32xf32, #tpu.memory_space<vmem>>, vector<8x8xf32>,
    %51 = vector.extract_strided_slice %25 {offsets = [0, 8], sizes = [8, 8], strides = [1, 1]} : vector<8x32xbf16> to vector<8x8xbf16>
    %52 = vector.extract_strided_slice %26 {offsets = [0, 8], sizes = [8, 8], strides = [1, 1]} : vector<8x32xbf16> to vector<8x8xbf16>
    %53 = vector.extract_strided_slice %27 {offsets = [0, 8], sizes = [8, 8], strides = [1, 1]} : vector<8x32xbf16> to vector<8x8xbf16>
    %cst_31 = arith.constant dense<0.000000e+00> : vector<8x8xf32>
    %54 = tpu.matmul %51, %52, %cst_31 {dimension_numbers = #tpu.dot_dimension_numbers<[1], [1], [0], [0], [0, 0, 1, 0], [], []>} : vector<8x8xbf16>, vector<8x8xbf16>, vector<8x8xf32> -> vector<8x8xf32>
    %cst_32 = arith.constant -1.000000e+10 : f32
    %55 = vector.broadcast %cst_32 : f32 to vector<8x8xf32>
    %56 = arith.select %31, %55, %54 : vector<8x8xi1>, vector<8x8xf32>
    %cst_33 = arith.constant dense<0xFF800000> : vector<8xf32>
    %57 = vector.multi_reduction <maximumf>, %56, %cst_33 [1] : vector<8x8xf32> to vector<8xf32>
    %58 = vector.shape_cast %57 : vector<8xf32> to vector<8x1xf32>
    %59 = vector.broadcast %58 : vector<8x1xf32> to vector<8x8xf32>
    %60 = arith.subf %56, %59 : vector<8x8xf32>
    %61 = math.exp %60 : vector<8x8xf32>
    %cst_34 = arith.constant dense<0.000000e+00> : vector<8xf32>
    %62 = vector.multi_reduction <add>, %61, %cst_34 [1] : vector<8x8xf32> to vector<8xf32>
    %63 = vector.shape_cast %62 : vector<8xf32> to vector<8x1xf32>
    %64 = tpu.reciprocal %63 {approx = true} : vector<8x1xf32> -> vector<8x1xf32>
    %65 = vector.broadcast %64 : vector<8x1xf32> to vector<8x8xf32>
    %66 = arith.mulf %61, %65 : vector<8x8xf32>
    %67 = arith.truncf %66 : vector<8x8xf32> to vector<8x8xbf16>
    %cst_35 = arith.constant dense<0.000000e+00> : vector<8x8xf32>
    %68 = tpu.matmul %67, %53, %cst_35 {dimension_numbers = #tpu.dot_dimension_numbers<[1], [0], [0], [1], [0, 0, 1, 1], [], []>} : vector<8x8xbf16>, vector<8x8xbf16>, vector<8x8xf32> -> vector<8x8xf32>
    %c0_36 = arith.constant 0 : index
    %c8 = arith.constant 8 : index
    %69 = vector.load %arg16[%c0_36, %c8] : memref<8x32xf32, #tpu.memory_space<vmem>>, vector<8x8xf32>
    tpu.vector_store %arg16[%c0_36, %c8], %68 {strides = array<i32>} : memref<8x32xf32, #tpu.memory_space<vmem>>, vector<8x8xf32>,
    %70 = vector.extract_strided_slice %25 {offsets = [0, 16], sizes = [8, 8], strides = [1, 1]} : vector<8x32xbf16> to vector<8x8xbf16>
    %71 = vector.extract_strided_slice %26 {offsets = [0, 16], sizes = [8, 8], strides = [1, 1]} : vector<8x32xbf16> to vector<8x8xbf16>
    %72 = vector.extract_strided_slice %27 {offsets = [0, 16], sizes = [8, 8], strides = [1, 1]} : vector<8x32xbf16> to vector<8x8xbf16>
    %cst_37 = arith.constant dense<0.000000e+00> : vector<8x8xf32>
    %73 = tpu.matmul %70, %71, %cst_37 {dimension_numbers = #tpu.dot_dimension_numbers<[1], [1], [0], [0], [0, 0, 1, 0], [], []>} : vector<8x8xbf16>, vector<8x8xbf16>, vector<8x8xf32> -> vector<8x8xf32>
    %cst_38 = arith.constant -1.000000e+10 : f32
    %74 = vector.broadcast %cst_38 : f32 to vector<8x8xf32>
    %75 = arith.select %31, %74, %73 : vector<8x8xi1>, vector<8x8xf32>
    %cst_39 = arith.constant dense<0xFF800000> : vector<8xf32>
    %76 = vector.multi_reduction <maximumf>, %75, %cst_39 [1] : vector<8x8xf32> to vector<8xf32>
    %77 = vector.shape_cast %76 : vector<8xf32> to vector<8x1xf32>
    %78 = vector.broadcast %77 : vector<8x1xf32> to vector<8x8xf32>
    %79 = arith.subf %75, %78 : vector<8x8xf32>
    %80 = math.exp %79 : vector<8x8xf32>
    %cst_40 = arith.constant dense<0.000000e+00> : vector<8xf32>
    %81 = vector.multi_reduction <add>, %80, %cst_40 [1] : vector<8x8xf32> to vector<8xf32>
    %82 = vector.shape_cast %81 : vector<8xf32> to vector<8x1xf32>
    %83 = tpu.reciprocal %82 {approx = true} : vector<8x1xf32> -> vector<8x1xf32>
    %84 = vector.broadcast %83 : vector<8x1xf32> to vector<8x8xf32>
    %85 = arith.mulf %80, %84 : vector<8x8xf32>
    %86 = arith.truncf %85 : vector<8x8xf32> to vector<8x8xbf16>
    %cst_41 = arith.constant dense<0.000000e+00> : vector<8x8xf32>
    %87 = tpu.matmul %86, %72, %cst_41 {dimension_numbers = #tpu.dot_dimension_numbers<[1], [0], [0], [1], [0, 0, 1, 1], [], []>} : vector<8x8xbf16>, vector<8x8xbf16>, vector<8x8xf32> -> vector<8x8xf32>
    %c0_42 = arith.constant 0 : index
    %c16 = arith.constant 16 : index
    %88 = vector.load %arg16[%c0_42, %c16] : memref<8x32xf32, #tpu.memory_space<vmem>>, vector<8x8xf32>
    tpu.vector_store %arg16[%c0_42, %c16], %87 {strides = array<i32>} : memref<8x32xf32, #tpu.memory_space<vmem>>, vector<8x8xf32>,
    %89 = vector.extract_strided_slice %25 {offsets = [0, 24], sizes = [8, 8], strides = [1, 1]} : vector<8x32xbf16> to vector<8x8xbf16>
    %90 = vector.extract_strided_slice %26 {offsets = [0, 24], sizes = [8, 8], strides = [1, 1]} : vector<8x32xbf16> to vector<8x8xbf16>
    %91 = vector.extract_strided_slice %27 {offsets = [0, 24], sizes = [8, 8], strides = [1, 1]} : vector<8x32xbf16> to vector<8x8xbf16>
    %cst_43 = arith.constant dense<0.000000e+00> : vector<8x8xf32>
    %92 = tpu.matmul %89, %90, %cst_43 {dimension_numbers = #tpu.dot_dimension_numbers<[1], [1], [0], [0], [0, 0, 1, 0], [], []>} : vector<8x8xbf16>, vector<8x8xbf16>, vector<8x8xf32> -> vector<8x8xf32>
    %cst_44 = arith.constant -1.000000e+10 : f32
    %93 = vector.broadcast %cst_44 : f32 to vector<8x8xf32>
    %94 = arith.select %31, %93, %92 : vector<8x8xi1>, vector<8x8xf32>
    %cst_45 = arith.constant dense<0xFF800000> : vector<8xf32>
    %95 = vector.multi_reduction <maximumf>, %94, %cst_45 [1] : vector<8x8xf32> to vector<8xf32>
    %96 = vector.shape_cast %95 : vector<8xf32> to vector<8x1xf32>
    %97 = vector.broadcast %96 : vector<8x1xf32> to vector<8x8xf32>
    %98 = arith.subf %94, %97 : vector<8x8xf32>
    %99 = math.exp %98 : vector<8x8xf32>
    %cst_46 = arith.constant dense<0.000000e+00> : vector<8xf32>
    %100 = vector.multi_reduction <add>, %99, %cst_46 [1] : vector<8x8xf32> to vector<8xf32>
    %101 = vector.shape_cast %100 : vector<8xf32> to vector<8x1xf32>
    %102 = tpu.reciprocal %101 {approx = true} : vector<8x1xf32> -> vector<8x1xf32>
    %103 = vector.broadcast %102 : vector<8x1xf32> to vector<8x8xf32>
    %104 = arith.mulf %99, %103 : vector<8x8xf32>
    %105 = arith.truncf %104 : vector<8x8xf32> to vector<8x8xbf16>
    %cst_47 = arith.constant dense<0.000000e+00> : vector<8x8xf32>
    %106 = tpu.matmul %105, %91, %cst_47 {dimension_numbers = #tpu.dot_dimension_numbers<[1], [0], [0], [1], [0, 0, 1, 1], [], []>} : vector<8x8xbf16>, vector<8x8xbf16>, vector<8x8xf32> -> vector<8x8xf32>
    %c0_48 = arith.constant 0 : index
    %c24 = arith.constant 24 : index
    %107 = vector.load %arg16[%c0_48, %c24] : memref<8x32xf32, #tpu.memory_space<vmem>>, vector<8x8xf32>
    tpu.vector_store %arg16[%c0_48, %c24], %106 {strides = array<i32>} : memref<8x32xf32, #tpu.memory_space<vmem>>, vector<8x8xf32>,
    %c0_49 = arith.constant 0 : index
    %c0_50 = arith.constant 0 : index
    %108 = vector.load %arg16[%c0_49, %c0_50] : memref<8x32xf32, #tpu.memory_space<vmem>>, vector<8x32xf32>
    %109 = arith.truncf %108 : vector<8x32xf32> to vector<8x32xbf16>
    %c0_51 = arith.constant 0 : index
    %c0_52 = arith.constant 0 : index
    %110 = vector.load %arg11[%c0_51, %c0_52] : memref<32x32xbf16, #tpu.memory_space<vmem>>, vector<32x32xbf16>
    %cst_53 = arith.constant dense<0.000000e+00> : vector<8x32xf32>
    %111 = tpu.matmul %109, %110, %cst_53 {dimension_numbers = #tpu.dot_dimension_numbers<[1], [0], [0], [1], [0, 0, 1, 1], [], []>} : vector<8x32xbf16>, vector<32x32xbf16>, vector<8x32xf32> -> vector<8x32xf32>
    %c0_54 = arith.constant 0 : index
    %c0_55 = arith.constant 0 : index
    %112 = vector.load %arg12[%c0_54, %c0_55] : memref<1x32xf32, #tpu.memory_space<vmem>>, vector<1x32xf32>
    %113 = vector.broadcast %112 : vector<1x32xf32> to vector<8x32xf32>
    %114 = arith.addf %111, %113 : vector<8x32xf32>
    %115 = arith.addf %1, %114 : vector<8x32xf32>
    %cst_56 = arith.constant dense<0.000000e+00> : vector<8xf32>
    %116 = vector.multi_reduction <add>, %115, %cst_56 [1] : vector<8x32xf32> to vector<8xf32>
    %117 = vector.shape_cast %116 : vector<8xf32> to vector<8x1xf32>
    %cst_57 = arith.constant 3.200000e+01 : f32
    %118 = vector.broadcast %cst_57 : f32 to vector<8x1xf32>
    %119 = arith.divf %117, %118 : vector<8x1xf32>
    %120 = vector.broadcast %119 : vector<8x1xf32> to vector<8x32xf32>
    %121 = arith.subf %115, %120 : vector<8x32xf32>
    %122 = arith.mulf %121, %121 : vector<8x32xf32>
    %cst_58 = arith.constant dense<0.000000e+00> : vector<8xf32>
    %123 = vector.multi_reduction <add>, %122, %cst_58 [1] : vector<8x32xf32> to vector<8xf32>
    %124 = vector.shape_cast %123 : vector<8xf32> to vector<8x1xf32>
    %cst_59 = arith.constant 3.200000e+01 : f32
    %125 = vector.broadcast %cst_59 : f32 to vector<8x1xf32>
    %126 = arith.divf %124, %125 : vector<8x1xf32>
    %127 = vector.broadcast %119 : vector<8x1xf32> to vector<8x32xf32>
    %128 = arith.subf %115, %127 : vector<8x32xf32>
    %cst_60 = arith.constant 9.99999974E-6 : f32
    %129 = vector.broadcast %cst_60 : f32 to vector<8x1xf32>
    %130 = arith.addf %126, %129 : vector<8x1xf32>
    %131 = math.rsqrt %130 : vector<8x1xf32>
    %132 = vector.broadcast %131 : vector<8x1xf32> to vector<8x32xf32>
    %133 = arith.mulf %128, %132 : vector<8x32xf32>
    %c0_61 = arith.constant 0 : index
    %c0_62 = arith.constant 0 : index
    %134 = vector.load %arg13[%c0_61, %c0_62] : memref<1x32xf32, #tpu.memory_space<vmem>>, vector<1x32xf32>
    %135 = vector.broadcast %134 : vector<1x32xf32> to vector<8x32xf32>
    %136 = arith.mulf %133, %135 : vector<8x32xf32>
    %c0_63 = arith.constant 0 : index
    %c0_64 = arith.constant 0 : index
    %137 = vector.load %arg14[%c0_63, %c0_64] : memref<1x32xf32, #tpu.memory_space<vmem>>, vector<1x32xf32>
    %138 = vector.broadcast %137 : vector<1x32xf32> to vector<8x32xf32>
    %139 = arith.addf %136, %138 : vector<8x32xf32>
    %c0_65 = arith.constant 0 : index
    %c0_66 = arith.constant 0 : index
    %c0_67 = arith.constant 0 : index
    %140 = vector.load %arg15[%c0_65, %c0_66, %c0_67] : memref<1x8x32xf32, #tpu.memory_space<vmem>>, vector<1x8x32xf32>
    %141 = vector.shape_cast %140 : vector<1x8x32xf32> to vector<8x32xf32>
    %142 = vector.shape_cast %139 : vector<8x32xf32> to vector<1x8x32xf32>
    tpu.vector_store %arg15[%c0_65, %c0_66, %c0_67], %142 {strides = array<i32>} : memref<1x8x32xf32, #tpu.memory_space<vmem>>, vector<1x8x32xf32>,
    return
  }
  func.func @transform_0(%arg0: i32, %arg1: i32) -> (i32, i32, i32) {
    %c0_i32 = arith.constant 0 : i32
    %c0_i32_0 = arith.constant 0 : i32
    return %arg0, %arg1, %c0_i32 : i32, i32, i32
  }
  func.func @transform_1(%arg0: i32, %arg1: i32) -> (i32, i32, i32) {
    %c0_i32 = arith.constant 0 : i32
    %c0_i32_0 = arith.constant 0 : i32
    %c0_i32_1 = arith.constant 0 : i32
    return %arg0, %c0_i32, %c0_i32_0 : i32, i32, i32
  }
  func.func @transform_2(%arg0: i32, %arg1: i32) -> (i32, i32, i32) {
    %c0_i32 = arith.constant 0 : i32
    %c0_i32_0 = arith.constant 0 : i32
    %c0_i32_1 = arith.constant 0 : i32
    return %arg0, %c0_i32, %c0_i32_0 : i32, i32, i32
  }
  func.func @transform_3(%arg0: i32, %arg1: i32) -> (i32, i32) {
    %c0_i32 = arith.constant 0 : i32
    %c0_i32_0 = arith.constant 0 : i32
    %c0_i32_1 = arith.constant 0 : i32
    return %c0_i32, %c0_i32_0 : i32, i32
  }
  func.func @transform_4(%arg0: i32, %arg1: i32) -> (i32, i32) {
    %c0_i32 = arith.constant 0 : i32
    %c0_i32_0 = arith.constant 0 : i32
    %c0_i32_1 = arith.constant 0 : i32
    return %c0_i32, %c0_i32_0 : i32, i32
  }
  func.func @transform_5(%arg0: i32, %arg1: i32) -> (i32, i32) {
    %c0_i32 = arith.constant 0 : i32
    %c0_i32_0 = arith.constant 0 : i32
    %c0_i32_1 = arith.constant 0 : i32
    return %c0_i32, %c0_i32_0 : i32, i32
  }
  func.func @transform_6(%arg0: i32, %arg1: i32) -> (i32, i32) {
    %c0_i32 = arith.constant 0 : i32
    %c0_i32_0 = arith.constant 0 : i32
    %c0_i32_1 = arith.constant 0 : i32
    return %c0_i32, %c0_i32_0 : i32, i32
  }
  func.func @transform_7(%arg0: i32, %arg1: i32) -> (i32, i32) {
    %c0_i32 = arith.constant 0 : i32
    %c0_i32_0 = arith.constant 0 : i32
    %c0_i32_1 = arith.constant 0 : i32
    return %c0_i32, %c0_i32_0 : i32, i32
  }
  func.func @transform_8(%arg0: i32, %arg1: i32) -> (i32, i32) {
    %c0_i32 = arith.constant 0 : i32
    %c0_i32_0 = arith.constant 0 : i32
    %c0_i32_1 = arith.constant 0 : i32
    return %c0_i32, %c0_i32_0 : i32, i32
  }
  func.func @transform_9(%arg0: i32, %arg1: i32) -> (i32, i32) {
    %c0_i32 = arith.constant 0 : i32
    %c0_i32_0 = arith.constant 0 : i32
    %c0_i32_1 = arith.constant 0 : i32
    return %c0_i32, %c0_i32_0 : i32, i32
  }
  func.func @transform_10(%arg0: i32, %arg1: i32) -> (i32, i32) {
    %c0_i32 = arith.constant 0 : i32
    %c0_i32_0 = arith.constant 0 : i32
    %c0_i32_1 = arith.constant 0 : i32
    return %c0_i32, %c0_i32_0 : i32, i32
  }
  func.func @transform_11(%arg0: i32, %arg1: i32) -> (i32, i32) {
    %c0_i32 = arith.constant 0 : i32
    %c0_i32_0 = arith.constant 0 : i32
    %c0_i32_1 = arith.constant 0 : i32
    return %c0_i32, %c0_i32_0 : i32, i32
  }
  func.func @transform_12(%arg0: i32, %arg1: i32) -> (i32, i32) {
    %c0_i32 = arith.constant 0 : i32
    %c0_i32_0 = arith.constant 0 : i32
    %c0_i32_1 = arith.constant 0 : i32
    return %c0_i32, %c0_i32_0 : i32, i32
  }
  func.func @transform_13(%arg0: i32, %arg1: i32) -> (i32, i32, i32) {
    %c0_i32 = arith.constant 0 : i32
    %c0_i32_0 = arith.constant 0 : i32
    return %arg0, %arg1, %c0_i32 : i32, i32, i32
  }
}

module attributes {stable_mosaic.version = 11 : i64} {
  func.func @_attn_block_kernel(%arg0: i32, %arg1: i32, %arg2: memref<1x8x32xf32, #tpu.memory_space<vmem>>, %arg3: memref<1x8x32xf32, #tpu.memory_space<vmem>>, %arg4: memref<1x1x8xf32, #tpu.memory_space<vmem>>, %arg5: memref<32x32xbf16, #tpu.memory_space<vmem>>, %arg6: memref<1x32xf32, #tpu.memory_space<vmem>>, %arg7: memref<32x32xbf16, #tpu.memory_space<vmem>>, %arg8: memref<1x32xf32, #tpu.memory_space<vmem>>, %arg9: memref<32x32xbf16, #tpu.memory_space<vmem>>, %arg10: memref<1x32xf32, #tpu.memory_space<vmem>>, %arg11: memref<32x32xbf16, #tpu.memory_space<vmem>>, %arg12: memref<1x32xf32, #tpu.memory_space<vmem>>, %arg13: memref<1x32xf32, #tpu.memory_space<vmem>>, %arg14: memref<1x32xf32, #tpu.memory_space<vmem>>, %arg15: memref<1x8x32xf32, #tpu.memory_space<vmem>>, %arg16: memref<8x32xf32, #tpu.memory_space<vmem>>) attributes {dimension_semantics = [#tpu.dimension_semantics<parallel>, #tpu.dimension_semantics<parallel>], iteration_bounds = array<i64: 2, 1>, scalar_prefetch = 0 : i64, scratch_operands = 1 : i64, tpu.core_type = #tpu.core_type<tc>, window_params = [{transform_indices = @transform_0, window_bounds = array<i64: 1, 8, 32>}, {transform_indices = @transform_1, window_bounds = array<i64: 1, 8, 32>}, {transform_indices = @transform_2, window_bounds = array<i64: 1, 1, 8>}, {pipeline_mode = #tpu.pipeline_mode<synchronous>, transform_indices = @transform_3, window_bounds = array<i64: 32, 32>}, {pipeline_mode = #tpu.pipeline_mode<synchronous>, transform_indices = @transform_4, window_bounds = array<i64: 1, 32>}, {pipeline_mode = #tpu.pipeline_mode<synchronous>, transform_indices = @transform_5, window_bounds = array<i64: 32, 32>}, {pipeline_mode = #tpu.pipeline_mode<synchronous>, transform_indices = @transform_6, window_bounds = array<i64: 1, 32>}, {pipeline_mode = #tpu.pipeline_mode<synchronous>, transform_indices = @transform_7, window_bounds = array<i64: 32, 32>}, {pipeline_mode = #tpu.pipeline_mode<synchronous>, transform_indices = @transform_8, window_bounds = array<i64: 1, 32>}, {pipeline_mode = #tpu.pipeline_mode<synchronous>, transform_indices = @transform_9, window_bounds = array<i64: 32, 32>}, {pipeline_mode = #tpu.pipeline_mode<synchronous>, transform_indices = @transform_10, window_bounds = array<i64: 1, 32>}, {pipeline_mode = #tpu.pipeline_mode<synchronous>, transform_indices = @transform_11, window_bounds = array<i64: 1, 32>}, {pipeline_mode = #tpu.pipeline_mode<synchronous>, transform_indices = @transform_12, window_bounds = array<i64: 1, 32>}, {transform_indices = @transform_13, window_bounds = array<i64: 1, 8, 32>}]} {
    %c0 = arith.constant 0 : index
    %c0_0 = arith.constant 0 : index
    %c0_1 = arith.constant 0 : index
    %0 = vector.load %arg2[%c0, %c0_0, %c0_1] : memref<1x8x32xf32, #tpu.memory_space<vmem>>, vector<1x8x32xf32>
    %1 = vector.shape_cast %0 : vector<1x8x32xf32> to vector<8x32xf32>
    %c0_2 = arith.constant 0 : index
    %c0_3 = arith.constant 0 : index
    %c0_4 = arith.constant 0 : index
    %2 = vector.load %arg3[%c0_2, %c0_3, %c0_4] : memref<1x8x32xf32, #tpu.memory_space<vmem>>, vector<1x8x32xf32>
    %3 = vector.shape_cast %2 : vector<1x8x32xf32> to vector<8x32xf32>
    %c0_5 = arith.constant 0 : index
    %c0_6 = arith.constant 0 : index
    %c0_7 = arith.constant 0 : index
    %4 = vector.load %arg4[%c0_5, %c0_6, %c0_7] : memref<1x1x8xf32, #tpu.memory_space<vmem>>, vector<1x1x8xf32>
    %5 = vector.shape_cast %4 : vector<1x1x8xf32> to vector<1x8xf32>
    %6 = arith.truncf %1 : vector<8x32xf32> to vector<8x32xbf16>
    %7 = arith.truncf %3 : vector<8x32xf32> to vector<8x32xbf16>
    %c0_8 = arith.constant 0 : index
    %c0_9 = arith.constant 0 : index
    %8 = vector.load %arg5[%c0_8, %c0_9] : memref<32x32xbf16, #tpu.memory_space<vmem>>, vector<32x32xbf16>
    %cst = arith.constant dense<0.000000e+00> : vector<8x32xf32>
    %9 = tpu.matmul %6, %8, %cst {dimension_numbers = #tpu.dot_dimension_numbers<[1], [0], [0], [1], [0, 0, 1, 1], [], []>} : vector<8x32xbf16>, vector<32x32xbf16>, vector<8x32xf32> -> vector<8x32xf32>
    %c0_10 = arith.constant 0 : index
    %c0_11 = arith.constant 0 : index
    %10 = vector.load %arg6[%c0_10, %c0_11] : memref<1x32xf32, #tpu.memory_space<vmem>>, vector<1x32xf32>
    %11 = vector.broadcast %10 : vector<1x32xf32> to vector<8x32xf32>
    %12 = arith.addf %9, %11 : vector<8x32xf32>
    %cst_12 = arith.constant 0.353553385 : f32
    %13 = vector.broadcast %cst_12 : f32 to vector<8x32xf32>
    %14 = arith.mulf %12, %13 : vector<8x32xf32>
    %c0_13 = arith.constant 0 : index
    %c0_14 = arith.constant 0 : index
    %15 = vector.load %arg7[%c0_13, %c0_14] : memref<32x32xbf16, #tpu.memory_space<vmem>>, vector<32x32xbf16>
    %cst_15 = arith.constant dense<0.000000e+00> : vector<8x32xf32>
    %16 = tpu.matmul %7, %15, %cst_15 {dimension_numbers = #tpu.dot_dimension_numbers<[1], [0], [0], [1], [0, 0, 1, 1], [], []>} : vector<8x32xbf16>, vector<32x32xbf16>, vector<8x32xf32> -> vector<8x32xf32>
    %c0_16 = arith.constant 0 : index
    %c0_17 = arith.constant 0 : index
    %17 = vector.load %arg8[%c0_16, %c0_17] : memref<1x32xf32, #tpu.memory_space<vmem>>, vector<1x32xf32>
    %18 = vector.broadcast %17 : vector<1x32xf32> to vector<8x32xf32>
    %19 = arith.addf %16, %18 : vector<8x32xf32>
    %c0_18 = arith.constant 0 : index
    %c0_19 = arith.constant 0 : index
    %20 = vector.load %arg9[%c0_18, %c0_19] : memref<32x32xbf16, #tpu.memory_space<vmem>>, vector<32x32xbf16>
    %cst_20 = arith.constant dense<0.000000e+00> : vector<8x32xf32>
    %21 = tpu.matmul %7, %20, %cst_20 {dimension_numbers = #tpu.dot_dimension_numbers<[1], [0], [0], [1], [0, 0, 1, 1], [], []>} : vector<8x32xbf16>, vector<32x32xbf16>, vector<8x32xf32> -> vector<8x32xf32>
    %c0_21 = arith.constant 0 : index
    %c0_22 = arith.constant 0 : index
    %22 = vector.load %arg10[%c0_21, %c0_22] : memref<1x32xf32, #tpu.memory_space<vmem>>, vector<1x32xf32>
    %23 = vector.broadcast %22 : vector<1x32xf32> to vector<8x32xf32>
    %24 = arith.addf %21, %23 : vector<8x32xf32>
    %25 = arith.truncf %14 : vector<8x32xf32> to vector<8x32xbf16>
    %26 = arith.truncf %19 : vector<8x32xf32> to vector<8x32xbf16>
    %27 = arith.truncf %24 : vector<8x32xf32> to vector<8x32xbf16>
    %cst_23 = arith.constant 0.000000e+00 : f32
    %28 = vector.broadcast %cst_23 : f32 to vector<1x8xf32>
    %29 = arith.cmpf oeq, %5, %28 : vector<1x8xf32>
    %30 = vector.shape_cast %29 : vector<1x8xi1> to vector<1x8xi1>
    %31 = vector.broadcast %30 : vector<1x8xi1> to vector<8x8xi1>
    %32 = vector.extract_strided_slice %25 {offsets = [0, 0], sizes = [8, 8], strides = [1, 1]} : vector<8x32xbf16> to vector<8x8xbf16>
    %33 = vector.extract_strided_slice %26 {offsets = [0, 0], sizes = [8, 8], strides = [1, 1]} : vector<8x32xbf16> to vector<8x8xbf16>
    %34 = vector.extract_strided_slice %27 {offsets = [0, 0], sizes = [8, 8], strides = [1, 1]} : vector<8x32xbf16> to vector<8x8xbf16>
    %cst_24 = arith.constant dense<0.000000e+00> : vector<8x8xf32>
    %35 = tpu.matmul %32, %33, %cst_24 {dimension_numbers = #tpu.dot_dimension_numbers<[1], [1], [0], [0], [0, 0, 1, 0], [], []>} : vector<8x8xbf16>, vector<8x8xbf16>, vector<8x8xf32> -> vector<8x8xf32>
    %cst_25 = arith.constant -1.000000e+10 : f32
    %36 = vector.broadcast %cst_25 : f32 to vector<8x8xf32>
    %37 = arith.select %31, %36, %35 : vector<8x8xi1>, vector<8x8xf32>
    %cst_26 = arith.constant dense<0xFF800000> : vector<8xf32>
    %38 = vector.multi_reduction <maximumf>, %37, %cst_26 [1] : vector<8x8xf32> to vector<8xf32>
    %39 = vector.shape_cast %38 : vector<8xf32> to vector<8x1xf32>
    %40 = vector.broadcast %39 : vector<8x1xf32> to vector<8x8xf32>
    %41 = arith.subf %37, %40 : vector<8x8xf32>
    %42 = math.exp %41 : vector<8x8xf32>
    %cst_27 = arith.constant dense<0.000000e+00> : vector<8xf32>
    %43 = vector.multi_reduction <add>, %42, %cst_27 [1] : vector<8x8xf32> to vector<8xf32>
    %44 = vector.shape_cast %43 : vector<8xf32> to vector<8x1xf32>
    %45 = tpu.reciprocal %44 {approx = true} : vector<8x1xf32> -> vector<8x1xf32>
    %46 = vector.broadcast %45 : vector<8x1xf32> to vector<8x8xf32>
    %47 = arith.mulf %42, %46 : vector<8x8xf32>
    %48 = arith.truncf %47 : vector<8x8xf32> to vector<8x8xbf16>
    %cst_28 = arith.constant dense<0.000000e+00> : vector<8x8xf32>
    %49 = tpu.matmul %48, %34, %cst_28 {dimension_numbers = #tpu.dot_dimension_numbers<[1], [0], [0], [1], [0, 0, 1, 1], [], []>} : vector<8x8xbf16>, vector<8x8xbf16>, vector<8x8xf32> -> vector<8x8xf32>
    %c0_29 = arith.constant 0 : index
    %c0_30 = arith.constant 0 : index
    %50 = vector.load %arg16[%c0_29, %c0_30] : memref<8x32xf32, #tpu.memory_space<vmem>>, vector<8x8xf32>
    tpu.vector_store %arg16[%c0_29, %c0_30], %49 {strides = array<i32>} : memref<8x32xf32, #tpu.memory_space<vmem>>, vector<8x8xf32>,
    %51 = vector.extract_strided_slice %25 {offsets = [0, 8], sizes = [8, 8], strides = [1, 1]} : vector<8x32xbf16> to vector<8x8xbf16>
    %52 = vector.extract_strided_slice %26 {offsets = [0, 8], sizes = [8, 8], strides = [1, 1]} : vector<8x32xbf16> to vector<8x8xbf16>
    %53 = vector.extract_strided_slice %27 {offsets = [0, 8], sizes = [8, 8], strides = [1, 1]} : vector<8x32xbf16> to vector<8x8xbf16>
    %cst_31 = arith.constant dense<0.000000e+00> : vector<8x8xf32>
    %54 = tpu.matmul %51, %52, %cst_31 {dimension_numbers = #tpu.dot_dimension_numbers<[1], [1], [0], [0], [0, 0, 1, 0], [], []>} : vector<8x8xbf16>, vector<8x8xbf16>, vector<8x8xf32> -> vector<8x8xf32>
    %cst_32 = arith.constant -1.000000e+10 : f32
    %55 = vector.broadcast %cst_32 : f32 to vector<8x8xf32>
    %56 = arith.select %31, %55, %54 : vector<8x8xi1>, vector<8x8xf32>
    %cst_33 = arith.constant dense<0xFF800000> : vector<8xf32>
    %57 = vector.multi_reduction <maximumf>, %56, %cst_33 [1] : vector<8x8xf32> to vector<8xf32>
    %58 = vector.shape_cast %57 : vector<8xf32> to vector<8x1xf32>
    %59 = vector.broadcast %58 : vector<8x1xf32> to vector<8x8xf32>
    %60 = arith.subf %56, %59 : vector<8x8xf32>
    %61 = math.exp %60 : vector<8x8xf32>
    %cst_34 = arith.constant dense<0.000000e+00> : vector<8xf32>
    %62 = vector.multi_reduction <add>, %61, %cst_34 [1] : vector<8x8xf32> to vector<8xf32>
    %63 = vector.shape_cast %62 : vector<8xf32> to vector<8x1xf32>
    %64 = tpu.reciprocal %63 {approx = true} : vector<8x1xf32> -> vector<8x1xf32>
    %65 = vector.broadcast %64 : vector<8x1xf32> to vector<8x8xf32>
    %66 = arith.mulf %61, %65 : vector<8x8xf32>
    %67 = arith.truncf %66 : vector<8x8xf32> to vector<8x8xbf16>
    %cst_35 = arith.constant dense<0.000000e+00> : vector<8x8xf32>
    %68 = tpu.matmul %67, %53, %cst_35 {dimension_numbers = #tpu.dot_dimension_numbers<[1], [0], [0], [1], [0, 0, 1, 1], [], []>} : vector<8x8xbf16>, vector<8x8xbf16>, vector<8x8xf32> -> vector<8x8xf32>
    %c0_36 = arith.constant 0 : index
    %c8 = arith.constant 8 : index
    %69 = vector.load %arg16[%c0_36, %c8] : memref<8x32xf32, #tpu.memory_space<vmem>>, vector<8x8xf32>
    tpu.vector_store %arg16[%c0_36, %c8], %68 {strides = array<i32>} : memref<8x32xf32, #tpu.memory_space<vmem>>, vector<8x8xf32>,
    %70 = vector.extract_strided_slice %25 {offsets = [0, 16], sizes = [8, 8], strides = [1, 1]} : vector<8x32xbf16> to vector<8x8xbf16>
    %71 = vector.extract_strided_slice %26 {offsets = [0, 16], sizes = [8, 8], strides = [1, 1]} : vector<8x32xbf16> to vector<8x8xbf16>
    %72 = vector.extract_strided_slice %27 {offsets = [0, 16], sizes = [8, 8], strides = [1, 1]} : vector<8x32xbf16> to vector<8x8xbf16>
    %cst_37 = arith.constant dense<0.000000e+00> : vector<8x8xf32>
    %73 = tpu.matmul %70, %71, %cst_37 {dimension_numbers = #tpu.dot_dimension_numbers<[1], [1], [0], [0], [0, 0, 1, 0], [], []>} : vector<8x8xbf16>, vector<8x8xbf16>, vector<8x8xf32> -> vector<8x8xf32>
    %cst_38 = arith.constant -1.000000e+10 : f32
    %74 = vector.broadcast %cst_38 : f32 to vector<8x8xf32>
    %75 = arith.select %31, %74, %73 : vector<8x8xi1>, vector<8x8xf32>
    %cst_39 = arith.constant dense<0xFF800000> : vector<8xf32>
    %76 = vector.multi_reduction <maximumf>, %75, %cst_39 [1] : vector<8x8xf32> to vector<8xf32>
    %77 = vector.shape_cast %76 : vector<8xf32> to vector<8x1xf32>
    %78 = vector.broadcast %77 : vector<8x1xf32> to vector<8x8xf32>
    %79 = arith.subf %75, %78 : vector<8x8xf32>
    %80 = math.exp %79 : vector<8x8xf32>
    %cst_40 = arith.constant dense<0.000000e+00> : vector<8xf32>
    %81 = vector.multi_reduction <add>, %80, %cst_40 [1] : vector<8x8xf32> to vector<8xf32>
    %82 = vector.shape_cast %81 : vector<8xf32> to vector<8x1xf32>
    %83 = tpu.reciprocal %82 {approx = true} : vector<8x1xf32> -> vector<8x1xf32>
    %84 = vector.broadcast %83 : vector<8x1xf32> to vector<8x8xf32>
    %85 = arith.mulf %80, %84 : vector<8x8xf32>
    %86 = arith.truncf %85 : vector<8x8xf32> to vector<8x8xbf16>
    %cst_41 = arith.constant dense<0.000000e+00> : vector<8x8xf32>
    %87 = tpu.matmul %86, %72, %cst_41 {dimension_numbers = #tpu.dot_dimension_numbers<[1], [0], [0], [1], [0, 0, 1, 1], [], []>} : vector<8x8xbf16>, vector<8x8xbf16>, vector<8x8xf32> -> vector<8x8xf32>
    %c0_42 = arith.constant 0 : index
    %c16 = arith.constant 16 : index
    %88 = vector.load %arg16[%c0_42, %c16] : memref<8x32xf32, #tpu.memory_space<vmem>>, vector<8x8xf32>
    tpu.vector_store %arg16[%c0_42, %c16], %87 {strides = array<i32>} : memref<8x32xf32, #tpu.memory_space<vmem>>, vector<8x8xf32>,
    %89 = vector.extract_strided_slice %25 {offsets = [0, 24], sizes = [8, 8], strides = [1, 1]} : vector<8x32xbf16> to vector<8x8xbf16>
    %90 = vector.extract_strided_slice %26 {offsets = [0, 24], sizes = [8, 8], strides = [1, 1]} : vector<8x32xbf16> to vector<8x8xbf16>
    %91 = vector.extract_strided_slice %27 {offsets = [0, 24], sizes = [8, 8], strides = [1, 1]} : vector<8x32xbf16> to vector<8x8xbf16>
    %cst_43 = arith.constant dense<0.000000e+00> : vector<8x8xf32>
    %92 = tpu.matmul %89, %90, %cst_43 {dimension_numbers = #tpu.dot_dimension_numbers<[1], [1], [0], [0], [0, 0, 1, 0], [], []>} : vector<8x8xbf16>, vector<8x8xbf16>, vector<8x8xf32> -> vector<8x8xf32>
    %cst_44 = arith.constant -1.000000e+10 : f32
    %93 = vector.broadcast %cst_44 : f32 to vector<8x8xf32>
    %94 = arith.select %31, %93, %92 : vector<8x8xi1>, vector<8x8xf32>
    %cst_45 = arith.constant dense<0xFF800000> : vector<8xf32>
    %95 = vector.multi_reduction <maximumf>, %94, %cst_45 [1] : vector<8x8xf32> to vector<8xf32>
    %96 = vector.shape_cast %95 : vector<8xf32> to vector<8x1xf32>
    %97 = vector.broadcast %96 : vector<8x1xf32> to vector<8x8xf32>
    %98 = arith.subf %94, %97 : vector<8x8xf32>
    %99 = math.exp %98 : vector<8x8xf32>
    %cst_46 = arith.constant dense<0.000000e+00> : vector<8xf32>
    %100 = vector.multi_reduction <add>, %99, %cst_46 [1] : vector<8x8xf32> to vector<8xf32>
    %101 = vector.shape_cast %100 : vector<8xf32> to vector<8x1xf32>
    %102 = tpu.reciprocal %101 {approx = true} : vector<8x1xf32> -> vector<8x1xf32>
    %103 = vector.broadcast %102 : vector<8x1xf32> to vector<8x8xf32>
    %104 = arith.mulf %99, %103 : vector<8x8xf32>
    %105 = arith.truncf %104 : vector<8x8xf32> to vector<8x8xbf16>
    %cst_47 = arith.constant dense<0.000000e+00> : vector<8x8xf32>
    %106 = tpu.matmul %105, %91, %cst_47 {dimension_numbers = #tpu.dot_dimension_numbers<[1], [0], [0], [1], [0, 0, 1, 1], [], []>} : vector<8x8xbf16>, vector<8x8xbf16>, vector<8x8xf32> -> vector<8x8xf32>
    %c0_48 = arith.constant 0 : index
    %c24 = arith.constant 24 : index
    %107 = vector.load %arg16[%c0_48, %c24] : memref<8x32xf32, #tpu.memory_space<vmem>>, vector<8x8xf32>
    tpu.vector_store %arg16[%c0_48, %c24], %106 {strides = array<i32>} : memref<8x32xf32, #tpu.memory_space<vmem>>, vector<8x8xf32>,
    %c0_49 = arith.constant 0 : index
    %c0_50 = arith.constant 0 : index
    %108 = vector.load %arg16[%c0_49, %c0_50] : memref<8x32xf32, #tpu.memory_space<vmem>>, vector<8x32xf32>
    %109 = arith.truncf %108 : vector<8x32xf32> to vector<8x32xbf16>
    %c0_51 = arith.constant 0 : index
    %c0_52 = arith.constant 0 : index
    %110 = vector.load %arg11[%c0_51, %c0_52] : memref<32x32xbf16, #tpu.memory_space<vmem>>, vector<32x32xbf16>
    %cst_53 = arith.constant dense<0.000000e+00> : vector<8x32xf32>
    %111 = tpu.matmul %109, %110, %cst_53 {dimension_numbers = #tpu.dot_dimension_numbers<[1], [0], [0], [1], [0, 0, 1, 1], [], []>} : vector<8x32xbf16>, vector<32x32xbf16>, vector<8x32xf32> -> vector<8x32xf32>
    %c0_54 = arith.constant 0 : index
    %c0_55 = arith.constant 0 : index
    %112 = vector.load %arg12[%c0_54, %c0_55] : memref<1x32xf32, #tpu.memory_space<vmem>>, vector<1x32xf32>
    %113 = vector.broadcast %112 : vector<1x32xf32> to vector<8x32xf32>
    %114 = arith.addf %111, %113 : vector<8x32xf32>
    %115 = arith.addf %1, %114 : vector<8x32xf32>
    %cst_56 = arith.constant dense<0.000000e+00> : vector<8xf32>
    %116 = vector.multi_reduction <add>, %115, %cst_56 [1] : vector<8x32xf32> to vector<8xf32>
    %117 = vector.shape_cast %116 : vector<8xf32> to vector<8x1xf32>
    %cst_57 = arith.constant 3.200000e+01 : f32
    %118 = vector.broadcast %cst_57 : f32 to vector<8x1xf32>
    %119 = arith.divf %117, %118 : vector<8x1xf32>
    %120 = vector.broadcast %119 : vector<8x1xf32> to vector<8x32xf32>
    %121 = arith.subf %115, %120 : vector<8x32xf32>
    %122 = arith.mulf %121, %121 : vector<8x32xf32>
    %cst_58 = arith.constant dense<0.000000e+00> : vector<8xf32>
    %123 = vector.multi_reduction <add>, %122, %cst_58 [1] : vector<8x32xf32> to vector<8xf32>
    %124 = vector.shape_cast %123 : vector<8xf32> to vector<8x1xf32>
    %cst_59 = arith.constant 3.200000e+01 : f32
    %125 = vector.broadcast %cst_59 : f32 to vector<8x1xf32>
    %126 = arith.divf %124, %125 : vector<8x1xf32>
    %127 = vector.broadcast %119 : vector<8x1xf32> to vector<8x32xf32>
    %128 = arith.subf %115, %127 : vector<8x32xf32>
    %cst_60 = arith.constant 9.99999974E-6 : f32
    %129 = vector.broadcast %cst_60 : f32 to vector<8x1xf32>
    %130 = arith.addf %126, %129 : vector<8x1xf32>
    %131 = math.rsqrt %130 : vector<8x1xf32>
    %132 = vector.broadcast %131 : vector<8x1xf32> to vector<8x32xf32>
    %133 = arith.mulf %128, %132 : vector<8x32xf32>
    %c0_61 = arith.constant 0 : index
    %c0_62 = arith.constant 0 : index
    %134 = vector.load %arg13[%c0_61, %c0_62] : memref<1x32xf32, #tpu.memory_space<vmem>>, vector<1x32xf32>
    %135 = vector.broadcast %134 : vector<1x32xf32> to vector<8x32xf32>
    %136 = arith.mulf %133, %135 : vector<8x32xf32>
    %c0_63 = arith.constant 0 : index
    %c0_64 = arith.constant 0 : index
    %137 = vector.load %arg14[%c0_63, %c0_64] : memref<1x32xf32, #tpu.memory_space<vmem>>, vector<1x32xf32>
    %138 = vector.broadcast %137 : vector<1x32xf32> to vector<8x32xf32>
    %139 = arith.addf %136, %138 : vector<8x32xf32>
    %c0_65 = arith.constant 0 : index
    %c0_66 = arith.constant 0 : index
    %c0_67 = arith.constant 0 : index
    %140 = vector.load %arg15[%c0_65, %c0_66, %c0_67] : memref<1x8x32xf32, #tpu.memory_space<vmem>>, vector<1x8x32xf32>
    %141 = vector.shape_cast %140 : vector<1x8x32xf32> to vector<8x32xf32>
    %142 = vector.shape_cast %139 : vector<8x32xf32> to vector<1x8x32xf32>
    tpu.vector_store %arg15[%c0_65, %c0_66, %c0_67], %142 {strides = array<i32>} : memref<1x8x32xf32, #tpu.memory_space<vmem>>, vector<1x8x32xf32>,
    return
  }
  func.func @transform_0(%arg0: i32, %arg1: i32) -> (i32, i32, i32) {
    %c0_i32 = arith.constant 0 : i32
    %c0_i32_0 = arith.constant 0 : i32
    return %arg0, %arg1, %c0_i32 : i32, i32, i32
  }
  func.func @transform_1(%arg0: i32, %arg1: i32) -> (i32, i32, i32) {
    %c0_i32 = arith.constant 0 : i32
    %c0_i32_0 = arith.constant 0 : i32
    %c0_i32_1 = arith.constant 0 : i32
    return %arg0, %c0_i32, %c0_i32_0 : i32, i32, i32
  }
  func.func @transform_2(%arg0: i32, %arg1: i32) -> (i32, i32, i32) {
    %c0_i32 = arith.constant 0 : i32
    %c0_i32_0 = arith.constant 0 : i32
    %c0_i32_1 = arith.constant 0 : i32
    return %arg0, %c0_i32, %c0_i32_0 : i32, i32, i32
  }
  func.func @transform_3(%arg0: i32, %arg1: i32) -> (i32, i32) {
    %c0_i32 = arith.constant 0 : i32
    %c0_i32_0 = arith.constant 0 : i32
    %c0_i32_1 = arith.constant 0 : i32
    return %c0_i32, %c0_i32_0 : i32, i32
  }
  func.func @transform_4(%arg0: i32, %arg1: i32) -> (i32, i32) {
    %c0_i32 = arith.constant 0 : i32
    %c0_i32_0 = arith.constant 0 : i32
    %c0_i32_1 = arith.constant 0 : i32
    return %c0_i32, %c0_i32_0 : i32, i32
  }
  func.func @transform_5(%arg0: i32, %arg1: i32) -> (i32, i32) {
    %c0_i32 = arith.constant 0 : i32
    %c0_i32_0 = arith.constant 0 : i32
    %c0_i32_1 = arith.constant 0 : i32
    return %c0_i32, %c0_i32_0 : i32, i32
  }
  func.func @transform_6(%arg0: i32, %arg1: i32) -> (i32, i32) {
    %c0_i32 = arith.constant 0 : i32
    %c0_i32_0 = arith.constant 0 : i32
    %c0_i32_1 = arith.constant 0 : i32
    return %c0_i32, %c0_i32_0 : i32, i32
  }
  func.func @transform_7(%arg0: i32, %arg1: i32) -> (i32, i32) {
    %c0_i32 = arith.constant 0 : i32
    %c0_i32_0 = arith.constant 0 : i32
    %c0_i32_1 = arith.constant 0 : i32
    return %c0_i32, %c0_i32_0 : i32, i32
  }
  func.func @transform_8(%arg0: i32, %arg1: i32) -> (i32, i32) {
    %c0_i32 = arith.constant 0 : i32
    %c0_i32_0 = arith.constant 0 : i32
    %c0_i32_1 = arith.constant 0 : i32
    return %c0_i32, %c0_i32_0 : i32, i32
  }
  func.func @transform_9(%arg0: i32, %arg1: i32) -> (i32, i32) {
    %c0_i32 = arith.constant 0 : i32
    %c0_i32_0 = arith.constant 0 : i32
    %c0_i32_1 = arith.constant 0 : i32
    return %c0_i32, %c0_i32_0 : i32, i32
  }
  func.func @transform_10(%arg0: i32, %arg1: i32) -> (i32, i32) {
    %c0_i32 = arith.constant 0 : i32
    %c0_i32_0 = arith.constant 0 : i32
    %c0_i32_1 = arith.constant 0 : i32
    return %c0_i32, %c0_i32_0 : i32, i32
  }
  func.func @transform_11(%arg0: i32, %arg1: i32) -> (i32, i32) {
    %c0_i32 = arith.constant 0 : i32
    %c0_i32_0 = arith.constant 0 : i32
    %c0_i32_1 = arith.constant 0 : i32
    return %c0_i32, %c0_i32_0 : i32, i32
  }
  func.func @transform_12(%arg0: i32, %arg1: i32) -> (i32, i32) {
    %c0_i32 = arith.constant 0 : i32
    %c0_i32_0 = arith.constant 0 : i32
    %c0_i32_1 = arith.constant 0 : i32
    return %c0_i32, %c0_i32_0 : i32, i32
  }
  func.func @transform_13(%arg0: i32, %arg1: i32) -> (i32, i32, i32) {
    %c0_i32 = arith.constant 0 : i32
    %c0_i32_0 = arith.constant 0 : i32
    return %arg0, %arg1, %c0_i32 : i32, i32, i32
  }
}

module attributes {stable_mosaic.version = 11 : i64} {
  func.func @_ffn_ln_kernel(%arg0: i32, %arg1: memref<16x32xf32, #tpu.memory_space<vmem>>, %arg2: memref<32x64xbf16, #tpu.memory_space<vmem>>, %arg3: memref<1x64xf32, #tpu.memory_space<vmem>>, %arg4: memref<64x32xbf16, #tpu.memory_space<vmem>>, %arg5: memref<1x32xf32, #tpu.memory_space<vmem>>, %arg6: memref<1x32xf32, #tpu.memory_space<vmem>>, %arg7: memref<1x32xf32, #tpu.memory_space<vmem>>, %arg8: memref<16x32xf32, #tpu.memory_space<vmem>>) attributes {dimension_semantics = [#tpu.dimension_semantics<parallel>], iteration_bounds = array<i64: 1>, scalar_prefetch = 0 : i64, scratch_operands = 0 : i64, tpu.core_type = #tpu.core_type<tc>, window_params = [{transform_indices = @transform_0, window_bounds = array<i64: 16, 32>}, {pipeline_mode = #tpu.pipeline_mode<synchronous>, transform_indices = @transform_1, window_bounds = array<i64: 32, 64>}, {pipeline_mode = #tpu.pipeline_mode<synchronous>, transform_indices = @transform_2, window_bounds = array<i64: 1, 64>}, {pipeline_mode = #tpu.pipeline_mode<synchronous>, transform_indices = @transform_3, window_bounds = array<i64: 64, 32>}, {pipeline_mode = #tpu.pipeline_mode<synchronous>, transform_indices = @transform_4, window_bounds = array<i64: 1, 32>}, {pipeline_mode = #tpu.pipeline_mode<synchronous>, transform_indices = @transform_5, window_bounds = array<i64: 1, 32>}, {pipeline_mode = #tpu.pipeline_mode<synchronous>, transform_indices = @transform_6, window_bounds = array<i64: 1, 32>}, {transform_indices = @transform_7, window_bounds = array<i64: 16, 32>}]} {
    %c0 = arith.constant 0 : index
    %c0_0 = arith.constant 0 : index
    %0 = vector.load %arg1[%c0, %c0_0] : memref<16x32xf32, #tpu.memory_space<vmem>>, vector<16x32xf32>
    %1 = arith.truncf %0 : vector<16x32xf32> to vector<16x32xbf16>
    %c0_1 = arith.constant 0 : index
    %c0_2 = arith.constant 0 : index
    %2 = vector.load %arg2[%c0_1, %c0_2] : memref<32x64xbf16, #tpu.memory_space<vmem>>, vector<32x64xbf16>
    %cst = arith.constant dense<0.000000e+00> : vector<16x64xf32>
    %3 = tpu.matmul %1, %2, %cst {dimension_numbers = #tpu.dot_dimension_numbers<[1], [0], [0], [1], [0, 0, 1, 1], [], []>} : vector<16x32xbf16>, vector<32x64xbf16>, vector<16x64xf32> -> vector<16x64xf32>
    %c0_3 = arith.constant 0 : index
    %c0_4 = arith.constant 0 : index
    %4 = vector.load %arg3[%c0_3, %c0_4] : memref<1x64xf32, #tpu.memory_space<vmem>>, vector<1x64xf32>
    %5 = vector.broadcast %4 : vector<1x64xf32> to vector<16x64xf32>
    %6 = arith.addf %3, %5 : vector<16x64xf32>
    %cst_5 = arith.constant 0.000000e+00 : f32
    %7 = vector.broadcast %cst_5 : f32 to vector<16x64xf32>
    %8 = arith.maximumf %6, %7 : vector<16x64xf32>
    %9 = arith.truncf %8 : vector<16x64xf32> to vector<16x64xbf16>
    %c0_6 = arith.constant 0 : index
    %c0_7 = arith.constant 0 : index
    %10 = vector.load %arg4[%c0_6, %c0_7] : memref<64x32xbf16, #tpu.memory_space<vmem>>, vector<64x32xbf16>
    %cst_8 = arith.constant dense<0.000000e+00> : vector<16x32xf32>
    %11 = tpu.matmul %9, %10, %cst_8 {dimension_numbers = #tpu.dot_dimension_numbers<[1], [0], [0], [1], [0, 0, 1, 1], [], []>} : vector<16x64xbf16>, vector<64x32xbf16>, vector<16x32xf32> -> vector<16x32xf32>
    %c0_9 = arith.constant 0 : index
    %c0_10 = arith.constant 0 : index
    %12 = vector.load %arg5[%c0_9, %c0_10] : memref<1x32xf32, #tpu.memory_space<vmem>>, vector<1x32xf32>
    %13 = vector.broadcast %12 : vector<1x32xf32> to vector<16x32xf32>
    %14 = arith.addf %11, %13 : vector<16x32xf32>
    %15 = arith.addf %0, %14 : vector<16x32xf32>
    %cst_11 = arith.constant dense<0.000000e+00> : vector<16xf32>
    %16 = vector.multi_reduction <add>, %15, %cst_11 [1] : vector<16x32xf32> to vector<16xf32>
    %17 = vector.shape_cast %16 : vector<16xf32> to vector<16x1xf32>
    %cst_12 = arith.constant 3.200000e+01 : f32
    %18 = vector.broadcast %cst_12 : f32 to vector<16x1xf32>
    %19 = arith.divf %17, %18 : vector<16x1xf32>
    %20 = vector.broadcast %19 : vector<16x1xf32> to vector<16x32xf32>
    %21 = arith.subf %15, %20 : vector<16x32xf32>
    %22 = arith.mulf %21, %21 : vector<16x32xf32>
    %cst_13 = arith.constant dense<0.000000e+00> : vector<16xf32>
    %23 = vector.multi_reduction <add>, %22, %cst_13 [1] : vector<16x32xf32> to vector<16xf32>
    %24 = vector.shape_cast %23 : vector<16xf32> to vector<16x1xf32>
    %cst_14 = arith.constant 3.200000e+01 : f32
    %25 = vector.broadcast %cst_14 : f32 to vector<16x1xf32>
    %26 = arith.divf %24, %25 : vector<16x1xf32>
    %27 = vector.broadcast %19 : vector<16x1xf32> to vector<16x32xf32>
    %28 = arith.subf %15, %27 : vector<16x32xf32>
    %cst_15 = arith.constant 9.99999974E-6 : f32
    %29 = vector.broadcast %cst_15 : f32 to vector<16x1xf32>
    %30 = arith.addf %26, %29 : vector<16x1xf32>
    %31 = math.rsqrt %30 : vector<16x1xf32>
    %32 = vector.broadcast %31 : vector<16x1xf32> to vector<16x32xf32>
    %33 = arith.mulf %28, %32 : vector<16x32xf32>
    %c0_16 = arith.constant 0 : index
    %c0_17 = arith.constant 0 : index
    %34 = vector.load %arg6[%c0_16, %c0_17] : memref<1x32xf32, #tpu.memory_space<vmem>>, vector<1x32xf32>
    %35 = vector.broadcast %34 : vector<1x32xf32> to vector<16x32xf32>
    %36 = arith.mulf %33, %35 : vector<16x32xf32>
    %c0_18 = arith.constant 0 : index
    %c0_19 = arith.constant 0 : index
    %37 = vector.load %arg7[%c0_18, %c0_19] : memref<1x32xf32, #tpu.memory_space<vmem>>, vector<1x32xf32>
    %38 = vector.broadcast %37 : vector<1x32xf32> to vector<16x32xf32>
    %39 = arith.addf %36, %38 : vector<16x32xf32>
    %c0_20 = arith.constant 0 : index
    %c0_21 = arith.constant 0 : index
    %40 = vector.load %arg8[%c0_20, %c0_21] : memref<16x32xf32, #tpu.memory_space<vmem>>, vector<16x32xf32>
    tpu.vector_store %arg8[%c0_20, %c0_21], %39 {strides = array<i32>} : memref<16x32xf32, #tpu.memory_space<vmem>>, vector<16x32xf32>,
    return
  }
  func.func @transform_0(%arg0: i32) -> (i32, i32) {
    %c0_i32 = arith.constant 0 : i32
    %c0_i32_0 = arith.constant 0 : i32
    return %arg0, %c0_i32 : i32, i32
  }
  func.func @transform_1(%arg0: i32) -> (i32, i32) {
    %c0_i32 = arith.constant 0 : i32
    %c0_i32_0 = arith.constant 0 : i32
    %c0_i32_1 = arith.constant 0 : i32
    return %c0_i32, %c0_i32_0 : i32, i32
  }
  func.func @transform_2(%arg0: i32) -> (i32, i32) {
    %c0_i32 = arith.constant 0 : i32
    %c0_i32_0 = arith.constant 0 : i32
    %c0_i32_1 = arith.constant 0 : i32
    return %c0_i32, %c0_i32_0 : i32, i32
  }
  func.func @transform_3(%arg0: i32) -> (i32, i32) {
    %c0_i32 = arith.constant 0 : i32
    %c0_i32_0 = arith.constant 0 : i32
    %c0_i32_1 = arith.constant 0 : i32
    return %c0_i32, %c0_i32_0 : i32, i32
  }
  func.func @transform_4(%arg0: i32) -> (i32, i32) {
    %c0_i32 = arith.constant 0 : i32
    %c0_i32_0 = arith.constant 0 : i32
    %c0_i32_1 = arith.constant 0 : i32
    return %c0_i32, %c0_i32_0 : i32, i32
  }
  func.func @transform_5(%arg0: i32) -> (i32, i32) {
    %c0_i32 = arith.constant 0 : i32
    %c0_i32_0 = arith.constant 0 : i32
    %c0_i32_1 = arith.constant 0 : i32
    return %c0_i32, %c0_i32_0 : i32, i32
  }
  func.func @transform_6(%arg0: i32) -> (i32, i32) {
    %c0_i32 = arith.constant 0 : i32
    %c0_i32_0 = arith.constant 0 : i32
    %c0_i32_1 = arith.constant 0 : i32
    return %c0_i32, %c0_i32_0 : i32, i32
  }
  func.func @transform_7(%arg0: i32) -> (i32, i32) {
    %c0_i32 = arith.constant 0 : i32
    %c0_i32_0 = arith.constant 0 : i32
    return %arg0, %c0_i32 : i32, i32
  }
}

</mosaic_0001>

<llo_original>
// kernel: decoder_layer_forward.5
$region0: #{decoder_layer_forward.5}
  #allocation0 [shape = 'u32[]', space=smem, size = 0x4, offset = 0x4, fixed_abs, tag = 'smem constant byte address 0x4 - core index']
  #allocation1 [shape = 'u32[72,128]{1,0:T(1,128)}', space=vmem, size = 0x9000, scoped, tag = 'internal scratch']
  %s0 = inlined_call_operand.vmem [shape: f32[16,32], index: 0, kind: input, shape index: {}]
  %s1 = inlined_call_operand.vmem [shape: bf16[32,64], index: 1, kind: input, shape index: {}]
  %s2 = inlined_call_operand.vmem [shape: f32[1,64], index: 2, kind: input, shape index: {}]
  %s3 = inlined_call_operand.vmem [shape: bf16[64,32], index: 3, kind: input, shape index: {}]
  %s4 = inlined_call_operand.vmem [shape: f32[1,32], index: 4, kind: input, shape index: {}]
  %s5 = inlined_call_operand.vmem [shape: f32[1,32], index: 5, kind: input, shape index: {}]
  %s6 = inlined_call_operand.vmem [shape: f32[1,32], index: 6, kind: input, shape index: {}]
  %s7 = inlined_call_operand.hbm [shape: f32[16,32], index: 7, kind: output, shape index: {}]
  %s8 = sld [smem:[#allocation0]]
  $region38: #{decoder_layer_forward.5} parent=0
    _
  %s10 = ssub.s32 1, %s8
  %s11 = scalar_select 0, %s10, %s8
  $region1: #{decoder_layer_forward.5} parent=0
    #allocation2 [shape = 'u8[8192]{0}', space=vmem, size = 0x2000, scoped, tag = 'output window, operand 0, single buffered']
    #allocation3 [shape = 's32[1]{0}', space=sflag, size = 0x4, scoped, tag = 'scoped memory for decoder_layer_forward.5']
    %12 = vsyncpa [#allocation3], 0
    // Predicated region
    $region2: #{decoder_layer_forward.5} parent=1 // pred_check
      _
    $region3: #{decoder_layer_forward.5} parent=1 // pred_check_branch
      %14 = sbr.rel (0) target = $region5
    $region4: #{decoder_layer_forward.5} parent=1 // pred_region
      _
    $region5: #{decoder_layer_forward.5} parent=1 // pred_fallthru
      _
    // Predicated region
    $region6: #{decoder_layer_forward.5} parent=1 // pred_check
      _
    $region7: #{decoder_layer_forward.5} parent=1 // pred_check_branch
      %16 = sbr.rel (0) target = $region9
    $region8: #{decoder_layer_forward.5} parent=1 // pred_region
      _
    $region9: #{decoder_layer_forward.5} parent=1 // pred_fallthru
      _
    // Predicated region
    $region10: #{decoder_layer_forward.5} parent=1 // pred_check
      _
    $region11: #{decoder_layer_forward.5} parent=1 // pred_check_branch
      %18 = sbr.rel (0) target = $region13
    $region12: #{decoder_layer_forward.5} parent=1 // pred_region
      _
    $region13: #{decoder_layer_forward.5} parent=1 // pred_fallthru
      _
    // Predicated region
    $region14: #{decoder_layer_forward.5} parent=1 // pred_check
      _
    $region15: #{decoder_layer_forward.5} parent=1 // pred_check_branch
      %20 = sbr.rel (0) target = $region17
    $region16: #{decoder_layer_forward.5} parent=1 // pred_region
      _
    $region17: #{decoder_layer_forward.5} parent=1 // pred_fallthru
      _
    // Predicated region
    $region18: #{decoder_layer_forward.5} parent=1 // pred_check
      _
    $region19: #{decoder_layer_forward.5} parent=1 // pred_check_branch
      %22 = sbr.rel (0) target = $region21
    $region20: #{decoder_layer_forward.5} parent=1 // pred_region
      _
    $region21: #{decoder_layer_forward.5} parent=1 // pred_fallthru
      _
    // Predicated region
    $region22: #{decoder_layer_forward.5} parent=1 // pred_check
      _
    $region23: #{decoder_layer_forward.5} parent=1 // pred_check_branch
      %24 = sbr.rel (0) target = $region25
    $region24: #{decoder_layer_forward.5} parent=1 // pred_region
      _
    $region25: #{decoder_layer_forward.5} parent=1 // pred_fallthru
      _
    // Predicated region
    $region26: #{decoder_layer_forward.5} parent=1 // pred_check
      _
    $region27: #{decoder_layer_forward.5} parent=1 // pred_check_branch
      %26 = sbr.rel (0) target = $region29
    $region28: #{decoder_layer_forward.5} parent=1 // pred_region
      _
    $region29: #{decoder_layer_forward.5} parent=1 // pred_fallthru
      _
    %v28 = vld [vmem:[%s0] sm:$0xff]
    %v29 = vld [vmem:[%s0 + $0x8] sm:$0xff]
    %v30 = vpack.c.bf16 %v29, %v28
    %v31 = vld [vmem:[%s1] sm:$0xf]
    %v32 = vld [vmem:[%s1 + $0x4] sm:$0xf]
    %v33 = vld [vmem:[%s1 + $0x8] sm:$0xf]
    %v34 = vld [vmem:[%s1 + $0xc] sm:$0xf]
    %v35 = vld [vmem:[%s2] sm:$0x1]
    %v37 = vperm.slane %v35, 0
    %v43 = vunpack.c.l.b16 %v31
    %v44 = vunpack.c.l.b16 %v32
    %v45 = vunpack.c.l.b16 %v33
    %v46 = vunpack.c.l.b16 %v34
    %v47 = vpack.c.b16 %v44, %v43
    %v48 = vpack.c.b16 %v46, %v45
    %vm51 = vcmask 261120
    %v53 = vsel %vm51, %v30, 0
    %55 = vmatpush.bf16.msra.mxu0 0
    %56 = vmatpush.bf16.msra.mxu0 0
    %57 = vmatpush.bf16.msra.mxu0 0
    %58 = vmatpush.bf16.msra.mxu0 0
    %59 = vmatpush.bf16.msra.mxu0 0
    %60 = vmatpush.bf16.msra.mxu0 0
    %61 = vmatpush.bf16.msra.mxu0 %v48
    %62 = vmatpush.bf16.msra.mxu0 %v47
    %63 = vmatmul.bf16.gmra.mxu0 %v53
    %v64 = vpop.f32.mrf.mxu0
    %v65 = vadd.f32 %v37, %v64
    %v66 = vpop.f32.mrf.mxu0
    %v67 = vadd.f32 %v37, %v66
    %68 = vdwg.mxu0
    %v69 = vmax.f32 %v65, 0.0
    %v70 = vmax.f32 %v67, 0.0
    %v71 = vpack.c.bf16 %v70, %v69
    %v72 = vld [vmem:[%s3] sm:$0xf]
    %v73 = vld [vmem:[%s3 + $0x4] sm:$0xf]
    %v74 = vld [vmem:[%s3 + $0x8] sm:$0xf]
    %v75 = vld [vmem:[%s3 + $0xc] sm:$0xf]
    %v76 = vld [vmem:[%s3 + $0x10] sm:$0xf]
    %v77 = vld [vmem:[%s3 + $0x14] sm:$0xf]
    %v78 = vld [vmem:[%s3 + $0x18] sm:$0xf]
    %v79 = vld [vmem:[%s3 + $0x1c] sm:$0xf]
    %v80 = vld [vmem:[%s4] sm:$0x1]
    %v82 = vperm.slane %v80, 0
    %v92 = vunpack.c.l.b16 %v72
    %v93 = vunpack.c.l.b16 %v73
    %v94 = vunpack.c.l.b16 %v74
    %v95 = vunpack.c.l.b16 %v75
    %v96 = vunpack.c.l.b16 %v76
    %v97 = vunpack.c.l.b16 %v77
    %v98 = vunpack.c.l.b16 %v78
    %v99 = vunpack.c.l.b16 %v79
    %v100 = vpack.c.b16 %v93, %v92
    %v101 = vpack.c.b16 %v95, %v94
    %v102 = vpack.c.b16 %v97, %v96
    %v103 = vpack.c.b16 %v99, %v98
    %vm108 = vcmask 523264
    %v110 = vsel %vm108, %v71, 0
    %112 = vmatpush.bf16.msra.mxu0 0
    %113 = vmatpush.bf16.msra.mxu0 0
    %114 = vmatpush.bf16.msra.mxu0 0
    %115 = vmatpush.bf16.msra.mxu0 0
    %116 = vmatpush.bf16.msra.mxu0 %v103
    %117 = vmatpush.bf16.msra.mxu0 %v102
    %118 = vmatpush.bf16.msra.mxu0 %v101
    %119 = vmatpush.bf16.msra.mxu0 %v100
    %120 = vmatmul.bf16.gmra.mxu0 %v110
    %v121 = vpop.f32.mrf.mxu0
    %v122 = vadd.f32 %v82, %v121
    %v123 = vpop.f32.mrf.mxu0
    %v124 = vadd.f32 %v82, %v123
    %125 = vdwg.mxu0
    %v126 = vadd.f32 %v28, %v122
    %v127 = vadd.f32 %v29, %v124
    %v128 = vsel %vm51, %v126, 0.0
    %129 = vadd.xlane.f32.xlu0 %v128
    %v130 = vpop.xlane.xlu0 %129
    %v131 = vsel %vm51, %v127, 0.0
    %132 = vadd.xlane.f32.xlu0 %v131
    %v133 = vpop.xlane.xlu0 %132
    %v134 = vrcp.pop 32.0
    %v135 = vmul.f32 32.0, %v134
    %v136 = vsub.f32 1.0, %v135
    %v137 = vmul.f32 %v134, %v136
    %v138 = vadd.f32 %v134, %v137
    %vm139 = vweird.f32 %v134
    %v140 = vsel %vm139, %v134, %v138
    %v141 = vmul.f32 %v130, %v140
    %v142 = vmul.f32 %v133, %v140
    %v143 = vsub.f32 %v126, %v141
    %v144 = vsub.f32 %v127, %v142
    %v145 = vmul.f32 %v143, %v143
    %v146 = vmul.f32 %v144, %v144
    %v147 = vsel %vm51, %v145, 0.0
    %148 = vadd.xlane.f32.xlu0 %v147
    %v149 = vpop.xlane.xlu0 %148
    %v150 = vsel %vm51, %v146, 0.0
    %151 = vadd.xlane.f32.xlu0 %v150
    %v152 = vpop.xlane.xlu0 %151
    %v153 = vmul.f32 %v149, %v140
    %v154 = vmul.f32 %v152, %v140
    %v155 = vadd.f32 %v153, 1e-05
    %v156 = vadd.f32 %v154, 1e-05
    %v157 = vrsqrt.pop %v155
    %v158 = vmul.f32 %v157, %v155
    %v159 = vmul.f32 %v158, %v157
    %v160 = vmul.f32 0.5, %v159
    %v161 = vsub.f32 1.5, %v160
    %v162 = vmul.f32 %v157, %v161
    %vm163 = vweird.f32 %v155
    %vm164 = vweird.f32 %v157
    %vm165 = vmor %vm163, %vm164
    %v166 = vsel %vm165, %v157, %v162
    %v167 = vrsqrt.pop %v156
    %v168 = vmul.f32 %v167, %v156
    %v169 = vmul.f32 %v168, %v167
    %v170 = vmul.f32 0.5, %v169
    %v171 = vsub.f32 1.5, %v170
    %v172 = vmul.f32 %v167, %v171
    %vm173 = vweird.f32 %v156
    %vm174 = vweird.f32 %v167
    %vm175 = vmor %vm173, %vm174
    %v176 = vsel %vm175, %v167, %v172
    %v177 = vmul.f32 %v143, %v166
    %v178 = vmul.f32 %v144, %v176
    %v179 = vld [vmem:[%s5] sm:$0x1]
    %v181 = vperm.slane %v179, 0
    %v183 = vmul.f32 %v177, %v181
    %v184 = vmul.f32 %v178, %v181
    %v185 = vld [vmem:[%s6] sm:$0x1]
    %v187 = vperm.slane %v185, 0
    %v189 = vadd.f32 %v183, %v187
    %v190 = vadd.f32 %v184, %v187
    %191 = vst.msk [vmem:[#allocation2] sm:$0xff] %vm51, %v189
    %192 = vst.msk [vmem:[#allocation2 + $0x8] sm:$0xff] %vm51, %v190
    // Predicated region
    $region30: #{decoder_layer_forward.5} parent=1 // pred_check
      _
    $region31: #{decoder_layer_forward.5} parent=1 // pred_check_branch
      %194 = sbr.rel (0) target = $region33
    $region32: #{decoder_layer_forward.5} parent=1 // pred_region
      %196 = vsyncadd [#allocation3], 0
      %s197 = sshll.u32 [#allocation2], 4
      %s198 = int_to_ptr.vmem [resolvable:$true] %s197
      %s199 = sshll.u32 %s7, 4
      %s200 = int_to_ptr.hbm [resolvable:$true] %s199
      %205 = dma.vmem_to_hbm [thread:$0]  %s198, 256, %s200, [#allocation3], 128, 128, 8
    $region33: #{decoder_layer_forward.5} parent=1 // pred_fallthru
      _
    // Predicated region
    $region34: #{decoder_layer_forward.5} parent=1 // pred_check
      _
    $region35: #{decoder_layer_forward.5} parent=1 // pred_check_branch
      %207 = sbr.rel (0) target = $region37
    $region36: #{decoder_layer_forward.5} parent=1 // pred_region
      %209 = dma.done [#allocation3], 256
    $region37: #{decoder_layer_forward.5} parent=1 // pred_fallthru
      _
    %210 = vsyncpa [#allocation3], 1

// kernel: decoder_layer_forward.3
$region0: #{decoder_layer_forward.3}
  #allocation0 [shape = 'u32[]', space=smem, size = 0x4, offset = 0x4, fixed_abs, tag = 'smem constant byte address 0x4 - core index']
  #allocation1 [shape = 'u32[72,128]{1,0:T(1,128)}', space=vmem, size = 0x9000, scoped, tag = 'internal scratch']
  #allocation2 [shape = 'f32[8,32]{1,0:T(8,128)}', space=vmem, size = 0x1000, scoped, tag = 'scratch operand']
  %s0 = inlined_call_operand.vmem [shape: f32[2,8,32], index: 0, kind: input, shape index: {}, may-alias: {0,1}]
  %s1 = inlined_call_operand.vmem [shape: f32[2,8,32], index: 1, kind: input, shape index: {}, may-alias: {0,1}]
  %s2 = inlined_call_operand.vmem [shape: f32[2,1,8], index: 2, kind: input, shape index: {}]
  %s3 = inlined_call_operand.hbm [shape: bf16[32,32], index: 3, kind: input, shape index: {}]
  %s4 = inlined_call_operand.vmem [shape: f32[1,32], index: 4, kind: input, shape index: {}]
  %s5 = inlined_call_operand.hbm [shape: bf16[32,32], index: 5, kind: input, shape index: {}]
  %s6 = inlined_call_operand.vmem [shape: f32[1,32], index: 6, kind: input, shape index: {}]
  %s7 = inlined_call_operand.hbm [shape: bf16[32,32], index: 7, kind: input, shape index: {}]
  %s8 = inlined_call_operand.vmem [shape: f32[1,32], index: 8, kind: input, shape index: {}]
  %s9 = inlined_call_operand.hbm [shape: bf16[32,32], index: 9, kind: input, shape index: {}]
  %s10 = inlined_call_operand.vmem [shape: f32[1,32], index: 10, kind: input, shape index: {}]
  %s11 = inlined_call_operand.vmem [shape: f32[1,32], index: 11, kind: input, shape index: {}]
  %s12 = inlined_call_operand.vmem [shape: f32[1,32], index: 12, kind: input, shape index: {}]
  %s13 = inlined_call_operand.vmem [shape: f32[2,8,32], index: 13, kind: output, shape index: {}]
  %s14 = sld [smem:[#allocation0]]
  $region101: #{decoder_layer_forward.3} parent=0
    _
  %s16 = ssub.s32 1, %s14
  %s17 = scalar_select 0, %s16, %s14
  $region1: #{decoder_layer_forward.3} parent=0
    #allocation3 [shape = 'u8[8192]{0}', space=vmem, size = 0x2000, scoped, tag = 'input window, operand 3, single buffered']
    #allocation4 [shape = 's32[2]{0}', space=sflag, size = 0x8, scoped, tag = 'scoped memory for decoder_layer_forward.3']
    #allocation5 [shape = 'u8[8192]{0}', space=vmem, size = 0x2000, scoped, tag = 'input window, operand 5, single buffered']
    #allocation6 [shape = 's32[1]{0}', space=sflag, size = 0x4, scoped, tag = 'scoped memory for decoder_layer_forward.3']
    #allocation7 [shape = 'u8[8192]{0}', space=vmem, size = 0x2000, scoped, tag = 'input window, operand 7, single buffered']
    #allocation8 [shape = 'u8[8192]{0}', space=vmem, size = 0x2000, scoped, tag = 'input window, operand 9, single buffered']
    #allocation9 [shape = 's32[1]{0}', space=sflag, size = 0x4, scoped, tag = 'scoped memory for decoder_layer_forward.3']
    %18 = vsyncpa [#allocation4], 0
    %19 = vsyncpa [#allocation6], 0
    %20 = vsyncpa [#allocation9], 0
    loop: start=0, step=1, limit=4
    $region2: #{decoder_layer_forward.3} parent=1 // loop_pre_header
      _
    $region3: #{decoder_layer_forward.3} parent=1 // loop_header
      %s22 = sphi 0, %s26
      %p23 = scmp.ge.s32.totalorder %s22, 4
      %s29 = sphi 0, %s41
      %s30 = sphi 0, %s37
      %s31 = sphi 0, %s29
      %s32 = sphi 0, %s30
      %s33 = sphi 0, %s31
      %s34 = sphi 0, %s32
      %s46 = sphi 0, %s48
      %s49 = sphi 0, %s46
      %s50 = sphi 0, %s49
      %s66 = sphi 0, %s50
      %s72 = sphi 0, %s74
      %s75 = sphi 0, %s72
      %s76 = sphi 0, %s75
      %s92 = sphi 0, %s76
      %s98 = sphi 0, %s100
      %s101 = sphi 0, %s98
      %s102 = sphi 0, %s101
      %s118 = sphi 0, %s102
      %s122 = sphi 0, %s122
      %s124 = sphi 0, %s122
      %s125 = sphi 0, %s124
      %s139 = sphi 0, %s125
      %s143 = sphi 0, %s143
      %s145 = sphi 0, %s143
      %s146 = sphi 0, %s145
      %s160 = sphi 0, %s146
      %s164 = sphi 0, %s164
      %s166 = sphi 0, %s164
      %s167 = sphi 0, %s166
      %s181 = sphi 0, %s167
      %s185 = sphi 0, %s185
      %s187 = sphi 0, %s185
      %s188 = sphi 0, %s187
      %s202 = sphi 0, %s188
      %s206 = sphi 0, %s206
      %s208 = sphi 0, %s206
      %s209 = sphi 0, %s208
      %s223 = sphi 0, %s209
      %s227 = sphi 0, %s227
      %s229 = sphi 0, %s227
      %s230 = sphi 0, %s229
      %s244 = sphi 0, %s230
      %s248 = sphi 0, %s248
      %s250 = sphi 0, %s248
      %s251 = sphi 0, %s250
      %s265 = sphi 0, %s251
      %s269 = sphi 0, %s269
      %s271 = sphi 0, %s269
      %s272 = sphi 0, %s271
      %s286 = sphi 0, %s272
      %s290 = sphi 0, %s290
      %s292 = sphi 0, %s290
      %s293 = sphi 0, %s292
      %s307 = sphi 0, %s293
      %s311 = sphi 0, %s311
      %s313 = sphi 0, %s311
      %s314 = sphi 0, %s313
      %s328 = sphi 0, %s314
      %s336 = sphi 0, %s338
      %s339 = sphi 0, %s336
      %s340 = sphi 0, %s339
      %s356 = sphi 0, %s340
    $region4: #{decoder_layer_forward.3} parent=1 // loop_header_branch
      %25 = sbr.rel (%p23) target = $region8
    $region5: #{decoder_layer_forward.3} parent=1 // loop_body
      %s27 = ssub.s32 %s22, 1
      %s28 = ssub.s32 %s22, 2
      %s35 = sadd.s32 1, %s30
      %p36 = scmp.ge.s32.totalorder %s35, 1
      %s37 = scalar_select %p36, 0, %s35
      %s38 = sadd.s32 1, %s29
      %s39 = scalar_select %p36, %s38, %s29
      %p40 = scmp.ge.s32.totalorder %s39, 2
      %s41 = scalar_select %p40, 0, %s39
      %s42 = ssub.s32 %s29, %s41
      %s43 = ssub.s32 %s30, %s37
      %s44 = sor.u32 %s42, %s43
      %p45 = scmp.eq.s32.totalorder %s44, 0
      %s47 = sadd.s32 %s46, 1
      %s48 = scalar_select %p45, %s46, %s47
      %p51 = pneg %p45
      %p52 = scmp.eq.s32.totalorder %s22, 1
      %p53 = por %p51, %p52
      %p54 = scmp.ne.s32.totalorder %s46, %s49
      %p55 = scmp.eq.s32.totalorder %s22, 0
      %p56 = por %p54, %p55
      %p57 = scmp.ne.s32.totalorder %s46, %s49
      %p58 = scmp.eq.s32.totalorder %s27, 1
      %p59 = por %p57, %p58
      %p60 = scmp.ne.s32.totalorder %s49, %s50
      %p61 = scmp.eq.s32.totalorder %s27, 0
      %p62 = por %p60, %p61
      %p63 = scmp.ne.s32.totalorder %s49, %s50
      %p64 = scmp.eq.s32.totalorder %s28, 1
      %p65 = por %p63, %p64
      %p67 = scmp.ne.s32.totalorder %s50, %s66
      %p68 = scmp.eq.s32.totalorder %s28, 0
      %p69 = por %p67, %p68
      %s70 = ssub.s32 %s29, %s41
      %p71 = scmp.eq.s32.totalorder %s70, 0
      %s73 = sadd.s32 %s72, 1
      %s74 = scalar_select %p71, %s72, %s73
      %p77 = pneg %p71
      %p78 = scmp.eq.s32.totalorder %s22, 1
      %p79 = por %p77, %p78
      %p80 = scmp.ne.s32.totalorder %s72, %s75
      %p81 = scmp.eq.s32.totalorder %s22, 0
      %p82 = por %p80, %p81
      %p83 = scmp.ne.s32.totalorder %s72, %s75
      %p84 = scmp.eq.s32.totalorder %s27, 1
      %p85 = por %p83, %p84
      %p86 = scmp.ne.s32.totalorder %s75, %s76
      %p87 = scmp.eq.s32.totalorder %s27, 0
      %p88 = por %p86, %p87
      %p89 = scmp.ne.s32.totalorder %s75, %s76
      %p90 = scmp.eq.s32.totalorder %s28, 1
      %p91 = por %p89, %p90
      %p93 = scmp.ne.s32.totalorder %s76, %s92
      %p94 = scmp.eq.s32.totalorder %s28, 0
      %p95 = por %p93, %p94
      %s96 = ssub.s32 %s29, %s41
      %p97 = scmp.eq.s32.totalorder %s96, 0
      %s99 = sadd.s32 %s98, 1
      %s100 = scalar_select %p97, %s98, %s99
      %p103 = pneg %p97
      %p104 = scmp.eq.s32.totalorder %s22, 1
      %p105 = por %p103, %p104
      %p106 = scmp.ne.s32.totalorder %s98, %s101
      %p107 = scmp.eq.s32.totalorder %s22, 0
      %p108 = por %p106, %p107
      %p109 = scmp.ne.s32.totalorder %s98, %s101
      %p110 = scmp.eq.s32.totalorder %s27, 1
      %p111 = por %p109, %p110
      %p112 = scmp.ne.s32.totalorder %s101, %s102
      %p113 = scmp.eq.s32.totalorder %s27, 0
      %p114 = por %p112, %p113
      %p115 = scmp.ne.s32.totalorder %s101, %s102
      %p116 = scmp.eq.s32.totalorder %s28, 1
      %p117 = por %p115, %p116
      %p119 = scmp.ne.s32.totalorder %s102, %s118
      %p120 = scmp.eq.s32.totalorder %s28, 0
      %p121 = por %p119, %p120
      %s123 = sadd.s32 %s122, 1
      %p126 = scmp.eq.s32.totalorder %s22, 1
      %p127 = scmp.ne.s32.totalorder %s122, %s124
      %p128 = scmp.eq.s32.totalorder %s22, 0
      %p129 = por %p127, %p128
      %p130 = scmp.ne.s32.totalorder %s122, %s124
      %p131 = scmp.eq.s32.totalorder %s27, 1
      %p132 = por %p130, %p131
      %p133 = scmp.ne.s32.totalorder %s124, %s125
      %p134 = scmp.eq.s32.totalorder %s27, 0
      %p135 = por %p133, %p134
      %p136 = scmp.ne.s32.totalorder %s124, %s125
      %p137 = scmp.eq.s32.totalorder %s28, 1
      %p138 = por %p136, %p137
      %p140 = scmp.ne.s32.totalorder %s125, %s139
      %p141 = scmp.eq.s32.totalorder %s28, 0
      %p142 = por %p140, %p141
      %s144 = sadd.s32 %s143, 1
      %p147 = scmp.eq.s32.totalorder %s22, 1
      %p148 = scmp.ne.s32.totalorder %s143, %s145
      %p149 = scmp.eq.s32.totalorder %s22, 0
      %p150 = por %p148, %p149
      %p151 = scmp.ne.s32.totalorder %s143, %s145
      %p152 = scmp.eq.s32.totalorder %s27, 1
      %p153 = por %p151, %p152
      %p154 = scmp.ne.s32.totalorder %s145, %s146
      %p155 = scmp.eq.s32.totalorder %s27, 0
      %p156 = por %p154, %p155
      %p157 = scmp.ne.s32.totalorder %s145, %s146
      %p158 = scmp.eq.s32.totalorder %s28, 1
      %p159 = por %p157, %p158
      %p161 = scmp.ne.s32.totalorder %s146, %s160
      %p162 = scmp.eq.s32.totalorder %s28, 0
      %p163 = por %p161, %p162
      %s165 = sadd.s32 %s164, 1
      %p168 = scmp.eq.s32.totalorder %s22, 1
      %p169 = scmp.ne.s32.totalorder %s164, %s166
      %p170 = scmp.eq.s32.totalorder %s22, 0
      %p171 = por %p169, %p170
      %p172 = scmp.ne.s32.totalorder %s164, %s166
      %p173 = scmp.eq.s32.totalorder %s27, 1
      %p174 = por %p172, %p173
      %p175 = scmp.ne.s32.totalorder %s166, %s167
      %p176 = scmp.eq.s32.totalorder %s27, 0
      %p177 = por %p175, %p176
      %p178 = scmp.ne.s32.totalorder %s166, %s167
      %p179 = scmp.eq.s32.totalorder %s28, 1
      %p180 = por %p178, %p179
      %p182 = scmp.ne.s32.totalorder %s167, %s181
      %p183 = scmp.eq.s32.totalorder %s28, 0
      %p184 = por %p182, %p183
      %s186 = sadd.s32 %s185, 1
      %p189 = scmp.eq.s32.totalorder %s22, 1
      %p190 = scmp.ne.s32.totalorder %s185, %s187
      %p191 = scmp.eq.s32.totalorder %s22, 0
      %p192 = por %p190, %p191
      %p193 = scmp.ne.s32.totalorder %s185, %s187
      %p194 = scmp.eq.s32.totalorder %s27, 1
      %p195 = por %p193, %p194
      %p196 = scmp.ne.s32.totalorder %s187, %s188
      %p197 = scmp.eq.s32.totalorder %s27, 0
      %p198 = por %p196, %p197
      %p199 = scmp.ne.s32.totalorder %s187, %s188
      %p200 = scmp.eq.s32.totalorder %s28, 1
      %p201 = por %p199, %p200
      %p203 = scmp.ne.s32.totalorder %s188, %s202
      %p204 = scmp.eq.s32.totalorder %s28, 0
      %p205 = por %p203, %p204
      %s207 = sadd.s32 %s206, 1
      %p210 = scmp.eq.s32.totalorder %s22, 1
      %p211 = scmp.ne.s32.totalorder %s206, %s208
      %p212 = scmp.eq.s32.totalorder %s22, 0
      %p213 = por %p211, %p212
      %p214 = scmp.ne.s32.totalorder %s206, %s208
      %p215 = scmp.eq.s32.totalorder %s27, 1
      %p216 = por %p214, %p215
      %p217 = scmp.ne.s32.totalorder %s208, %s209
      %p218 = scmp.eq.s32.totalorder %s27, 0
      %p219 = por %p217, %p218
      %p220 = scmp.ne.s32.totalorder %s208, %s209
      %p221 = scmp.eq.s32.totalorder %s28, 1
      %p222 = por %p220, %p221
      %p224 = scmp.ne.s32.totalorder %s209, %s223
      %p225 = scmp.eq.s32.totalorder %s28, 0
      %p226 = por %p224, %p225
      %s228 = sadd.s32 %s227, 1
      %p231 = scmp.eq.s32.totalorder %s22, 1
      %p232 = scmp.ne.s32.totalorder %s227, %s229
      %p233 = scmp.eq.s32.totalorder %s22, 0
      %p234 = por %p232, %p233
      %p235 = scmp.ne.s32.totalorder %s227, %s229
      %p236 = scmp.eq.s32.totalorder %s27, 1
      %p237 = por %p235, %p236
      %p238 = scmp.ne.s32.totalorder %s229, %s230
      %p239 = scmp.eq.s32.totalorder %s27, 0
      %p240 = por %p238, %p239
      %p241 = scmp.ne.s32.totalorder %s229, %s230
      %p242 = scmp.eq.s32.totalorder %s28, 1
      %p243 = por %p241, %p242
      %p245 = scmp.ne.s32.totalorder %s230, %s244
      %p246 = scmp.eq.s32.totalorder %s28, 0
      %p247 = por %p245, %p246
      %s249 = sadd.s32 %s248, 1
      %p252 = scmp.eq.s32.totalorder %s22, 1
      %p253 = scmp.ne.s32.totalorder %s248, %s250
      %p254 = scmp.eq.s32.totalorder %s22, 0
      %p255 = por %p253, %p254
      %p256 = scmp.ne.s32.totalorder %s248, %s250
      %p257 = scmp.eq.s32.totalorder %s27, 1
      %p258 = por %p256, %p257
      %p259 = scmp.ne.s32.totalorder %s250, %s251
      %p260 = scmp.eq.s32.totalorder %s27, 0
      %p261 = por %p259, %p260
      %p262 = scmp.ne.s32.totalorder %s250, %s251
      %p263 = scmp.eq.s32.totalorder %s28, 1
      %p264 = por %p262, %p263
      %p266 = scmp.ne.s32.totalorder %s251, %s265
      %p267 = scmp.eq.s32.totalorder %s28, 0
      %p268 = por %p266, %p267
      %s270 = sadd.s32 %s269, 1
      %p273 = scmp.eq.s32.totalorder %s22, 1
      %p274 = scmp.ne.s32.totalorder %s269, %s271
      %p275 = scmp.eq.s32.totalorder %s22, 0
      %p276 = por %p274, %p275
      %p277 = scmp.ne.s32.totalorder %s269, %s271
      %p278 = scmp.eq.s32.totalorder %s27, 1
      %p279 = por %p277, %p278
      %p280 = scmp.ne.s32.totalorder %s271, %s272
      %p281 = scmp.eq.s32.totalorder %s27, 0
      %p282 = por %p280, %p281
      %p283 = scmp.ne.s32.totalorder %s271, %s272
      %p284 = scmp.eq.s32.totalorder %s28, 1
      %p285 = por %p283, %p284
      %p287 = scmp.ne.s32.totalorder %s272, %s286
      %p288 = scmp.eq.s32.totalorder %s28, 0
      %p289 = por %p287, %p288
      %s291 = sadd.s32 %s290, 1
      %p294 = scmp.eq.s32.totalorder %s22, 1
      %p295 = scmp.ne.s32.totalorder %s290, %s292
      %p296 = scmp.eq.s32.totalorder %s22, 0
      %p297 = por %p295, %p296
      %p298 = scmp.ne.s32.totalorder %s290, %s292
      %p299 = scmp.eq.s32.totalorder %s27, 1
      %p300 = por %p298, %p299
      %p301 = scmp.ne.s32.totalorder %s292, %s293
      %p302 = scmp.eq.s32.totalorder %s27, 0
      %p303 = por %p301, %p302
      %p304 = scmp.ne.s32.totalorder %s292, %s293
      %p305 = scmp.eq.s32.totalorder %s28, 1
      %p306 = por %p304, %p305
      %p308 = scmp.ne.s32.totalorder %s293, %s307
      %p309 = scmp.eq.s32.totalorder %s28, 0
      %p310 = por %p308, %p309
      %s312 = sadd.s32 %s311, 1
      %p315 = scmp.eq.s32.totalorder %s22, 1
      %p316 = scmp.ne.s32.totalorder %s311, %s313
      %p317 = scmp.eq.s32.totalorder %s22, 0
      %p318 = por %p316, %p317
      %p319 = scmp.ne.s32.totalorder %s311, %s313
      %p320 = scmp.eq.s32.totalorder %s27, 1
      %p321 = por %p319, %p320
      %p322 = scmp.ne.s32.totalorder %s313, %s314
      %p323 = scmp.eq.s32.totalorder %s27, 0
      %p324 = por %p322, %p323
      %p325 = scmp.ne.s32.totalorder %s313, %s314
      %p326 = scmp.eq.s32.totalorder %s28, 1
      %p327 = por %p325, %p326
      %p329 = scmp.ne.s32.totalorder %s314, %s328
      %p330 = scmp.eq.s32.totalorder %s28, 0
      %p331 = por %p329, %p330
      %s332 = ssub.s32 %s29, %s41
      %s333 = ssub.s32 %s30, %s37
      %s334 = sor.u32 %s332, %s333
      %p335 = scmp.eq.s32.totalorder %s334, 0
      %s337 = sadd.s32 %s336, 1
      %s338 = scalar_select %p335, %s336, %s337
      %p341 = pneg %p335
      %p342 = scmp.eq.s32.totalorder %s22, 1
      %p343 = por %p341, %p342
      %p344 = scmp.ne.s32.totalorder %s336, %s339
      %p345 = scmp.eq.s32.totalorder %s22, 0
      %p346 = por %p344, %p345
      %p347 = scmp.ne.s32.totalorder %s336, %s339
      %p348 = scmp.eq.s32.totalorder %s27, 1
      %p349 = por %p347, %p348
      %p350 = scmp.ne.s32.totalorder %s339, %s340
      %p351 = scmp.eq.s32.totalorder %s27, 0
      %p352 = por %p350, %p351
      %p353 = scmp.ne.s32.totalorder %s339, %s340
      %p354 = scmp.eq.s32.totalorder %s28, 1
      %p355 = por %p353, %p354
      %p357 = scmp.ne.s32.totalorder %s340, %s356
      %p358 = scmp.eq.s32.totalorder %s28, 0
      %p359 = por %p357, %p358
      %p360 = scmp.le.s32.totalorder 1, %s22
      %p361 = scmp.lt.s32.totalorder %s22, 3
      %p362 = pnand %p360, %p361
      %p363 = pneg %p362
      // Predicated region
      $region9: #{decoder_layer_forward.3} parent=5 // pred_check
        _
      $region10: #{decoder_layer_forward.3} parent=5 // pred_check_branch
        %365 = sbr.rel (%p362) target = $region12
      $region11: #{decoder_layer_forward.3} parent=5 // pred_region
        %s366 = ssub.s32 %s22, 1
        // Predicated region
        $region13: #{decoder_layer_forward.3} parent=11 // pred_check
          %p367 = pneg %p135
        $region14: #{decoder_layer_forward.3} parent=11 // pred_check_branch
          %369 = sbr.rel (%p367) target = $region16
        $region15: #{decoder_layer_forward.3} parent=11 // pred_region
          %371 = vsyncadd [#allocation4], 0
          %s372 = sshll.u32 %s3, 4
          %s373 = int_to_ptr.hbm [resolvable:$true] %s372
          %s374 = sshll.u32 [#allocation3], 4
          %s375 = int_to_ptr.vmem [resolvable:$true] %s374
          %380 = dma.hbm_to_vmem [thread:$0]  %s373, 256, %s375, [#allocation4], 64, 64, 4
        $region16: #{decoder_layer_forward.3} parent=11 // pred_fallthru
          _
        // Predicated region
        $region17: #{decoder_layer_forward.3} parent=11 // pred_check
          %p381 = pneg %p156
        $region18: #{decoder_layer_forward.3} parent=11 // pred_check_branch
          %383 = sbr.rel (%p381) target = $region20
        $region19: #{decoder_layer_forward.3} parent=11 // pred_region
          _
        $region20: #{decoder_layer_forward.3} parent=11 // pred_fallthru
          _
        // Predicated region
        $region21: #{decoder_layer_forward.3} parent=11 // pred_check
          %p384 = pneg %p177
        $region22: #{decoder_layer_forward.3} parent=11 // pred_check_branch
          %386 = sbr.rel (%p384) target = $region24
        $region23: #{decoder_layer_forward.3} parent=11 // pred_region
          %388 = vsyncadd [#allocation6], 0
          %s389 = sshll.u32 %s5, 4
          %s390 = int_to_ptr.hbm [resolvable:$true] %s389
          %s391 = sshll.u32 [#allocation5], 4
          %s392 = int_to_ptr.vmem [resolvable:$true] %s391
          %397 = dma.hbm_to_vmem [thread:$0]  %s390, 256, %s392, [#allocation6], 64, 64, 4
        $region24: #{decoder_layer_forward.3} parent=11 // pred_fallthru
          _
        // Predicated region
        $region25: #{decoder_layer_forward.3} parent=11 // pred_check
          %p398 = pneg %p198
        $region26: #{decoder_layer_forward.3} parent=11 // pred_check_branch
          %400 = sbr.rel (%p398) target = $region28
        $region27: #{decoder_layer_forward.3} parent=11 // pred_region
          _
        $region28: #{decoder_layer_forward.3} parent=11 // pred_fallthru
          _
        // Predicated region
        $region29: #{decoder_layer_forward.3} parent=11 // pred_check
          %p401 = pneg %p219
        $region30: #{decoder_layer_forward.3} parent=11 // pred_check_branch
          %403 = sbr.rel (%p401) target = $region32
        $region31: #{decoder_layer_forward.3} parent=11 // pred_region
          %405 = vsyncadd [#allocation6], 0
          %s406 = sshll.u32 %s7, 4
          %s407 = int_to_ptr.hbm [resolvable:$true] %s406
          %s408 = sshll.u32 [#allocation7], 4
          %s409 = int_to_ptr.vmem [resolvable:$true] %s408
          %414 = dma.hbm_to_vmem [thread:$0]  %s407, 256, %s409, [#allocation6], 64, 64, 4
        $region32: #{decoder_layer_forward.3} parent=11 // pred_fallthru
          _
        // Predicated region
        $region33: #{decoder_layer_forward.3} parent=11 // pred_check
          %p415 = pneg %p240
        $region34: #{decoder_layer_forward.3} parent=11 // pred_check_branch
          %417 = sbr.rel (%p415) target = $region36
        $region35: #{decoder_layer_forward.3} parent=11 // pred_region
          _
        $region36: #{decoder_layer_forward.3} parent=11 // pred_fallthru
          _
        // Predicated region
        $region37: #{decoder_layer_forward.3} parent=11 // pred_check
          %p418 = pneg %p261
        $region38: #{decoder_layer_forward.3} parent=11 // pred_check_branch
          %420 = sbr.rel (%p418) target = $region40
        $region39: #{decoder_layer_forward.3} parent=11 // pred_region
          %422 = vsyncadd [#allocation9], 0
          %s423 = sshll.u32 %s9, 4
          %s424 = int_to_ptr.hbm [resolvable:$true] %s423
          %s425 = sshll.u32 [#allocation8], 4
          %s426 = int_to_ptr.vmem [resolvable:$true] %s425
          %431 = dma.hbm_to_vmem [thread:$0]  %s424, 256, %s426, [#allocation9], 64, 64, 4
        $region40: #{decoder_layer_forward.3} parent=11 // pred_fallthru
          _
        // Predicated region
        $region41: #{decoder_layer_forward.3} parent=11 // pred_check
          %p432 = pneg %p282
        $region42: #{decoder_layer_forward.3} parent=11 // pred_check_branch
          %434 = sbr.rel (%p432) target = $region44
        $region43: #{decoder_layer_forward.3} parent=11 // pred_region
          _
        $region44: #{decoder_layer_forward.3} parent=11 // pred_fallthru
          _
        // Predicated region
        $region45: #{decoder_layer_forward.3} parent=11 // pred_check
          %p435 = pneg %p303
        $region46: #{decoder_layer_forward.3} parent=11 // pred_check_branch
          %437 = sbr.rel (%p435) target = $region48
        $region47: #{decoder_layer_forward.3} parent=11 // pred_region
          _
        $region48: #{decoder_layer_forward.3} parent=11 // pred_fallthru
          _
        // Predicated region
        $region49: #{decoder_layer_forward.3} parent=11 // pred_check
          %p438 = pneg %p324
        $region50: #{decoder_layer_forward.3} parent=11 // pred_check_branch
          %440 = sbr.rel (%p438) target = $region52
        $region51: #{decoder_layer_forward.3} parent=11 // pred_region
          _
        $region52: #{decoder_layer_forward.3} parent=11 // pred_fallthru
          _
      $region12: #{decoder_layer_forward.3} parent=5 // pred_fallthru
        _
      %p441 = scmp.lt.s32.totalorder %s22, 2
      // Predicated region
      $region53: #{decoder_layer_forward.3} parent=5 // pred_check
        %p442 = pneg %p441
      $region54: #{decoder_layer_forward.3} parent=5 // pred_check_branch
        %444 = sbr.rel (%p442) target = $region56
      $region55: #{decoder_layer_forward.3} parent=5 // pred_region
        // Predicated region
        $region57: #{decoder_layer_forward.3} parent=55 // pred_check
          %p445 = pneg %p56
        $region58: #{decoder_layer_forward.3} parent=55 // pred_check_branch
          %447 = sbr.rel (%p445) target = $region60
        $region59: #{decoder_layer_forward.3} parent=55 // pred_region
          %p448 = scmp.lt.s32.totalorder %s29, 1
          %s449 = scalar_select %p448, %s29, 1
          %p450 = scmp.lt.s32.totalorder %s30, 0
          %s451 = scalar_select %p450, %s30, 0
          %s452 = sadd.s32 %s451, %s449
          %s453 = smul.addr %s452, 8
          %s454 = scalar_lea.vmem %s0, %s453
        $region60: #{decoder_layer_forward.3} parent=55 // pred_fallthru
          _
        // Predicated region
        $region61: #{decoder_layer_forward.3} parent=55 // pred_check
          %p455 = pneg %p82
        $region62: #{decoder_layer_forward.3} parent=55 // pred_check_branch
          %457 = sbr.rel (%p455) target = $region64
        $region63: #{decoder_layer_forward.3} parent=55 // pred_region
          %p458 = scmp.lt.s32.totalorder %s29, 1
          %s459 = scalar_select %p458, %s29, 1
          %s460 = smul.addr %s459, 8
          %s461 = scalar_lea.vmem %s1, %s460
        $region64: #{decoder_layer_forward.3} parent=55 // pred_fallthru
          _
        // Predicated region
        $region65: #{decoder_layer_forward.3} parent=55 // pred_check
          %p462 = pneg %p108
        $region66: #{decoder_layer_forward.3} parent=55 // pred_check_branch
          %464 = sbr.rel (%p462) target = $region68
        $region67: #{decoder_layer_forward.3} parent=55 // pred_region
          %p465 = scmp.lt.s32.totalorder %s29, 1
          %s466 = scalar_select %p465, %s29, 1
          %s467 = scalar_lea.vmem %s2, %s466
        $region68: #{decoder_layer_forward.3} parent=55 // pred_fallthru
          _
      $region56: #{decoder_layer_forward.3} parent=5 // pred_fallthru
        _
      %p468 = scmp.le.s32.totalorder 1, %s22
      %p469 = scmp.lt.s32.totalorder %s22, 3
      %p470 = pnand %p468, %p469
      %p471 = pneg %p470
      // Predicated region
      $region69: #{decoder_layer_forward.3} parent=5 // pred_check
        _
      $region70: #{decoder_layer_forward.3} parent=5 // pred_check_branch
        %473 = sbr.rel (%p470) target = $region72
      $region71: #{decoder_layer_forward.3} parent=5 // pred_region
        %s474 = ssub.s32 %s22, 1
        // Predicated region
        $region73: #{decoder_layer_forward.3} parent=71 // pred_check
          %p475 = pneg %p135
        $region74: #{decoder_layer_forward.3} parent=71 // pred_check_branch
          %477 = sbr.rel (%p475) target = $region76
        $region75: #{decoder_layer_forward.3} parent=71 // pred_region
          %479 = dma.done [#allocation4], 256
        $region76: #{decoder_layer_forward.3} parent=71 // pred_fallthru
          _
        // Predicated region
        $region77: #{decoder_layer_forward.3} parent=71 // pred_check
          %p480 = pneg %p177
        $region78: #{decoder_layer_forward.3} parent=71 // pred_check_branch
          %482 = sbr.rel (%p480) target = $region80
        $region79: #{decoder_layer_forward.3} parent=71 // pred_region
          %484 = dma.done [#allocation6], 256
        $region80: #{decoder_layer_forward.3} parent=71 // pred_fallthru
          _
        // Predicated region
        $region81: #{decoder_layer_forward.3} parent=71 // pred_check
          %p485 = pneg %p219
        $region82: #{decoder_layer_forward.3} parent=71 // pred_check_branch
          %487 = sbr.rel (%p485) target = $region84
        $region83: #{decoder_layer_forward.3} parent=71 // pred_region
          %489 = dma.done [#allocation6], 256
        $region84: #{decoder_layer_forward.3} parent=71 // pred_fallthru
          _
        // Predicated region
        $region85: #{decoder_layer_forward.3} parent=71 // pred_check
          %p490 = pneg %p261
        $region86: #{decoder_layer_forward.3} parent=71 // pred_check_branch
          %492 = sbr.rel (%p490) target = $region88
        $region87: #{decoder_layer_forward.3} parent=71 // pred_region
          %494 = dma.done [#allocation9], 256
        $region88: #{decoder_layer_forward.3} parent=71 // pred_fallthru
          _
        %p495 = scmp.lt.s32.totalorder %s31, 1
        %s496 = scalar_select %p495, %s31, 1
        %p497 = scmp.lt.s32.totalorder %s32, 0
        %s498 = scalar_select %p497, %s32, 0
        %s499 = sadd.s32 %s498, %s496
        %s500 = smul.addr %s499, 8
        %s501 = scalar_lea.vmem %s0, %s500
        %p502 = pneg %p62
        %p503 = pneg %p59
        %p504 = scmp.lt.s32.totalorder %s31, 1
        %s505 = scalar_select %p504, %s31, 1
        %s506 = smul.addr %s505, 8
        %s507 = scalar_lea.vmem %s1, %s506
        %p508 = pneg %p88
        %p509 = pneg %p85
        %p510 = scmp.lt.s32.totalorder %s31, 1
        %s511 = scalar_select %p510, %s31, 1
        %s512 = scalar_lea.vmem %s2, %s511
        %p513 = pneg %p114
        %p514 = pneg %p111
        %p515 = pneg %p135
        %p516 = pneg %p132
        %p517 = pneg %p156
        %p518 = pneg %p153
        %p519 = pneg %p177
        %p520 = pneg %p174
        %p521 = pneg %p198
        %p522 = pneg %p195
        %p523 = pneg %p219
        %p524 = pneg %p216
        %p525 = pneg %p240
        %p526 = pneg %p237
        %p527 = pneg %p261
        %p528 = pneg %p258
        %p529 = pneg %p282
        %p530 = pneg %p279
        %p531 = pneg %p303
        %p532 = pneg %p300
        %p533 = pneg %p324
        %p534 = pneg %p321
        %p535 = pneg %p352
        %p536 = pneg %p349
        %p537 = scmp.lt.s32.totalorder %s31, 1
        %s538 = scalar_select %p537, %s31, 1
        %p539 = scmp.lt.s32.totalorder %s32, 0
        %s540 = scalar_select %p539, %s32, 0
        %s541 = sadd.s32 %s540, %s538
        %s542 = smul.addr %s541, 8
        %s543 = scalar_lea.vmem %s13, %s542
        %p544 = scmp.lt.s32.totalorder %s31, 1
        %s545 = scalar_select %p544, %s31, 1
        %p546 = scmp.lt.s32.totalorder %s32, 0
        %s547 = scalar_select %p546, %s32, 0
        %s548 = sadd.s32 %s547, %s545
        %s549 = smul.addr %s548, 8
        %s550 = scalar_lea.vmem %s0, %s549
        %p551 = scmp.lt.s32.totalorder %s31, 1
        %s552 = scalar_select %p551, %s31, 1
        %s553 = smul.addr %s552, 8
        %s554 = scalar_lea.vmem %s1, %s553
        %p555 = scmp.lt.s32.totalorder %s31, 1
        %s556 = scalar_select %p555, %s31, 1
        %s557 = scalar_lea.vmem %s2, %s556
        %p558 = scmp.lt.s32.totalorder %s31, 1
        %s559 = scalar_select %p558, %s31, 1
        %p560 = scmp.lt.s32.totalorder %s32, 0
        %s561 = scalar_select %p560, %s32, 0
        %s562 = sadd.s32 %s561, %s559
        %s563 = smul.addr %s562, 8
        %s564 = scalar_lea.vmem %s13, %s563
        %v566 = vld [vmem:[%s550] sm:$0xff]
        %v567 = vld [vmem:[%s554] sm:$0xff]
        %v568 = vld [vmem:[%s557] sm:$0x1]
        %v569 = vpack.c.bf16 %v566, %v566
        %v570 = vpack.c.bf16 %v567, %v567
        %v571 = vld [vmem:[#allocation3] sm:$0xf]
        %v572 = vld [vmem:[#allocation3 + $0x4] sm:$0xf]
        %v573 = vld [vmem:[#allocation3 + $0x8] sm:$0xf]
        %v574 = vld [vmem:[#allocation3 + $0xc] sm:$0xf]
        %v575 = vld [vmem:[%s4] sm:$0x1]
        %v577 = vperm.slane %v575, 0
        %v583 = vunpack.c.l.b16 %v571
        %v584 = vunpack.c.l.b16 %v572
        %v585 = vunpack.c.l.b16 %v573
        %v586 = vunpack.c.l.b16 %v574
        %v587 = vpack.c.b16 %v584, %v583
        %v588 = vpack.c.b16 %v586, %v585
        %vm591 = vcmask 261120
        %v593 = vsel %vm591, %v569, 0
        %595 = vmatpush.bf16.msra.mxu0 0
        %596 = vmatpush.bf16.msra.mxu0 0
        %597 = vmatpush.bf16.msra.mxu0 0
        %598 = vmatpush.bf16.msra.mxu0 0
        %599 = vmatpush.bf16.msra.mxu0 0
        %600 = vmatpush.bf16.msra.mxu0 0
        %601 = vmatpush.bf16.msra.mxu0 %v588
        %602 = vmatpush.bf16.msra.mxu0 %v587
        %603 = vmatmul.bf16.gmra.mxu0 %v593
        %v604 = vpop.f32.mrf.mxu0
        %v605 = vadd.f32 %v577, %v604
        %v606 = vpop.f32.mrf.mxu0
        %607 = vdwg.mxu0
        %v608 = vmul.f32 %v605, 0.35355338
        %v609 = vld [vmem:[#allocation5] sm:$0xf]
        %v610 = vld [vmem:[#allocation5 + $0x4] sm:$0xf]
        %v611 = vld [vmem:[#allocation5 + $0x8] sm:$0xf]
        %v612 = vld [vmem:[#allocation5 + $0xc] sm:$0xf]
        %v613 = vld [vmem:[%s6] sm:$0x1]
        %v615 = vperm.slane %v613, 0
        %v621 = vunpack.c.l.b16 %v609
        %v622 = vunpack.c.l.b16 %v610
        %v623 = vunpack.c.l.b16 %v611
        %v624 = vunpack.c.l.b16 %v612
        %v625 = vpack.c.b16 %v622, %v621
        %v626 = vpack.c.b16 %v624, %v623
        %v630 = vsel %vm591, %v570, 0
        %632 = vmatpush.bf16.msra.mxu0 0
        %633 = vmatpush.bf16.msra.mxu0 0
        %634 = vmatpush.bf16.msra.mxu0 0
        %635 = vmatpush.bf16.msra.mxu0 0
        %636 = vmatpush.bf16.msra.mxu0 0
        %637 = vmatpush.bf16.msra.mxu0 0
        %638 = vmatpush.bf16.msra.mxu0 %v626
        %639 = vmatpush.bf16.msra.mxu0 %v625
        %640 = vmatmul.bf16.gmra.mxu0 %v630
        %v641 = vpop.f32.mrf.mxu0
        %v642 = vadd.f32 %v615, %v641
        %v643 = vpop.f32.mrf.mxu0
        %644 = vdwg.mxu0
        %v645 = vld [vmem:[#allocation7] sm:$0xf]
        %v646 = vld [vmem:[#allocation7 + $0x4] sm:$0xf]
        %v647 = vld [vmem:[#allocation7 + $0x8] sm:$0xf]
        %v648 = vld [vmem:[#allocation7 + $0xc] sm:$0xf]
        %v649 = vld [vmem:[%s8] sm:$0x1]
        %v651 = vperm.slane %v649, 0
        %v657 = vunpack.c.l.b16 %v645
        %v658 = vunpack.c.l.b16 %v646
        %v659 = vunpack.c.l.b16 %v647
        %v660 = vunpack.c.l.b16 %v648
        %v661 = vpack.c.b16 %v658, %v657
        %v662 = vpack.c.b16 %v660, %v659
        %665 = vmatpush.bf16.msra.mxu0 0
        %666 = vmatpush.bf16.msra.mxu0 0
        %667 = vmatpush.bf16.msra.mxu0 0
        %668 = vmatpush.bf16.msra.mxu0 0
        %669 = vmatpush.bf16.msra.mxu0 0
        %670 = vmatpush.bf16.msra.mxu0 0
        %671 = vmatpush.bf16.msra.mxu0 %v662
        %672 = vmatpush.bf16.msra.mxu0 %v661
        %673 = vmatmul.bf16.gmra.mxu0 %v630
        %v674 = vpop.f32.mrf.mxu0
        %v675 = vadd.f32 %v651, %v674
        %v676 = vpop.f32.mrf.mxu0
        %677 = vdwg.mxu0
        %v678 = vpack.c.bf16 %v608, %v608
        %v679 = vpack.c.bf16 %v642, %v642
        %v680 = vpack.c.bf16 %v675, %v675
        %vm681 = vcmp.eq.f32.partialorder %v568, 0.0
        %v682 = vsel %vm681, 1, 0
        %v683 = vperm.slane %v682, 0
        %vm684 = vcmp.eq.s32.totalorder %v683, 1
        %vm685 = vcmask 64512
        %v687 = vsel %vm685, %v678, 0
        %v690 = vsel %vm685, %v679, 0
        %692 = vmatpush.bf16.xpose.msra.mxu0 0
        %693 = vmatpush.bf16.xpose.msra.mxu0 0
        %694 = vmatpush.bf16.xpose.msra.mxu0 0
        %695 = vmatpush.bf16.xpose.msra.mxu0 0
        %696 = vmatpush.bf16.xpose.msra.mxu0 0
        %697 = vmatpush.bf16.xpose.msra.mxu0 0
        %698 = vmatpush.bf16.xpose.msra.mxu0 0
        %699 = vmatpush.bf16.xpose.msra.mxu0 %v690
        %700 = vmatmul.bf16.gmra.mxu0 %v687
        %v701 = vpop.f32.mrf.mxu0
        %v702 = vadd.f32 0.0, %v701
        %v703 = vpop.f32.mrf.mxu0
        %704 = vdwg.mxu0
        %v705 = vsel %vm684, -1e+10, %v702
        %v706 = vsel %vm685, %v705, -inf
        %707 = vmax.xlane.f32.xlu0 %v706
        %v708 = vpop.xlane.xlu0 %707
        %v709 = vsub.f32 %v705, %v708
        %v710 = vmul.f32 %v709, 1.442695
        %v711 = vpow.pop %v710
        %v712 = vsel %vm685, %v711, 0.0
        %713 = vadd.xlane.f32.xlu0 %v712
        %v714 = vpop.xlane.xlu0 %713
        %v715 = vrcp.pop %v714
        %v716 = vmul.f32 %v711, %v715
        %v717 = vpack.c.bf16 %v716, %v716
        %v719 = vsel %vm685, %v717, 0
        %vm721 = vcmask 1043456
        %v723 = vsel %vm721, %v680, 0
        %725 = vmatpush.bf16.msra.mxu0 0
        %726 = vmatpush.bf16.msra.mxu0 0
        %727 = vmatpush.bf16.msra.mxu0 0
        %728 = vmatpush.bf16.msra.mxu0 0
        %729 = vmatpush.bf16.msra.mxu0 0
        %730 = vmatpush.bf16.msra.mxu0 0
        %731 = vmatpush.bf16.msra.mxu0 0
        %732 = vmatpush.bf16.msra.mxu0 %v723
        %733 = vmatmul.bf16.gmra.mxu0 %v719
        %v734 = vpop.f32.mrf.mxu0
        %v735 = vadd.f32 0.0, %v734
        %v736 = vpop.f32.mrf.mxu0
        %737 = vdwg.mxu0
        %738 = vst.msk [vmem:[#allocation2] sm:$0xff] %vm685, %v735
        %v740 = vunpack.c.l.b16 %v678
        %v741 = vpack.c.b16 %v740, %v740
        %742 = vrot.lane.b32.xlu0 %v741, 120
        %v743 = vpop.permute.xlu0 %742
        %v745 = vunpack.c.l.b16 %v679
        %v746 = vpack.c.b16 %v745, %v745
        %747 = vrot.lane.b32.xlu0 %v746, 120
        %v748 = vpop.permute.xlu0 %747
        %v750 = vsel %vm685, %v743, 0
        %v753 = vsel %vm685, %v748, 0
        %755 = vmatpush.bf16.xpose.msra.mxu0 0
        %756 = vmatpush.bf16.xpose.msra.mxu0 0
        %757 = vmatpush.bf16.xpose.msra.mxu0 0
        %758 = vmatpush.bf16.xpose.msra.mxu0 0
        %759 = vmatpush.bf16.xpose.msra.mxu0 0
        %760 = vmatpush.bf16.xpose.msra.mxu0 0
        %761 = vmatpush.bf16.xpose.msra.mxu0 0
        %762 = vmatpush.bf16.xpose.msra.mxu0 %v753
        %763 = vmatmul.bf16.gmra.mxu0 %v750
        %v764 = vpop.f32.mrf.mxu0
        %v765 = vadd.f32 0.0, %v764
        %v766 = vpop.f32.mrf.mxu0
        %767 = vdwg.mxu0
        %v768 = vsel %vm684, -1e+10, %v765
        %v769 = vsel %vm685, %v768, -inf
        %770 = vmax.xlane.f32.xlu0 %v769
        %v771 = vpop.xlane.xlu0 %770
        %v772 = vsub.f32 %v768, %v771
        %v773 = vmul.f32 %v772, 1.442695
        %v774 = vpow.pop %v773
        %v775 = vsel %vm685, %v774, 0.0
        %776 = vadd.xlane.f32.xlu0 %v775
        %v777 = vpop.xlane.xlu0 %776
        %v778 = vrcp.pop %v777
        %v779 = vmul.f32 %v774, %v778
        %v780 = vpack.c.bf16 %v779, %v779
        %v782 = vunpack.c.l.b16 %v680
        %v783 = vpack.c.b16 %v782, %v782
        %784 = vrot.lane.b32.xlu0 %v783, 120
        %v785 = vpop.permute.xlu0 %784
        %v787 = vsel %vm685, %v780, 0
        %v790 = vsel %vm721, %v785, 0
        %792 = vmatpush.bf16.msra.mxu0 0
        %793 = vmatpush.bf16.msra.mxu0 0
        %794 = vmatpush.bf16.msra.mxu0 0
        %795 = vmatpush.bf16.msra.mxu0 0
        %796 = vmatpush.bf16.msra.mxu0 0
        %797 = vmatpush.bf16.msra.mxu0 0
        %798 = vmatpush.bf16.msra.mxu0 0
        %799 = vmatpush.bf16.msra.mxu0 %v790
        %800 = vmatmul.bf16.gmra.mxu0 %v787
        %v801 = vpop.f32.mrf.mxu0
        %v802 = vadd.f32 0.0, %v801
        %v803 = vpop.f32.mrf.mxu0
        %804 = vdwg.mxu0
        %806 = vrot.lane.b32.xlu0 %v802, 8
        %v807 = vpop.permute.xlu0 %806
        %vm809 = vcmask 130112
        %810 = vst.msk [vmem:[#allocation2] sm:$0xff] %vm809, %v807
        %811 = vrot.lane.b32.xlu0 %v741, 112
        %v812 = vpop.permute.xlu0 %811
        %813 = vrot.lane.b32.xlu0 %v746, 112
        %v814 = vpop.permute.xlu0 %813
        %v816 = vsel %vm685, %v812, 0
        %v819 = vsel %vm685, %v814, 0
        %821 = vmatpush.bf16.xpose.msra.mxu0 0
        %822 = vmatpush.bf16.xpose.msra.mxu0 0
        %823 = vmatpush.bf16.xpose.msra.mxu0 0
        %824 = vmatpush.bf16.xpose.msra.mxu0 0
        %825 = vmatpush.bf16.xpose.msra.mxu0 0
        %826 = vmatpush.bf16.xpose.msra.mxu0 0
        %827 = vmatpush.bf16.xpose.msra.mxu0 0
        %828 = vmatpush.bf16.xpose.msra.mxu0 %v819
        %829 = vmatmul.bf16.gmra.mxu0 %v816
        %v830 = vpop.f32.mrf.mxu0
        %v831 = vadd.f32 0.0, %v830
        %v832 = vpop.f32.mrf.mxu0
        %833 = vdwg.mxu0
        %v834 = vsel %vm684, -1e+10, %v831
        %v835 = vsel %vm685, %v834, -inf
        %836 = vmax.xlane.f32.xlu0 %v835
        %v837 = vpop.xlane.xlu0 %836
        %v838 = vsub.f32 %v834, %v837
        %v839 = vmul.f32 %v838, 1.442695
        %v840 = vpow.pop %v839
        %v841 = vsel %vm685, %v840, 0.0
        %842 = vadd.xlane.f32.xlu0 %v841
        %v843 = vpop.xlane.xlu0 %842
        %v844 = vrcp.pop %v843
        %v845 = vmul.f32 %v840, %v844
        %v846 = vpack.c.bf16 %v845, %v845
        %847 = vrot.lane.b32.xlu0 %v783, 112
        %v848 = vpop.permute.xlu0 %847
        %v850 = vsel %vm685, %v846, 0
        %v853 = vsel %vm721, %v848, 0
        %855 = vmatpush.bf16.msra.mxu0 0
        %856 = vmatpush.bf16.msra.mxu0 0
        %857 = vmatpush.bf16.msra.mxu0 0
        %858 = vmatpush.bf16.msra.mxu0 0
        %859 = vmatpush.bf16.msra.mxu0 0
        %860 = vmatpush.bf16.msra.mxu0 0
        %861 = vmatpush.bf16.msra.mxu0 0
        %862 = vmatpush.bf16.msra.mxu0 %v853
        %863 = vmatmul.bf16.gmra.mxu0 %v850
        %v864 = vpop.f32.mrf.mxu0
        %v865 = vadd.f32 0.0, %v864
        %v866 = vpop.f32.mrf.mxu0
        %867 = vdwg.mxu0
        %869 = vrot.lane.b32.xlu0 %v865, 16
        %v870 = vpop.permute.xlu0 %869
        %vm872 = vcmask 195712
        %873 = vst.msk [vmem:[#allocation2] sm:$0xff] %vm872, %v870
        %874 = vrot.lane.b32.xlu0 %v741, 104
        %v875 = vpop.permute.xlu0 %874
        %876 = vrot.lane.b32.xlu0 %v746, 104
        %v877 = vpop.permute.xlu0 %876
        %v879 = vsel %vm685, %v875, 0
        %v882 = vsel %vm685, %v877, 0
        %884 = vmatpush.bf16.xpose.msra.mxu0 0
        %885 = vmatpush.bf16.xpose.msra.mxu0 0
        %886 = vmatpush.bf16.xpose.msra.mxu0 0
        %887 = vmatpush.bf16.xpose.msra.mxu0 0
        %888 = vmatpush.bf16.xpose.msra.mxu0 0
        %889 = vmatpush.bf16.xpose.msra.mxu0 0
        %890 = vmatpush.bf16.xpose.msra.mxu0 0
        %891 = vmatpush.bf16.xpose.msra.mxu0 %v882
        %892 = vmatmul.bf16.gmra.mxu0 %v879
        %v893 = vpop.f32.mrf.mxu0
        %v894 = vadd.f32 0.0, %v893
        %v895 = vpop.f32.mrf.mxu0
        %896 = vdwg.mxu0
        %v897 = vsel %vm684, -1e+10, %v894
        %v898 = vsel %vm685, %v897, -inf
        %899 = vmax.xlane.f32.xlu0 %v898
        %v900 = vpop.xlane.xlu0 %899
        %v901 = vsub.f32 %v897, %v900
        %v902 = vmul.f32 %v901, 1.442695
        %v903 = vpow.pop %v902
        %v904 = vsel %vm685, %v903, 0.0
        %905 = vadd.xlane.f32.xlu0 %v904
        %v906 = vpop.xlane.xlu0 %905
        %v907 = vrcp.pop %v906
        %v908 = vmul.f32 %v903, %v907
        %v909 = vpack.c.bf16 %v908, %v908
        %910 = vrot.lane.b32.xlu0 %v783, 104
        %v911 = vpop.permute.xlu0 %910
        %v913 = vsel %vm685, %v909, 0
        %v916 = vsel %vm721, %v911, 0
        %918 = vmatpush.bf16.msra.mxu0 0
        %919 = vmatpush.bf16.msra.mxu0 0
        %920 = vmatpush.bf16.msra.mxu0 0
        %921 = vmatpush.bf16.msra.mxu0 0
        %922 = vmatpush.bf16.msra.mxu0 0
        %923 = vmatpush.bf16.msra.mxu0 0
        %924 = vmatpush.bf16.msra.mxu0 0
        %925 = vmatpush.bf16.msra.mxu0 %v916
        %926 = vmatmul.bf16.gmra.mxu0 %v913
        %v927 = vpop.f32.mrf.mxu0
        %v928 = vadd.f32 0.0, %v927
        %v929 = vpop.f32.mrf.mxu0
        %930 = vdwg.mxu0
        %932 = vrot.lane.b32.xlu0 %v928, 24
        %v933 = vpop.permute.xlu0 %932
        %vm935 = vcmask 261312
        %936 = vst.msk [vmem:[#allocation2] sm:$0xff] %vm935, %v933
        %v937 = vld [vmem:[#allocation2] sm:$0xff]
        %v938 = vpack.c.bf16 %v937, %v937
        %v939 = vld [vmem:[#allocation8] sm:$0xf]
        %v940 = vld [vmem:[#allocation8 + $0x4] sm:$0xf]
        %v941 = vld [vmem:[#allocation8 + $0x8] sm:$0xf]
        %v942 = vld [vmem:[#allocation8 + $0xc] sm:$0xf]
        %v943 = vld [vmem:[%s10] sm:$0x1]
        %v945 = vperm.slane %v943, 0
        %v951 = vunpack.c.l.b16 %v939
        %v952 = vunpack.c.l.b16 %v940
        %v953 = vunpack.c.l.b16 %v941
        %v954 = vunpack.c.l.b16 %v942
        %v955 = vpack.c.b16 %v952, %v951
        %v956 = vpack.c.b16 %v954, %v953
        %v960 = vsel %vm591, %v938, 0
        %962 = vmatpush.bf16.msra.mxu0 0
        %963 = vmatpush.bf16.msra.mxu0 0
        %964 = vmatpush.bf16.msra.mxu0 0
        %965 = vmatpush.bf16.msra.mxu0 0
        %966 = vmatpush.bf16.msra.mxu0 0
        %967 = vmatpush.bf16.msra.mxu0 0
        %968 = vmatpush.bf16.msra.mxu0 %v956
        %969 = vmatpush.bf16.msra.mxu0 %v955
        %970 = vmatmul.bf16.gmra.mxu0 %v960
        %v971 = vpop.f32.mrf.mxu0
        %v972 = vadd.f32 %v945, %v971
        %v973 = vpop.f32.mrf.mxu0
        %974 = vdwg.mxu0
        %v975 = vadd.f32 %v566, %v972
        %v976 = vsel %vm591, %v975, 0.0
        %977 = vadd.xlane.f32.xlu0 %v976
        %v978 = vpop.xlane.xlu0 %977
        %v979 = vrcp.pop 32.0
        %v980 = vmul.f32 32.0, %v979
        %v981 = vsub.f32 1.0, %v980
        %v982 = vmul.f32 %v979, %v981
        %v983 = vadd.f32 %v979, %v982
        %vm984 = vweird.f32 %v979
        %v985 = vsel %vm984, %v979, %v983
        %v986 = vmul.f32 %v978, %v985
        %v987 = vsub.f32 %v975, %v986
        %v988 = vmul.f32 %v987, %v987
        %v989 = vsel %vm591, %v988, 0.0
        %990 = vadd.xlane.f32.xlu0 %v989
        %v991 = vpop.xlane.xlu0 %990
        %v992 = vmul.f32 %v991, %v985
        %v993 = vadd.f32 %v992, 1e-05
        %v994 = vrsqrt.pop %v993
        %v995 = vmul.f32 %v994, %v993
        %v996 = vmul.f32 %v995, %v994
        %v997 = vmul.f32 0.5, %v996
        %v998 = vsub.f32 1.5, %v997
        %v999 = vmul.f32 %v994, %v998
        %vm1000 = vweird.f32 %v993
        %vm1001 = vweird.f32 %v994
        %vm1002 = vmor %vm1000, %vm1001
        %v1003 = vsel %vm1002, %v994, %v999
        %v1004 = vmul.f32 %v987, %v1003
        %v1005 = vld [vmem:[%s11] sm:$0x1]
        %v1007 = vperm.slane %v1005, 0
        %v1009 = vmul.f32 %v1004, %v1007
        %v1010 = vld [vmem:[%s12] sm:$0x1]
        %v1012 = vperm.slane %v1010, 0
        %v1014 = vadd.f32 %v1009, %v1012
        %1015 = vst.msk [vmem:[%s564] sm:$0xff] %vm591, %v1014
        %p1016 = scmp.lt.s32.totalorder %s31, 1
        %s1017 = scalar_select %p1016, %s31, 1
        %p1018 = scmp.lt.s32.totalorder %s32, 0
        %s1019 = scalar_select %p1018, %s32, 0
        %s1020 = sadd.s32 %s1019, %s1017
        %s1021 = smul.addr %s1020, 8
        %s1022 = scalar_lea.vmem %s13, %s1021
        // Predicated region
        $region89: #{decoder_layer_forward.3} parent=71 // pred_check
          %p1023 = pneg %p349
        $region90: #{decoder_layer_forward.3} parent=71 // pred_check_branch
          %1025 = sbr.rel (%p1023) target = $region92
        $region91: #{decoder_layer_forward.3} parent=71 // pred_region
          _
        $region92: #{decoder_layer_forward.3} parent=71 // pred_fallthru
          _
      $region72: #{decoder_layer_forward.3} parent=5 // pred_fallthru
        _
      %p1026 = scmp.le.s32.totalorder 2, %s22
      // Predicated region
      $region93: #{decoder_layer_forward.3} parent=5 // pred_check
        %p1027 = pneg %p1026
      $region94: #{decoder_layer_forward.3} parent=5 // pred_check_branch
        %1029 = sbr.rel (%p1027) target = $region96
      $region95: #{decoder_layer_forward.3} parent=5 // pred_region
        %s1030 = ssub.s32 %s22, 2
        // Predicated region
        $region97: #{decoder_layer_forward.3} parent=95 // pred_check
          %p1031 = pneg %p355
        $region98: #{decoder_layer_forward.3} parent=95 // pred_check_branch
          %1033 = sbr.rel (%p1031) target = $region100
        $region99: #{decoder_layer_forward.3} parent=95 // pred_region
          %p1034 = scmp.lt.s32.totalorder %s33, 1
          %s1035 = scalar_select %p1034, %s33, 1
          %p1036 = scmp.lt.s32.totalorder %s34, 0
          %s1037 = scalar_select %p1036, %s34, 0
          %s1038 = sadd.s32 %s1037, %s1035
          %s1039 = smul.addr %s1038, 8
          %s1040 = scalar_lea.vmem %s13, %s1039
        $region100: #{decoder_layer_forward.3} parent=95 // pred_fallthru
          _
      $region96: #{decoder_layer_forward.3} parent=5 // pred_fallthru
        _
    $region6: #{decoder_layer_forward.3} parent=1 // loop_footer
      %s26 = sadd.s32 1, %s22
    $region7: #{decoder_layer_forward.3} parent=1 // loop_footer_branch
      %21 = sbr.rel target = $region3
    $region8: #{decoder_layer_forward.3} parent=1 // loop_exit
      _
    %1041 = vsyncpa [#allocation4], 1
    %s1042 = scalar_lea.sflag [#allocation4], 1
    %1043 = vsyncpa %s1042, 1
    %1044 = vsyncpa [#allocation6], 1
    %1045 = vsyncpa [#allocation9], 1

// kernel: decoder_layer_forward.4
$region0: #{decoder_layer_forward.4}
  #allocation0 [shape = 'u32[]', space=smem, size = 0x4, offset = 0x4, fixed_abs, tag = 'smem constant byte address 0x4 - core index']
  #allocation1 [shape = 'u32[72,128]{1,0:T(1,128)}', space=vmem, size = 0x9000, scoped, tag = 'internal scratch']
  #allocation2 [shape = 'f32[8,32]{1,0:T(8,128)}', space=vmem, size = 0x1000, scoped, tag = 'scratch operand']
  %s0 = inlined_call_operand.vmem [shape: f32[2,8,32], index: 0, kind: input, shape index: {}]
  %s1 = inlined_call_operand.vmem [shape: f32[2,8,32], index: 1, kind: input, shape index: {}]
  %s2 = inlined_call_operand.vmem [shape: f32[2,1,8], index: 2, kind: input, shape index: {}]
  %s3 = inlined_call_operand.vmem [shape: bf16[32,32], index: 3, kind: input, shape index: {}]
  %s4 = inlined_call_operand.vmem [shape: f32[1,32], index: 4, kind: input, shape index: {}]
  %s5 = inlined_call_operand.hbm [shape: bf16[32,32], index: 5, kind: input, shape index: {}]
  %s6 = inlined_call_operand.hbm [shape: f32[1,32], index: 6, kind: input, shape index: {}]
  %s7 = inlined_call_operand.hbm [shape: bf16[32,32], index: 7, kind: input, shape index: {}]
  %s8 = inlined_call_operand.hbm [shape: f32[1,32], index: 8, kind: input, shape index: {}]
  %s9 = inlined_call_operand.hbm [shape: bf16[32,32], index: 9, kind: input, shape index: {}]
  %s10 = inlined_call_operand.hbm [shape: f32[1,32], index: 10, kind: input, shape index: {}]
  %s11 = inlined_call_operand.vmem [shape: f32[1,32], index: 11, kind: input, shape index: {}]
  %s12 = inlined_call_operand.vmem [shape: f32[1,32], index: 12, kind: input, shape index: {}]
  %s13 = inlined_call_operand.vmem [shape: f32[2,8,32], index: 13, kind: output, shape index: {}]
  %s14 = sld [smem:[#allocation0]]
  $region109: #{decoder_layer_forward.4} parent=0
    _
  %s16 = ssub.s32 1, %s14
  %s17 = scalar_select 0, %s16, %s14
  $region1: #{decoder_layer_forward.4} parent=0
    #allocation3 [shape = 'u8[8192]{0}', space=vmem, size = 0x2000, scoped, tag = 'input window, operand 5, single buffered']
    #allocation4 [shape = 's32[2]{0}', space=sflag, size = 0x8, scoped, tag = 'scoped memory for decoder_layer_forward.4']
    #allocation5 [shape = 'u8[512]{0}', space=vmem, size = 0x400, scoped, tag = 'input window, operand 6, single buffered']
    #allocation6 [shape = 's32[1]{0}', space=sflag, size = 0x4, scoped, tag = 'scoped memory for decoder_layer_forward.4']
    #allocation7 [shape = 'u8[8192]{0}', space=vmem, size = 0x2000, scoped, tag = 'input window, operand 7, single buffered']
    #allocation8 [shape = 'u8[512]{0}', space=vmem, size = 0x400, scoped, tag = 'input window, operand 8, single buffered']
    #allocation9 [shape = 's32[1]{0}', space=sflag, size = 0x4, scoped, tag = 'scoped memory for decoder_layer_forward.4']
    #allocation10 [shape = 'u8[8192]{0}', space=vmem, size = 0x2000, scoped, tag = 'input window, operand 9, single buffered']
    #allocation11 [shape = 'u8[512]{0}', space=vmem, size = 0x400, scoped, tag = 'input window, operand 10, single buffered']
    #allocation12 [shape = 's32[1]{0}', space=sflag, size = 0x4, scoped, tag = 'scoped memory for decoder_layer_forward.4']
    %18 = vsyncpa [#allocation4], 0
    %19 = vsyncpa [#allocation6], 0
    %20 = vsyncpa [#allocation9], 0
    %21 = vsyncpa [#allocation12], 0
    loop: start=0, step=1, limit=4
    $region2: #{decoder_layer_forward.4} parent=1 // loop_pre_header
      _
    $region3: #{decoder_layer_forward.4} parent=1 // loop_header
      %s23 = sphi 0, %s27
      %p24 = scmp.ge.s32.totalorder %s23, 4
      %s30 = sphi 0, %s42
      %s31 = sphi 0, %s38
      %s32 = sphi 0, %s30
      %s33 = sphi 0, %s31
      %s34 = sphi 0, %s32
      %s35 = sphi 0, %s33
      %s47 = sphi 0, %s49
      %s50 = sphi 0, %s47
      %s51 = sphi 0, %s50
      %s67 = sphi 0, %s51
      %s73 = sphi 0, %s75
      %s76 = sphi 0, %s73
      %s77 = sphi 0, %s76
      %s93 = sphi 0, %s77
      %s99 = sphi 0, %s101
      %s102 = sphi 0, %s99
      %s103 = sphi 0, %s102
      %s119 = sphi 0, %s103
      %s123 = sphi 0, %s123
      %s125 = sphi 0, %s123
      %s126 = sphi 0, %s125
      %s140 = sphi 0, %s126
      %s144 = sphi 0, %s144
      %s146 = sphi 0, %s144
      %s147 = sphi 0, %s146
      %s161 = sphi 0, %s147
      %s165 = sphi 0, %s165
      %s167 = sphi 0, %s165
      %s168 = sphi 0, %s167
      %s182 = sphi 0, %s168
      %s186 = sphi 0, %s186
      %s188 = sphi 0, %s186
      %s189 = sphi 0, %s188
      %s203 = sphi 0, %s189
      %s207 = sphi 0, %s207
      %s209 = sphi 0, %s207
      %s210 = sphi 0, %s209
      %s224 = sphi 0, %s210
      %s228 = sphi 0, %s228
      %s230 = sphi 0, %s228
      %s231 = sphi 0, %s230
      %s245 = sphi 0, %s231
      %s249 = sphi 0, %s249
      %s251 = sphi 0, %s249
      %s252 = sphi 0, %s251
      %s266 = sphi 0, %s252
      %s270 = sphi 0, %s270
      %s272 = sphi 0, %s270
      %s273 = sphi 0, %s272
      %s287 = sphi 0, %s273
      %s291 = sphi 0, %s291
      %s293 = sphi 0, %s291
      %s294 = sphi 0, %s293
      %s308 = sphi 0, %s294
      %s312 = sphi 0, %s312
      %s314 = sphi 0, %s312
      %s315 = sphi 0, %s314
      %s329 = sphi 0, %s315
      %s337 = sphi 0, %s339
      %s340 = sphi 0, %s337
      %s341 = sphi 0, %s340
      %s357 = sphi 0, %s341
    $region4: #{decoder_layer_forward.4} parent=1 // loop_header_branch
      %26 = sbr.rel (%p24) target = $region8
    $region5: #{decoder_layer_forward.4} parent=1 // loop_body
      %s28 = ssub.s32 %s23, 1
      %s29 = ssub.s32 %s23, 2
      %s36 = sadd.s32 1, %s31
      %p37 = scmp.ge.s32.totalorder %s36, 1
      %s38 = scalar_select %p37, 0, %s36
      %s39 = sadd.s32 1, %s30
      %s40 = scalar_select %p37, %s39, %s30
      %p41 = scmp.ge.s32.totalorder %s40, 2
      %s42 = scalar_select %p41, 0, %s40
      %s43 = ssub.s32 %s30, %s42
      %s44 = ssub.s32 %s31, %s38
      %s45 = sor.u32 %s43, %s44
      %p46 = scmp.eq.s32.totalorder %s45, 0
      %s48 = sadd.s32 %s47, 1
      %s49 = scalar_select %p46, %s47, %s48
      %p52 = pneg %p46
      %p53 = scmp.eq.s32.totalorder %s23, 1
      %p54 = por %p52, %p53
      %p55 = scmp.ne.s32.totalorder %s47, %s50
      %p56 = scmp.eq.s32.totalorder %s23, 0
      %p57 = por %p55, %p56
      %p58 = scmp.ne.s32.totalorder %s47, %s50
      %p59 = scmp.eq.s32.totalorder %s28, 1
      %p60 = por %p58, %p59
      %p61 = scmp.ne.s32.totalorder %s50, %s51
      %p62 = scmp.eq.s32.totalorder %s28, 0
      %p63 = por %p61, %p62
      %p64 = scmp.ne.s32.totalorder %s50, %s51
      %p65 = scmp.eq.s32.totalorder %s29, 1
      %p66 = por %p64, %p65
      %p68 = scmp.ne.s32.totalorder %s51, %s67
      %p69 = scmp.eq.s32.totalorder %s29, 0
      %p70 = por %p68, %p69
      %s71 = ssub.s32 %s30, %s42
      %p72 = scmp.eq.s32.totalorder %s71, 0
      %s74 = sadd.s32 %s73, 1
      %s75 = scalar_select %p72, %s73, %s74
      %p78 = pneg %p72
      %p79 = scmp.eq.s32.totalorder %s23, 1
      %p80 = por %p78, %p79
      %p81 = scmp.ne.s32.totalorder %s73, %s76
      %p82 = scmp.eq.s32.totalorder %s23, 0
      %p83 = por %p81, %p82
      %p84 = scmp.ne.s32.totalorder %s73, %s76
      %p85 = scmp.eq.s32.totalorder %s28, 1
      %p86 = por %p84, %p85
      %p87 = scmp.ne.s32.totalorder %s76, %s77
      %p88 = scmp.eq.s32.totalorder %s28, 0
      %p89 = por %p87, %p88
      %p90 = scmp.ne.s32.totalorder %s76, %s77
      %p91 = scmp.eq.s32.totalorder %s29, 1
      %p92 = por %p90, %p91
      %p94 = scmp.ne.s32.totalorder %s77, %s93
      %p95 = scmp.eq.s32.totalorder %s29, 0
      %p96 = por %p94, %p95
      %s97 = ssub.s32 %s30, %s42
      %p98 = scmp.eq.s32.totalorder %s97, 0
      %s100 = sadd.s32 %s99, 1
      %s101 = scalar_select %p98, %s99, %s100
      %p104 = pneg %p98
      %p105 = scmp.eq.s32.totalorder %s23, 1
      %p106 = por %p104, %p105
      %p107 = scmp.ne.s32.totalorder %s99, %s102
      %p108 = scmp.eq.s32.totalorder %s23, 0
      %p109 = por %p107, %p108
      %p110 = scmp.ne.s32.totalorder %s99, %s102
      %p111 = scmp.eq.s32.totalorder %s28, 1
      %p112 = por %p110, %p111
      %p113 = scmp.ne.s32.totalorder %s102, %s103
      %p114 = scmp.eq.s32.totalorder %s28, 0
      %p115 = por %p113, %p114
      %p116 = scmp.ne.s32.totalorder %s102, %s103
      %p117 = scmp.eq.s32.totalorder %s29, 1
      %p118 = por %p116, %p117
      %p120 = scmp.ne.s32.totalorder %s103, %s119
      %p121 = scmp.eq.s32.totalorder %s29, 0
      %p122 = por %p120, %p121
      %s124 = sadd.s32 %s123, 1
      %p127 = scmp.eq.s32.totalorder %s23, 1
      %p128 = scmp.ne.s32.totalorder %s123, %s125
      %p129 = scmp.eq.s32.totalorder %s23, 0
      %p130 = por %p128, %p129
      %p131 = scmp.ne.s32.totalorder %s123, %s125
      %p132 = scmp.eq.s32.totalorder %s28, 1
      %p133 = por %p131, %p132
      %p134 = scmp.ne.s32.totalorder %s125, %s126
      %p135 = scmp.eq.s32.totalorder %s28, 0
      %p136 = por %p134, %p135
      %p137 = scmp.ne.s32.totalorder %s125, %s126
      %p138 = scmp.eq.s32.totalorder %s29, 1
      %p139 = por %p137, %p138
      %p141 = scmp.ne.s32.totalorder %s126, %s140
      %p142 = scmp.eq.s32.totalorder %s29, 0
      %p143 = por %p141, %p142
      %s145 = sadd.s32 %s144, 1
      %p148 = scmp.eq.s32.totalorder %s23, 1
      %p149 = scmp.ne.s32.totalorder %s144, %s146
      %p150 = scmp.eq.s32.totalorder %s23, 0
      %p151 = por %p149, %p150
      %p152 = scmp.ne.s32.totalorder %s144, %s146
      %p153 = scmp.eq.s32.totalorder %s28, 1
      %p154 = por %p152, %p153
      %p155 = scmp.ne.s32.totalorder %s146, %s147
      %p156 = scmp.eq.s32.totalorder %s28, 0
      %p157 = por %p155, %p156
      %p158 = scmp.ne.s32.totalorder %s146, %s147
      %p159 = scmp.eq.s32.totalorder %s29, 1
      %p160 = por %p158, %p159
      %p162 = scmp.ne.s32.totalorder %s147, %s161
      %p163 = scmp.eq.s32.totalorder %s29, 0
      %p164 = por %p162, %p163
      %s166 = sadd.s32 %s165, 1
      %p169 = scmp.eq.s32.totalorder %s23, 1
      %p170 = scmp.ne.s32.totalorder %s165, %s167
      %p171 = scmp.eq.s32.totalorder %s23, 0
      %p172 = por %p170, %p171
      %p173 = scmp.ne.s32.totalorder %s165, %s167
      %p174 = scmp.eq.s32.totalorder %s28, 1
      %p175 = por %p173, %p174
      %p176 = scmp.ne.s32.totalorder %s167, %s168
      %p177 = scmp.eq.s32.totalorder %s28, 0
      %p178 = por %p176, %p177
      %p179 = scmp.ne.s32.totalorder %s167, %s168
      %p180 = scmp.eq.s32.totalorder %s29, 1
      %p181 = por %p179, %p180
      %p183 = scmp.ne.s32.totalorder %s168, %s182
      %p184 = scmp.eq.s32.totalorder %s29, 0
      %p185 = por %p183, %p184
      %s187 = sadd.s32 %s186, 1
      %p190 = scmp.eq.s32.totalorder %s23, 1
      %p191 = scmp.ne.s32.totalorder %s186, %s188
      %p192 = scmp.eq.s32.totalorder %s23, 0
      %p193 = por %p191, %p192
      %p194 = scmp.ne.s32.totalorder %s186, %s188
      %p195 = scmp.eq.s32.totalorder %s28, 1
      %p196 = por %p194, %p195
      %p197 = scmp.ne.s32.totalorder %s188, %s189
      %p198 = scmp.eq.s32.totalorder %s28, 0
      %p199 = por %p197, %p198
      %p200 = scmp.ne.s32.totalorder %s188, %s189
      %p201 = scmp.eq.s32.totalorder %s29, 1
      %p202 = por %p200, %p201
      %p204 = scmp.ne.s32.totalorder %s189, %s203
      %p205 = scmp.eq.s32.totalorder %s29, 0
      %p206 = por %p204, %p205
      %s208 = sadd.s32 %s207, 1
      %p211 = scmp.eq.s32.totalorder %s23, 1
      %p212 = scmp.ne.s32.totalorder %s207, %s209
      %p213 = scmp.eq.s32.totalorder %s23, 0
      %p214 = por %p212, %p213
      %p215 = scmp.ne.s32.totalorder %s207, %s209
      %p216 = scmp.eq.s32.totalorder %s28, 1
      %p217 = por %p215, %p216
      %p218 = scmp.ne.s32.totalorder %s209, %s210
      %p219 = scmp.eq.s32.totalorder %s28, 0
      %p220 = por %p218, %p219
      %p221 = scmp.ne.s32.totalorder %s209, %s210
      %p222 = scmp.eq.s32.totalorder %s29, 1
      %p223 = por %p221, %p222
      %p225 = scmp.ne.s32.totalorder %s210, %s224
      %p226 = scmp.eq.s32.totalorder %s29, 0
      %p227 = por %p225, %p226
      %s229 = sadd.s32 %s228, 1
      %p232 = scmp.eq.s32.totalorder %s23, 1
      %p233 = scmp.ne.s32.totalorder %s228, %s230
      %p234 = scmp.eq.s32.totalorder %s23, 0
      %p235 = por %p233, %p234
      %p236 = scmp.ne.s32.totalorder %s228, %s230
      %p237 = scmp.eq.s32.totalorder %s28, 1
      %p238 = por %p236, %p237
      %p239 = scmp.ne.s32.totalorder %s230, %s231
      %p240 = scmp.eq.s32.totalorder %s28, 0
      %p241 = por %p239, %p240
      %p242 = scmp.ne.s32.totalorder %s230, %s231
      %p243 = scmp.eq.s32.totalorder %s29, 1
      %p244 = por %p242, %p243
      %p246 = scmp.ne.s32.totalorder %s231, %s245
      %p247 = scmp.eq.s32.totalorder %s29, 0
      %p248 = por %p246, %p247
      %s250 = sadd.s32 %s249, 1
      %p253 = scmp.eq.s32.totalorder %s23, 1
      %p254 = scmp.ne.s32.totalorder %s249, %s251
      %p255 = scmp.eq.s32.totalorder %s23, 0
      %p256 = por %p254, %p255
      %p257 = scmp.ne.s32.totalorder %s249, %s251
      %p258 = scmp.eq.s32.totalorder %s28, 1
      %p259 = por %p257, %p258
      %p260 = scmp.ne.s32.totalorder %s251, %s252
      %p261 = scmp.eq.s32.totalorder %s28, 0
      %p262 = por %p260, %p261
      %p263 = scmp.ne.s32.totalorder %s251, %s252
      %p264 = scmp.eq.s32.totalorder %s29, 1
      %p265 = por %p263, %p264
      %p267 = scmp.ne.s32.totalorder %s252, %s266
      %p268 = scmp.eq.s32.totalorder %s29, 0
      %p269 = por %p267, %p268
      %s271 = sadd.s32 %s270, 1
      %p274 = scmp.eq.s32.totalorder %s23, 1
      %p275 = scmp.ne.s32.totalorder %s270, %s272
      %p276 = scmp.eq.s32.totalorder %s23, 0
      %p277 = por %p275, %p276
      %p278 = scmp.ne.s32.totalorder %s270, %s272
      %p279 = scmp.eq.s32.totalorder %s28, 1
      %p280 = por %p278, %p279
      %p281 = scmp.ne.s32.totalorder %s272, %s273
      %p282 = scmp.eq.s32.totalorder %s28, 0
      %p283 = por %p281, %p282
      %p284 = scmp.ne.s32.totalorder %s272, %s273
      %p285 = scmp.eq.s32.totalorder %s29, 1
      %p286 = por %p284, %p285
      %p288 = scmp.ne.s32.totalorder %s273, %s287
      %p289 = scmp.eq.s32.totalorder %s29, 0
      %p290 = por %p288, %p289
      %s292 = sadd.s32 %s291, 1
      %p295 = scmp.eq.s32.totalorder %s23, 1
      %p296 = scmp.ne.s32.totalorder %s291, %s293
      %p297 = scmp.eq.s32.totalorder %s23, 0
      %p298 = por %p296, %p297
      %p299 = scmp.ne.s32.totalorder %s291, %s293
      %p300 = scmp.eq.s32.totalorder %s28, 1
      %p301 = por %p299, %p300
      %p302 = scmp.ne.s32.totalorder %s293, %s294
      %p303 = scmp.eq.s32.totalorder %s28, 0
      %p304 = por %p302, %p303
      %p305 = scmp.ne.s32.totalorder %s293, %s294
      %p306 = scmp.eq.s32.totalorder %s29, 1
      %p307 = por %p305, %p306
      %p309 = scmp.ne.s32.totalorder %s294, %s308
      %p310 = scmp.eq.s32.totalorder %s29, 0
      %p311 = por %p309, %p310
      %s313 = sadd.s32 %s312, 1
      %p316 = scmp.eq.s32.totalorder %s23, 1
      %p317 = scmp.ne.s32.totalorder %s312, %s314
      %p318 = scmp.eq.s32.totalorder %s23, 0
      %p319 = por %p317, %p318
      %p320 = scmp.ne.s32.totalorder %s312, %s314
      %p321 = scmp.eq.s32.totalorder %s28, 1
      %p322 = por %p320, %p321
      %p323 = scmp.ne.s32.totalorder %s314, %s315
      %p324 = scmp.eq.s32.totalorder %s28, 0
      %p325 = por %p323, %p324
      %p326 = scmp.ne.s32.totalorder %s314, %s315
      %p327 = scmp.eq.s32.totalorder %s29, 1
      %p328 = por %p326, %p327
      %p330 = scmp.ne.s32.totalorder %s315, %s329
      %p331 = scmp.eq.s32.totalorder %s29, 0
      %p332 = por %p330, %p331
      %s333 = ssub.s32 %s30, %s42
      %s334 = ssub.s32 %s31, %s38
      %s335 = sor.u32 %s333, %s334
      %p336 = scmp.eq.s32.totalorder %s335, 0
      %s338 = sadd.s32 %s337, 1
      %s339 = scalar_select %p336, %s337, %s338
      %p342 = pneg %p336
      %p343 = scmp.eq.s32.totalorder %s23, 1
      %p344 = por %p342, %p343
      %p345 = scmp.ne.s32.totalorder %s337, %s340
      %p346 = scmp.eq.s32.totalorder %s23, 0
      %p347 = por %p345, %p346
      %p348 = scmp.ne.s32.totalorder %s337, %s340
      %p349 = scmp.eq.s32.totalorder %s28, 1
      %p350 = por %p348, %p349
      %p351 = scmp.ne.s32.totalorder %s340, %s341
      %p352 = scmp.eq.s32.totalorder %s28, 0
      %p353 = por %p351, %p352
      %p354 = scmp.ne.s32.totalorder %s340, %s341
      %p355 = scmp.eq.s32.totalorder %s29, 1
      %p356 = por %p354, %p355
      %p358 = scmp.ne.s32.totalorder %s341, %s357
      %p359 = scmp.eq.s32.totalorder %s29, 0
      %p360 = por %p358, %p359
      %p361 = scmp.le.s32.totalorder 1, %s23
      %p362 = scmp.lt.s32.totalorder %s23, 3
      %p363 = pnand %p361, %p362
      %p364 = pneg %p363
      // Predicated region
      $region9: #{decoder_layer_forward.4} parent=5 // pred_check
        _
      $region10: #{decoder_layer_forward.4} parent=5 // pred_check_branch
        %366 = sbr.rel (%p363) target = $region12
      $region11: #{decoder_layer_forward.4} parent=5 // pred_region
        %s367 = ssub.s32 %s23, 1
        // Predicated region
        $region13: #{decoder_layer_forward.4} parent=11 // pred_check
          %p368 = pneg %p136
        $region14: #{decoder_layer_forward.4} parent=11 // pred_check_branch
          %370 = sbr.rel (%p368) target = $region16
        $region15: #{decoder_layer_forward.4} parent=11 // pred_region
          _
        $region16: #{decoder_layer_forward.4} parent=11 // pred_fallthru
          _
        // Predicated region
        $region17: #{decoder_layer_forward.4} parent=11 // pred_check
          %p371 = pneg %p157
        $region18: #{decoder_layer_forward.4} parent=11 // pred_check_branch
          %373 = sbr.rel (%p371) target = $region20
        $region19: #{decoder_layer_forward.4} parent=11 // pred_region
          _
        $region20: #{decoder_layer_forward.4} parent=11 // pred_fallthru
          _
        // Predicated region
        $region21: #{decoder_layer_forward.4} parent=11 // pred_check
          %p374 = pneg %p178
        $region22: #{decoder_layer_forward.4} parent=11 // pred_check_branch
          %376 = sbr.rel (%p374) target = $region24
        $region23: #{decoder_layer_forward.4} parent=11 // pred_region
          %378 = vsyncadd [#allocation4], 0
          %s379 = sshll.u32 %s5, 4
          %s380 = int_to_ptr.hbm [resolvable:$true] %s379
          %s381 = sshll.u32 [#allocation3], 4
          %s382 = int_to_ptr.vmem [resolvable:$true] %s381
          %387 = dma.hbm_to_vmem [thread:$0]  %s380, 256, %s382, [#allocation4], 64, 64, 4
        $region24: #{decoder_layer_forward.4} parent=11 // pred_fallthru
          _
        // Predicated region
        $region25: #{decoder_layer_forward.4} parent=11 // pred_check
          %p388 = pneg %p199
        $region26: #{decoder_layer_forward.4} parent=11 // pred_check_branch
          %390 = sbr.rel (%p388) target = $region28
        $region27: #{decoder_layer_forward.4} parent=11 // pred_region
          %392 = vsyncadd [#allocation6], 0
          %s394 = sshll.u32 %s6, 4
          %s395 = int_to_ptr.hbm [resolvable:$true] %s394
          %s396 = sshll.u32 [#allocation5], 4
          %s397 = int_to_ptr.vmem [resolvable:$true] %s396
          %399 = dma.hbm_to_vmem [thread:$0]  %s395, 16, %s397, [#allocation6]
        $region28: #{decoder_layer_forward.4} parent=11 // pred_fallthru
          _
        // Predicated region
        $region29: #{decoder_layer_forward.4} parent=11 // pred_check
          %p400 = pneg %p220
        $region30: #{decoder_layer_forward.4} parent=11 // pred_check_branch
          %402 = sbr.rel (%p400) target = $region32
        $region31: #{decoder_layer_forward.4} parent=11 // pred_region
          %404 = vsyncadd [#allocation6], 0
          %s405 = sshll.u32 %s7, 4
          %s406 = int_to_ptr.hbm [resolvable:$true] %s405
          %s407 = sshll.u32 [#allocation7], 4
          %s408 = int_to_ptr.vmem [resolvable:$true] %s407
          %413 = dma.hbm_to_vmem [thread:$0]  %s406, 256, %s408, [#allocation6], 64, 64, 4
        $region32: #{decoder_layer_forward.4} parent=11 // pred_fallthru
          _
        // Predicated region
        $region33: #{decoder_layer_forward.4} parent=11 // pred_check
          %p414 = pneg %p241
        $region34: #{decoder_layer_forward.4} parent=11 // pred_check_branch
          %416 = sbr.rel (%p414) target = $region36
        $region35: #{decoder_layer_forward.4} parent=11 // pred_region
          %418 = vsyncadd [#allocation9], 0
          %s420 = sshll.u32 %s8, 4
          %s421 = int_to_ptr.hbm [resolvable:$true] %s420
          %s422 = sshll.u32 [#allocation8], 4
          %s423 = int_to_ptr.vmem [resolvable:$true] %s422
          %425 = dma.hbm_to_vmem [thread:$0]  %s421, 16, %s423, [#allocation9]
        $region36: #{decoder_layer_forward.4} parent=11 // pred_fallthru
          _
        // Predicated region
        $region37: #{decoder_layer_forward.4} parent=11 // pred_check
          %p426 = pneg %p262
        $region38: #{decoder_layer_forward.4} parent=11 // pred_check_branch
          %428 = sbr.rel (%p426) target = $region40
        $region39: #{decoder_layer_forward.4} parent=11 // pred_region
          %430 = vsyncadd [#allocation9], 0
          %s431 = sshll.u32 %s9, 4
          %s432 = int_to_ptr.hbm [resolvable:$true] %s431
          %s433 = sshll.u32 [#allocation10], 4
          %s434 = int_to_ptr.vmem [resolvable:$true] %s433
          %439 = dma.hbm_to_vmem [thread:$0]  %s432, 256, %s434, [#allocation9], 64, 64, 4
        $region40: #{decoder_layer_forward.4} parent=11 // pred_fallthru
          _
        // Predicated region
        $region41: #{decoder_layer_forward.4} parent=11 // pred_check
          %p440 = pneg %p283
        $region42: #{decoder_layer_forward.4} parent=11 // pred_check_branch
          %442 = sbr.rel (%p440) target = $region44
        $region43: #{decoder_layer_forward.4} parent=11 // pred_region
          %444 = vsyncadd [#allocation12], 0
          %s446 = sshll.u32 %s10, 4
          %s447 = int_to_ptr.hbm [resolvable:$true] %s446
          %s448 = sshll.u32 [#allocation11], 4
          %s449 = int_to_ptr.vmem [resolvable:$true] %s448
          %451 = dma.hbm_to_vmem [thread:$0]  %s447, 16, %s449, [#allocation12]
        $region44: #{decoder_layer_forward.4} parent=11 // pred_fallthru
          _
        // Predicated region
        $region45: #{decoder_layer_forward.4} parent=11 // pred_check
          %p452 = pneg %p304
        $region46: #{decoder_layer_forward.4} parent=11 // pred_check_branch
          %454 = sbr.rel (%p452) target = $region48
        $region47: #{decoder_layer_forward.4} parent=11 // pred_region
          _
        $region48: #{decoder_layer_forward.4} parent=11 // pred_fallthru
          _
        // Predicated region
        $region49: #{decoder_layer_forward.4} parent=11 // pred_check
          %p455 = pneg %p325
        $region50: #{decoder_layer_forward.4} parent=11 // pred_check_branch
          %457 = sbr.rel (%p455) target = $region52
        $region51: #{decoder_layer_forward.4} parent=11 // pred_region
          _
        $region52: #{decoder_layer_forward.4} parent=11 // pred_fallthru
          _
      $region12: #{decoder_layer_forward.4} parent=5 // pred_fallthru
        _
      %p458 = scmp.lt.s32.totalorder %s23, 2
      // Predicated region
      $region53: #{decoder_layer_forward.4} parent=5 // pred_check
        %p459 = pneg %p458
      $region54: #{decoder_layer_forward.4} parent=5 // pred_check_branch
        %461 = sbr.rel (%p459) target = $region56
      $region55: #{decoder_layer_forward.4} parent=5 // pred_region
        // Predicated region
        $region57: #{decoder_layer_forward.4} parent=55 // pred_check
          %p462 = pneg %p57
        $region58: #{decoder_layer_forward.4} parent=55 // pred_check_branch
          %464 = sbr.rel (%p462) target = $region60
        $region59: #{decoder_layer_forward.4} parent=55 // pred_region
          %p465 = scmp.lt.s32.totalorder %s30, 1
          %s466 = scalar_select %p465, %s30, 1
          %p467 = scmp.lt.s32.totalorder %s31, 0
          %s468 = scalar_select %p467, %s31, 0
          %s469 = sadd.s32 %s468, %s466
          %s470 = smul.addr %s469, 8
          %s471 = scalar_lea.vmem %s0, %s470
        $region60: #{decoder_layer_forward.4} parent=55 // pred_fallthru
          _
        // Predicated region
        $region61: #{decoder_layer_forward.4} parent=55 // pred_check
          %p472 = pneg %p83
        $region62: #{decoder_layer_forward.4} parent=55 // pred_check_branch
          %474 = sbr.rel (%p472) target = $region64
        $region63: #{decoder_layer_forward.4} parent=55 // pred_region
          %p475 = scmp.lt.s32.totalorder %s30, 1
          %s476 = scalar_select %p475, %s30, 1
          %s477 = smul.addr %s476, 8
          %s478 = scalar_lea.vmem %s1, %s477
        $region64: #{decoder_layer_forward.4} parent=55 // pred_fallthru
          _
        // Predicated region
        $region65: #{decoder_layer_forward.4} parent=55 // pred_check
          %p479 = pneg %p109
        $region66: #{decoder_layer_forward.4} parent=55 // pred_check_branch
          %481 = sbr.rel (%p479) target = $region68
        $region67: #{decoder_layer_forward.4} parent=55 // pred_region
          %p482 = scmp.lt.s32.totalorder %s30, 1
          %s483 = scalar_select %p482, %s30, 1
          %s484 = scalar_lea.vmem %s2, %s483
        $region68: #{decoder_layer_forward.4} parent=55 // pred_fallthru
          _
      $region56: #{decoder_layer_forward.4} parent=5 // pred_fallthru
        _
      %p485 = scmp.le.s32.totalorder 1, %s23
      %p486 = scmp.lt.s32.totalorder %s23, 3
      %p487 = pnand %p485, %p486
      %p488 = pneg %p487
      // Predicated region
      $region69: #{decoder_layer_forward.4} parent=5 // pred_check
        _
      $region70: #{decoder_layer_forward.4} parent=5 // pred_check_branch
        %490 = sbr.rel (%p487) target = $region72
      $region71: #{decoder_layer_forward.4} parent=5 // pred_region
        %s491 = ssub.s32 %s23, 1
        // Predicated region
        $region73: #{decoder_layer_forward.4} parent=71 // pred_check
          %p492 = pneg %p178
        $region74: #{decoder_layer_forward.4} parent=71 // pred_check_branch
          %494 = sbr.rel (%p492) target = $region76
        $region75: #{decoder_layer_forward.4} parent=71 // pred_region
          %496 = dma.done [#allocation4], 256
        $region76: #{decoder_layer_forward.4} parent=71 // pred_fallthru
          _
        // Predicated region
        $region77: #{decoder_layer_forward.4} parent=71 // pred_check
          %p497 = pneg %p199
        $region78: #{decoder_layer_forward.4} parent=71 // pred_check_branch
          %499 = sbr.rel (%p497) target = $region80
        $region79: #{decoder_layer_forward.4} parent=71 // pred_region
          %501 = dma.done [#allocation6], 16
        $region80: #{decoder_layer_forward.4} parent=71 // pred_fallthru
          _
        // Predicated region
        $region81: #{decoder_layer_forward.4} parent=71 // pred_check
          %p502 = pneg %p220
        $region82: #{decoder_layer_forward.4} parent=71 // pred_check_branch
          %504 = sbr.rel (%p502) target = $region84
        $region83: #{decoder_layer_forward.4} parent=71 // pred_region
          %506 = dma.done [#allocation6], 256
        $region84: #{decoder_layer_forward.4} parent=71 // pred_fallthru
          _
        // Predicated region
        $region85: #{decoder_layer_forward.4} parent=71 // pred_check
          %p507 = pneg %p241
        $region86: #{decoder_layer_forward.4} parent=71 // pred_check_branch
          %509 = sbr.rel (%p507) target = $region88
        $region87: #{decoder_layer_forward.4} parent=71 // pred_region
          %511 = dma.done [#allocation9], 16
        $region88: #{decoder_layer_forward.4} parent=71 // pred_fallthru
          _
        // Predicated region
        $region89: #{decoder_layer_forward.4} parent=71 // pred_check
          %p512 = pneg %p262
        $region90: #{decoder_layer_forward.4} parent=71 // pred_check_branch
          %514 = sbr.rel (%p512) target = $region92
        $region91: #{decoder_layer_forward.4} parent=71 // pred_region
          %516 = dma.done [#allocation9], 256
        $region92: #{decoder_layer_forward.4} parent=71 // pred_fallthru
          _
        // Predicated region
        $region93: #{decoder_layer_forward.4} parent=71 // pred_check
          %p517 = pneg %p283
        $region94: #{decoder_layer_forward.4} parent=71 // pred_check_branch
          %519 = sbr.rel (%p517) target = $region96
        $region95: #{decoder_layer_forward.4} parent=71 // pred_region
          %521 = dma.done [#allocation12], 16
        $region96: #{decoder_layer_forward.4} parent=71 // pred_fallthru
          _
        %p522 = scmp.lt.s32.totalorder %s32, 1
        %s523 = scalar_select %p522, %s32, 1
        %p524 = scmp.lt.s32.totalorder %s33, 0
        %s525 = scalar_select %p524, %s33, 0
        %s526 = sadd.s32 %s525, %s523
        %s527 = smul.addr %s526, 8
        %s528 = scalar_lea.vmem %s0, %s527
        %p529 = pneg %p63
        %p530 = pneg %p60
        %p531 = scmp.lt.s32.totalorder %s32, 1
        %s532 = scalar_select %p531, %s32, 1
        %s533 = smul.addr %s532, 8
        %s534 = scalar_lea.vmem %s1, %s533
        %p535 = pneg %p89
        %p536 = pneg %p86
        %p537 = scmp.lt.s32.totalorder %s32, 1
        %s538 = scalar_select %p537, %s32, 1
        %s539 = scalar_lea.vmem %s2, %s538
        %p540 = pneg %p115
        %p541 = pneg %p112
        %p542 = pneg %p136
        %p543 = pneg %p133
        %p544 = pneg %p157
        %p545 = pneg %p154
        %p546 = pneg %p178
        %p547 = pneg %p175
        %p548 = pneg %p199
        %p549 = pneg %p196
        %p550 = pneg %p220
        %p551 = pneg %p217
        %p552 = pneg %p241
        %p553 = pneg %p238
        %p554 = pneg %p262
        %p555 = pneg %p259
        %p556 = pneg %p283
        %p557 = pneg %p280
        %p558 = pneg %p304
        %p559 = pneg %p301
        %p560 = pneg %p325
        %p561 = pneg %p322
        %p562 = pneg %p353
        %p563 = pneg %p350
        %p564 = scmp.lt.s32.totalorder %s32, 1
        %s565 = scalar_select %p564, %s32, 1
        %p566 = scmp.lt.s32.totalorder %s33, 0
        %s567 = scalar_select %p566, %s33, 0
        %s568 = sadd.s32 %s567, %s565
        %s569 = smul.addr %s568, 8
        %s570 = scalar_lea.vmem %s13, %s569
        %p571 = scmp.lt.s32.totalorder %s32, 1
        %s572 = scalar_select %p571, %s32, 1
        %p573 = scmp.lt.s32.totalorder %s33, 0
        %s574 = scalar_select %p573, %s33, 0
        %s575 = sadd.s32 %s574, %s572
        %s576 = smul.addr %s575, 8
        %s577 = scalar_lea.vmem %s0, %s576
        %p578 = scmp.lt.s32.totalorder %s32, 1
        %s579 = scalar_select %p578, %s32, 1
        %s580 = smul.addr %s579, 8
        %s581 = scalar_lea.vmem %s1, %s580
        %p582 = scmp.lt.s32.totalorder %s32, 1
        %s583 = scalar_select %p582, %s32, 1
        %s584 = scalar_lea.vmem %s2, %s583
        %p585 = scmp.lt.s32.totalorder %s32, 1
        %s586 = scalar_select %p585, %s32, 1
        %p587 = scmp.lt.s32.totalorder %s33, 0
        %s588 = scalar_select %p587, %s33, 0
        %s589 = sadd.s32 %s588, %s586
        %s590 = smul.addr %s589, 8
        %s591 = scalar_lea.vmem %s13, %s590
        %v593 = vld [vmem:[%s577] sm:$0xff]
        %v594 = vld [vmem:[%s581] sm:$0xff]
        %v595 = vld [vmem:[%s584] sm:$0x1]
        %v596 = vpack.c.bf16 %v593, %v593
        %v597 = vpack.c.bf16 %v594, %v594
        %v598 = vld [vmem:[%s3] sm:$0xf]
        %v599 = vld [vmem:[%s3 + $0x4] sm:$0xf]
        %v600 = vld [vmem:[%s3 + $0x8] sm:$0xf]
        %v601 = vld [vmem:[%s3 + $0xc] sm:$0xf]
        %v602 = vld [vmem:[%s4] sm:$0x1]
        %v604 = vperm.slane %v602, 0
        %v610 = vunpack.c.l.b16 %v598
        %v611 = vunpack.c.l.b16 %v599
        %v612 = vunpack.c.l.b16 %v600
        %v613 = vunpack.c.l.b16 %v601
        %v614 = vpack.c.b16 %v611, %v610
        %v615 = vpack.c.b16 %v613, %v612
        %vm618 = vcmask 261120
        %v620 = vsel %vm618, %v596, 0
        %622 = vmatpush.bf16.msra.mxu0 0
        %623 = vmatpush.bf16.msra.mxu0 0
        %624 = vmatpush.bf16.msra.mxu0 0
        %625 = vmatpush.bf16.msra.mxu0 0
        %626 = vmatpush.bf16.msra.mxu0 0
        %627 = vmatpush.bf16.msra.mxu0 0
        %628 = vmatpush.bf16.msra.mxu0 %v615
        %629 = vmatpush.bf16.msra.mxu0 %v614
        %630 = vmatmul.bf16.gmra.mxu0 %v620
        %v631 = vpop.f32.mrf.mxu0
        %v632 = vadd.f32 %v604, %v631
        %v633 = vpop.f32.mrf.mxu0
        %634 = vdwg.mxu0
        %v635 = vmul.f32 %v632, 0.35355338
        %v636 = vld [vmem:[#allocation3] sm:$0xf]
        %v637 = vld [vmem:[#allocation3 + $0x4] sm:$0xf]
        %v638 = vld [vmem:[#allocation3 + $0x8] sm:$0xf]
        %v639 = vld [vmem:[#allocation3 + $0xc] sm:$0xf]
        %v640 = vld [vmem:[#allocation5] sm:$0x1]
        %v642 = vperm.slane %v640, 0
        %v648 = vunpack.c.l.b16 %v636
        %v649 = vunpack.c.l.b16 %v637
        %v650 = vunpack.c.l.b16 %v638
        %v651 = vunpack.c.l.b16 %v639
        %v652 = vpack.c.b16 %v649, %v648
        %v653 = vpack.c.b16 %v651, %v650
        %v657 = vsel %vm618, %v597, 0
        %659 = vmatpush.bf16.msra.mxu0 0
        %660 = vmatpush.bf16.msra.mxu0 0
        %661 = vmatpush.bf16.msra.mxu0 0
        %662 = vmatpush.bf16.msra.mxu0 0
        %663 = vmatpush.bf16.msra.mxu0 0
        %664 = vmatpush.bf16.msra.mxu0 0
        %665 = vmatpush.bf16.msra.mxu0 %v653
        %666 = vmatpush.bf16.msra.mxu0 %v652
        %667 = vmatmul.bf16.gmra.mxu0 %v657
        %v668 = vpop.f32.mrf.mxu0
        %v669 = vadd.f32 %v642, %v668
        %v670 = vpop.f32.mrf.mxu0
        %671 = vdwg.mxu0
        %v672 = vld [vmem:[#allocation7] sm:$0xf]
        %v673 = vld [vmem:[#allocation7 + $0x4] sm:$0xf]
        %v674 = vld [vmem:[#allocation7 + $0x8] sm:$0xf]
        %v675 = vld [vmem:[#allocation7 + $0xc] sm:$0xf]
        %v676 = vld [vmem:[#allocation8] sm:$0x1]
        %v678 = vperm.slane %v676, 0
        %v684 = vunpack.c.l.b16 %v672
        %v685 = vunpack.c.l.b16 %v673
        %v686 = vunpack.c.l.b16 %v674
        %v687 = vunpack.c.l.b16 %v675
        %v688 = vpack.c.b16 %v685, %v684
        %v689 = vpack.c.b16 %v687, %v686
        %692 = vmatpush.bf16.msra.mxu0 0
        %693 = vmatpush.bf16.msra.mxu0 0
        %694 = vmatpush.bf16.msra.mxu0 0
        %695 = vmatpush.bf16.msra.mxu0 0
        %696 = vmatpush.bf16.msra.mxu0 0
        %697 = vmatpush.bf16.msra.mxu0 0
        %698 = vmatpush.bf16.msra.mxu0 %v689
        %699 = vmatpush.bf16.msra.mxu0 %v688
        %700 = vmatmul.bf16.gmra.mxu0 %v657
        %v701 = vpop.f32.mrf.mxu0
        %v702 = vadd.f32 %v678, %v701
        %v703 = vpop.f32.mrf.mxu0
        %704 = vdwg.mxu0
        %v705 = vpack.c.bf16 %v635, %v635
        %v706 = vpack.c.bf16 %v669, %v669
        %v707 = vpack.c.bf16 %v702, %v702
        %vm708 = vcmp.eq.f32.partialorder %v595, 0.0
        %v709 = vsel %vm708, 1, 0
        %v710 = vperm.slane %v709, 0
        %vm711 = vcmp.eq.s32.totalorder %v710, 1
        %vm712 = vcmask 64512
        %v714 = vsel %vm712, %v705, 0
        %v717 = vsel %vm712, %v706, 0
        %719 = vmatpush.bf16.xpose.msra.mxu0 0
        %720 = vmatpush.bf16.xpose.msra.mxu0 0
        %721 = vmatpush.bf16.xpose.msra.mxu0 0
        %722 = vmatpush.bf16.xpose.msra.mxu0 0
        %723 = vmatpush.bf16.xpose.msra.mxu0 0
        %724 = vmatpush.bf16.xpose.msra.mxu0 0
        %725 = vmatpush.bf16.xpose.msra.mxu0 0
        %726 = vmatpush.bf16.xpose.msra.mxu0 %v717
        %727 = vmatmul.bf16.gmra.mxu0 %v714
        %v728 = vpop.f32.mrf.mxu0
        %v729 = vadd.f32 0.0, %v728
        %v730 = vpop.f32.mrf.mxu0
        %731 = vdwg.mxu0
        %v732 = vsel %vm711, -1e+10, %v729
        %v733 = vsel %vm712, %v732, -inf
        %734 = vmax.xlane.f32.xlu0 %v733
        %v735 = vpop.xlane.xlu0 %734
        %v736 = vsub.f32 %v732, %v735
        %v737 = vmul.f32 %v736, 1.442695
        %v738 = vpow.pop %v737
        %v739 = vsel %vm712, %v738, 0.0
        %740 = vadd.xlane.f32.xlu0 %v739
        %v741 = vpop.xlane.xlu0 %740
        %v742 = vrcp.pop %v741
        %v743 = vmul.f32 %v738, %v742
        %v744 = vpack.c.bf16 %v743, %v743
        %v746 = vsel %vm712, %v744, 0
        %vm748 = vcmask 1043456
        %v750 = vsel %vm748, %v707, 0
        %752 = vmatpush.bf16.msra.mxu0 0
        %753 = vmatpush.bf16.msra.mxu0 0
        %754 = vmatpush.bf16.msra.mxu0 0
        %755 = vmatpush.bf16.msra.mxu0 0
        %756 = vmatpush.bf16.msra.mxu0 0
        %757 = vmatpush.bf16.msra.mxu0 0
        %758 = vmatpush.bf16.msra.mxu0 0
        %759 = vmatpush.bf16.msra.mxu0 %v750
        %760 = vmatmul.bf16.gmra.mxu0 %v746
        %v761 = vpop.f32.mrf.mxu0
        %v762 = vadd.f32 0.0, %v761
        %v763 = vpop.f32.mrf.mxu0
        %764 = vdwg.mxu0
        %765 = vst.msk [vmem:[#allocation2] sm:$0xff] %vm712, %v762
        %v767 = vunpack.c.l.b16 %v705
        %v768 = vpack.c.b16 %v767, %v767
        %769 = vrot.lane.b32.xlu0 %v768, 120
        %v770 = vpop.permute.xlu0 %769
        %v772 = vunpack.c.l.b16 %v706
        %v773 = vpack.c.b16 %v772, %v772
        %774 = vrot.lane.b32.xlu0 %v773, 120
        %v775 = vpop.permute.xlu0 %774
        %v777 = vsel %vm712, %v770, 0
        %v780 = vsel %vm712, %v775, 0
        %782 = vmatpush.bf16.xpose.msra.mxu0 0
        %783 = vmatpush.bf16.xpose.msra.mxu0 0
        %784 = vmatpush.bf16.xpose.msra.mxu0 0
        %785 = vmatpush.bf16.xpose.msra.mxu0 0
        %786 = vmatpush.bf16.xpose.msra.mxu0 0
        %787 = vmatpush.bf16.xpose.msra.mxu0 0
        %788 = vmatpush.bf16.xpose.msra.mxu0 0
        %789 = vmatpush.bf16.xpose.msra.mxu0 %v780
        %790 = vmatmul.bf16.gmra.mxu0 %v777
        %v791 = vpop.f32.mrf.mxu0
        %v792 = vadd.f32 0.0, %v791
        %v793 = vpop.f32.mrf.mxu0
        %794 = vdwg.mxu0
        %v795 = vsel %vm711, -1e+10, %v792
        %v796 = vsel %vm712, %v795, -inf
        %797 = vmax.xlane.f32.xlu0 %v796
        %v798 = vpop.xlane.xlu0 %797
        %v799 = vsub.f32 %v795, %v798
        %v800 = vmul.f32 %v799, 1.442695
        %v801 = vpow.pop %v800
        %v802 = vsel %vm712, %v801, 0.0
        %803 = vadd.xlane.f32.xlu0 %v802
        %v804 = vpop.xlane.xlu0 %803
        %v805 = vrcp.pop %v804
        %v806 = vmul.f32 %v801, %v805
        %v807 = vpack.c.bf16 %v806, %v806
        %v809 = vunpack.c.l.b16 %v707
        %v810 = vpack.c.b16 %v809, %v809
        %811 = vrot.lane.b32.xlu0 %v810, 120
        %v812 = vpop.permute.xlu0 %811
        %v814 = vsel %vm712, %v807, 0
        %v817 = vsel %vm748, %v812, 0
        %819 = vmatpush.bf16.msra.mxu0 0
        %820 = vmatpush.bf16.msra.mxu0 0
        %821 = vmatpush.bf16.msra.mxu0 0
        %822 = vmatpush.bf16.msra.mxu0 0
        %823 = vmatpush.bf16.msra.mxu0 0
        %824 = vmatpush.bf16.msra.mxu0 0
        %825 = vmatpush.bf16.msra.mxu0 0
        %826 = vmatpush.bf16.msra.mxu0 %v817
        %827 = vmatmul.bf16.gmra.mxu0 %v814
        %v828 = vpop.f32.mrf.mxu0
        %v829 = vadd.f32 0.0, %v828
        %v830 = vpop.f32.mrf.mxu0
        %831 = vdwg.mxu0
        %833 = vrot.lane.b32.xlu0 %v829, 8
        %v834 = vpop.permute.xlu0 %833
        %vm836 = vcmask 130112
        %837 = vst.msk [vmem:[#allocation2] sm:$0xff] %vm836, %v834
        %838 = vrot.lane.b32.xlu0 %v768, 112
        %v839 = vpop.permute.xlu0 %838
        %840 = vrot.lane.b32.xlu0 %v773, 112
        %v841 = vpop.permute.xlu0 %840
        %v843 = vsel %vm712, %v839, 0
        %v846 = vsel %vm712, %v841, 0
        %848 = vmatpush.bf16.xpose.msra.mxu0 0
        %849 = vmatpush.bf16.xpose.msra.mxu0 0
        %850 = vmatpush.bf16.xpose.msra.mxu0 0
        %851 = vmatpush.bf16.xpose.msra.mxu0 0
        %852 = vmatpush.bf16.xpose.msra.mxu0 0
        %853 = vmatpush.bf16.xpose.msra.mxu0 0
        %854 = vmatpush.bf16.xpose.msra.mxu0 0
        %855 = vmatpush.bf16.xpose.msra.mxu0 %v846
        %856 = vmatmul.bf16.gmra.mxu0 %v843
        %v857 = vpop.f32.mrf.mxu0
        %v858 = vadd.f32 0.0, %v857
        %v859 = vpop.f32.mrf.mxu0
        %860 = vdwg.mxu0
        %v861 = vsel %vm711, -1e+10, %v858
        %v862 = vsel %vm712, %v861, -inf
        %863 = vmax.xlane.f32.xlu0 %v862
        %v864 = vpop.xlane.xlu0 %863
        %v865 = vsub.f32 %v861, %v864
        %v866 = vmul.f32 %v865, 1.442695
        %v867 = vpow.pop %v866
        %v868 = vsel %vm712, %v867, 0.0
        %869 = vadd.xlane.f32.xlu0 %v868
        %v870 = vpop.xlane.xlu0 %869
        %v871 = vrcp.pop %v870
        %v872 = vmul.f32 %v867, %v871
        %v873 = vpack.c.bf16 %v872, %v872
        %874 = vrot.lane.b32.xlu0 %v810, 112
        %v875 = vpop.permute.xlu0 %874
        %v877 = vsel %vm712, %v873, 0
        %v880 = vsel %vm748, %v875, 0
        %882 = vmatpush.bf16.msra.mxu0 0
        %883 = vmatpush.bf16.msra.mxu0 0
        %884 = vmatpush.bf16.msra.mxu0 0
        %885 = vmatpush.bf16.msra.mxu0 0
        %886 = vmatpush.bf16.msra.mxu0 0
        %887 = vmatpush.bf16.msra.mxu0 0
        %888 = vmatpush.bf16.msra.mxu0 0
        %889 = vmatpush.bf16.msra.mxu0 %v880
        %890 = vmatmul.bf16.gmra.mxu0 %v877
        %v891 = vpop.f32.mrf.mxu0
        %v892 = vadd.f32 0.0, %v891
        %v893 = vpop.f32.mrf.mxu0
        %894 = vdwg.mxu0
        %896 = vrot.lane.b32.xlu0 %v892, 16
        %v897 = vpop.permute.xlu0 %896
        %vm899 = vcmask 195712
        %900 = vst.msk [vmem:[#allocation2] sm:$0xff] %vm899, %v897
        %901 = vrot.lane.b32.xlu0 %v768, 104
        %v902 = vpop.permute.xlu0 %901
        %903 = vrot.lane.b32.xlu0 %v773, 104
        %v904 = vpop.permute.xlu0 %903
        %v906 = vsel %vm712, %v902, 0
        %v909 = vsel %vm712, %v904, 0
        %911 = vmatpush.bf16.xpose.msra.mxu0 0
        %912 = vmatpush.bf16.xpose.msra.mxu0 0
        %913 = vmatpush.bf16.xpose.msra.mxu0 0
        %914 = vmatpush.bf16.xpose.msra.mxu0 0
        %915 = vmatpush.bf16.xpose.msra.mxu0 0
        %916 = vmatpush.bf16.xpose.msra.mxu0 0
        %917 = vmatpush.bf16.xpose.msra.mxu0 0
        %918 = vmatpush.bf16.xpose.msra.mxu0 %v909
        %919 = vmatmul.bf16.gmra.mxu0 %v906
        %v920 = vpop.f32.mrf.mxu0
        %v921 = vadd.f32 0.0, %v920
        %v922 = vpop.f32.mrf.mxu0
        %923 = vdwg.mxu0
        %v924 = vsel %vm711, -1e+10, %v921
        %v925 = vsel %vm712, %v924, -inf
        %926 = vmax.xlane.f32.xlu0 %v925
        %v927 = vpop.xlane.xlu0 %926
        %v928 = vsub.f32 %v924, %v927
        %v929 = vmul.f32 %v928, 1.442695
        %v930 = vpow.pop %v929
        %v931 = vsel %vm712, %v930, 0.0
        %932 = vadd.xlane.f32.xlu0 %v931
        %v933 = vpop.xlane.xlu0 %932
        %v934 = vrcp.pop %v933
        %v935 = vmul.f32 %v930, %v934
        %v936 = vpack.c.bf16 %v935, %v935
        %937 = vrot.lane.b32.xlu0 %v810, 104
        %v938 = vpop.permute.xlu0 %937
        %v940 = vsel %vm712, %v936, 0
        %v943 = vsel %vm748, %v938, 0
        %945 = vmatpush.bf16.msra.mxu0 0
        %946 = vmatpush.bf16.msra.mxu0 0
        %947 = vmatpush.bf16.msra.mxu0 0
        %948 = vmatpush.bf16.msra.mxu0 0
        %949 = vmatpush.bf16.msra.mxu0 0
        %950 = vmatpush.bf16.msra.mxu0 0
        %951 = vmatpush.bf16.msra.mxu0 0
        %952 = vmatpush.bf16.msra.mxu0 %v943
        %953 = vmatmul.bf16.gmra.mxu0 %v940
        %v954 = vpop.f32.mrf.mxu0
        %v955 = vadd.f32 0.0, %v954
        %v956 = vpop.f32.mrf.mxu0
        %957 = vdwg.mxu0
        %959 = vrot.lane.b32.xlu0 %v955, 24
        %v960 = vpop.permute.xlu0 %959
        %vm962 = vcmask 261312
        %963 = vst.msk [vmem:[#allocation2] sm:$0xff] %vm962, %v960
        %v964 = vld [vmem:[#allocation2] sm:$0xff]
        %v965 = vpack.c.bf16 %v964, %v964
        %v966 = vld [vmem:[#allocation10] sm:$0xf]
        %v967 = vld [vmem:[#allocation10 + $0x4] sm:$0xf]
        %v968 = vld [vmem:[#allocation10 + $0x8] sm:$0xf]
        %v969 = vld [vmem:[#allocation10 + $0xc] sm:$0xf]
        %v970 = vld [vmem:[#allocation11] sm:$0x1]
        %v972 = vperm.slane %v970, 0
        %v978 = vunpack.c.l.b16 %v966
        %v979 = vunpack.c.l.b16 %v967
        %v980 = vunpack.c.l.b16 %v968
        %v981 = vunpack.c.l.b16 %v969
        %v982 = vpack.c.b16 %v979, %v978
        %v983 = vpack.c.b16 %v981, %v980
        %v987 = vsel %vm618, %v965, 0
        %989 = vmatpush.bf16.msra.mxu0 0
        %990 = vmatpush.bf16.msra.mxu0 0
        %991 = vmatpush.bf16.msra.mxu0 0
        %992 = vmatpush.bf16.msra.mxu0 0
        %993 = vmatpush.bf16.msra.mxu0 0
        %994 = vmatpush.bf16.msra.mxu0 0
        %995 = vmatpush.bf16.msra.mxu0 %v983
        %996 = vmatpush.bf16.msra.mxu0 %v982
        %997 = vmatmul.bf16.gmra.mxu0 %v987
        %v998 = vpop.f32.mrf.mxu0
        %v999 = vadd.f32 %v972, %v998
        %v1000 = vpop.f32.mrf.mxu0
        %1001 = vdwg.mxu0
        %v1002 = vadd.f32 %v593, %v999
        %v1003 = vsel %vm618, %v1002, 0.0
        %1004 = vadd.xlane.f32.xlu0 %v1003
        %v1005 = vpop.xlane.xlu0 %1004
        %v1006 = vrcp.pop 32.0
        %v1007 = vmul.f32 32.0, %v1006
        %v1008 = vsub.f32 1.0, %v1007
        %v1009 = vmul.f32 %v1006, %v1008
        %v1010 = vadd.f32 %v1006, %v1009
        %vm1011 = vweird.f32 %v1006
        %v1012 = vsel %vm1011, %v1006, %v1010
        %v1013 = vmul.f32 %v1005, %v1012
        %v1014 = vsub.f32 %v1002, %v1013
        %v1015 = vmul.f32 %v1014, %v1014
        %v1016 = vsel %vm618, %v1015, 0.0
        %1017 = vadd.xlane.f32.xlu0 %v1016
        %v1018 = vpop.xlane.xlu0 %1017
        %v1019 = vmul.f32 %v1018, %v1012
        %v1020 = vadd.f32 %v1019, 1e-05
        %v1021 = vrsqrt.pop %v1020
        %v1022 = vmul.f32 %v1021, %v1020
        %v1023 = vmul.f32 %v1022, %v1021
        %v1024 = vmul.f32 0.5, %v1023
        %v1025 = vsub.f32 1.5, %v1024
        %v1026 = vmul.f32 %v1021, %v1025
        %vm1027 = vweird.f32 %v1020
        %vm1028 = vweird.f32 %v1021
        %vm1029 = vmor %vm1027, %vm1028
        %v1030 = vsel %vm1029, %v1021, %v1026
        %v1031 = vmul.f32 %v1014, %v1030
        %v1032 = vld [vmem:[%s11] sm:$0x1]
        %v1034 = vperm.slane %v1032, 0
        %v1036 = vmul.f32 %v1031, %v1034
        %v1037 = vld [vmem:[%s12] sm:$0x1]
        %v1039 = vperm.slane %v1037, 0
        %v1041 = vadd.f32 %v1036, %v1039
        %1042 = vst.msk [vmem:[%s591] sm:$0xff] %vm618, %v1041
        %p1043 = scmp.lt.s32.totalorder %s32, 1
        %s1044 = scalar_select %p1043, %s32, 1
        %p1045 = scmp.lt.s32.totalorder %s33, 0
        %s1046 = scalar_select %p1045, %s33, 0
        %s1047 = sadd.s32 %s1046, %s1044
        %s1048 = smul.addr %s1047, 8
        %s1049 = scalar_lea.vmem %s13, %s1048
        // Predicated region
        $region97: #{decoder_layer_forward.4} parent=71 // pred_check
          %p1050 = pneg %p350
        $region98: #{decoder_layer_forward.4} parent=71 // pred_check_branch
          %1052 = sbr.rel (%p1050) target = $region100
        $region99: #{decoder_layer_forward.4} parent=71 // pred_region
          _
        $region100: #{decoder_layer_forward.4} parent=71 // pred_fallthru
          _
      $region72: #{decoder_layer_forward.4} parent=5 // pred_fallthru
        _
      %p1053 = scmp.le.s32.totalorder 2, %s23
      // Predicated region
      $region101: #{decoder_layer_forward.4} parent=5 // pred_check
        %p1054 = pneg %p1053
      $region102: #{decoder_layer_forward.4} parent=5 // pred_check_branch
        %1056 = sbr.rel (%p1054) target = $region104
      $region103: #{decoder_layer_forward.4} parent=5 // pred_region
        %s1057 = ssub.s32 %s23, 2
        // Predicated region
        $region105: #{decoder_layer_forward.4} parent=103 // pred_check
          %p1058 = pneg %p356
        $region106: #{decoder_layer_forward.4} parent=103 // pred_check_branch
          %1060 = sbr.rel (%p1058) target = $region108
        $region107: #{decoder_layer_forward.4} parent=103 // pred_region
          %p1061 = scmp.lt.s32.totalorder %s34, 1
          %s1062 = scalar_select %p1061, %s34, 1
          %p1063 = scmp.lt.s32.totalorder %s35, 0
          %s1064 = scalar_select %p1063, %s35, 0
          %s1065 = sadd.s32 %s1064, %s1062
          %s1066 = smul.addr %s1065, 8
          %s1067 = scalar_lea.vmem %s13, %s1066
        $region108: #{decoder_layer_forward.4} parent=103 // pred_fallthru
          _
      $region104: #{decoder_layer_forward.4} parent=5 // pred_fallthru
        _
    $region6: #{decoder_layer_forward.4} parent=1 // loop_footer
      %s27 = sadd.s32 1, %s23
    $region7: #{decoder_layer_forward.4} parent=1 // loop_footer_branch
      %22 = sbr.rel target = $region3
    $region8: #{decoder_layer_forward.4} parent=1 // loop_exit
      _
    %1068 = vsyncpa [#allocation4], 1
    %s1069 = scalar_lea.sflag [#allocation4], 1
    %1070 = vsyncpa %s1069, 1
    %1071 = vsyncpa [#allocation6], 1
    %1072 = vsyncpa [#allocation9], 1
    %1073 = vsyncpa [#allocation12], 1

</llo_original>
